<compile_context>
chip_gen: v7x
topology: tpu7x:2x2x1
jax: 0.10.0
libtpu: 0.0.40
codegen_flags: <defaults>
</compile_context>

<pallas_src>
import math

import jax
import jax.numpy as jnp
from jax.experimental import pallas as pl
from jax.experimental.pallas import tpu as pltpu

# ----------------------------- synthetic config ------------------------------
BATCH = 2
IN_CHANS = 3
IMG = 32
PATCH = 16
DIM = 32          # original: 768
NUM_HEADS = 4     # original: 12
DEPTH = 2         # original: 12 vit blocks
ATTR_NUM = 4
WORD_IN = 768     # word_embed = nn.Linear(768, dim)
MLP_RATIO = 4
LN_EPS = 1e-6     # timm ViT LayerNorm eps
BN_EPS = 1e-5

NP = (IMG // PATCH) ** 2            # patches per image
NVIS = NP + 1                       # + cls token
NTOT = ATTR_NUM + NVIS              # tex tokens + vis tokens
CPP = IN_CHANS * PATCH * PATCH      # flattened patch size
HEAD_DIM = DIM // NUM_HEADS
HIDDEN = MLP_RATIO * DIM            # 128 -> already lane aligned

LANE = 128
D_PAD = 128                         # model dim zero-padded to one full vreg lane width
VMEM_BUDGET = 48 * 1024 * 1024      # explicit budget; leaves headroom on v7x (64 MiB)

BLOCK_KEYS = ("ln1_g", "ln1_b", "w_qkv", "b_qkv", "w_proj", "b_proj",
              "ln2_g", "ln2_b", "w_fc1", "b_fc1", "w_fc2", "b_fc2")
HEAD_KEYS = (("word_w", "word_b", "tex_e", "vis_e")
             + tuple("last_" + k for k in BLOCK_KEYS)
             + ("norm_g", "norm_b", "wl_w", "head_scale", "head_bias"))


# ------------------------------ in-kernel helpers -----------------------------
def _layer_norm(v, g, b):
    """Single-pass LayerNorm: one sweep yields sum and sum-of-squares (one reduction
    pair instead of two passes), hoisted 1/DIM.  Pad lanes of v are zero and gamma's
    pad lanes are zero, so the output pad lanes stay exactly zero."""
    s1 = jnp.sum(v, axis=-1, keepdims=True)
    s2 = jnp.sum(v * v, axis=-1, keepdims=True)
    mu = s1 * (1.0 / DIM)
    var = s2 * (1.0 / DIM) - mu * mu
    return (v - mu) * jax.lax.rsqrt(var + LN_EPS) * g + b


def _transformer_block(x, ln1_g, ln1_b, w_qkv, b_qkv, w_proj, b_proj,
                       ln2_g, ln2_b, w_fc1, b_fc1, w_fc2, b_fc2):
    """Pre-norm ViT block on one batch element's tokens x:(N, D_PAD) f32.
    MXU matmuls use bf16 operands with f32 accumulation; LN/softmax stay f32."""
    bf16 = jnp.bfloat16
    f32 = jnp.float32

    # ---- multi-head self-attention ----
    h = _layer_norm(x, ln1_g, ln1_b)
    qkv = jnp.dot(h.astype(bf16), w_qkv, preferred_element_type=f32) + b_qkv
    q = qkv[:, :D_PAD]                    # lane-aligned 128-wide panels (no shuffles)
    k = qkv[:, D_PAD:2 * D_PAD]
    v = qkv[:, 2 * D_PAD:]
    kb = k.astype(bf16)
    vb = v.astype(bf16)

    lane = jax.lax.broadcasted_iota(jnp.int32, (1, D_PAD), 1)
    ctx = jnp.zeros_like(q)
    for hh in range(NUM_HEADS):
        # Per-head 0/1 lane mask instead of 8-lane slicing: full-width contractions,
        # and the same mask reassembles the context in place (single proj matmul below).
        mh = jnp.where((lane >= hh * HEAD_DIM) & (lane < (hh + 1) * HEAD_DIM),
                       1.0, 0.0)
        s = jax.lax.dot_general((q * mh).astype(bf16), kb,
                                (((1,), (1,)), ((), ())),
                                preferred_element_type=f32)          # (N, N)
        s = s - jnp.max(s, axis=-1, keepdims=True)
        p = jnp.exp(s)
        p = p * pl.reciprocal(jnp.sum(p, axis=-1, keepdims=True), approx=True)
        ctx = ctx + mh * jnp.dot(p.astype(bf16), vb, preferred_element_type=f32)

    x = x + jnp.dot(ctx.astype(bf16), w_proj, preferred_element_type=f32) + b_proj

    # ---- MLP ----
    h2 = _layer_norm(x, ln2_g, ln2_b)
    u = jnp.dot(h2.astype(bf16), w_fc1, preferred_element_type=f32) + b_fc1
    # TODO(synk): timm ViT uses exact (erf) GELU; tanh approximation used here.
    u = jax.nn.gelu(u, approximate=True)
    return x + jnp.dot(u.astype(bf16), w_fc2, preferred_element_type=f32) + b_fc2


# ---------------------------------- kernels -----------------------------------
def _vit_kernel(patches_ref, patch_w_ref, emb_bias_ref,
                ln1_g_ref, ln1_b_ref, w_qkv_ref, b_qkv_ref, w_proj_ref, b_proj_ref,
                ln2_g_ref, ln2_b_ref, w_fc1_ref, b_fc1_ref, w_fc2_ref, b_fc2_ref,
                feat_ref):
    """grid = (batch[parallel], depth[arbitrary]).  One ViT block per step; the tokens
    live in feat_ref (VMEM-resident across the depth axis); per-layer weights are
    streamed one layer at a time.  The stem (patch embed + cls + pos) runs at l==0."""
    l = pl.program_id(1)

    @pl.when(l == 0)
    def _stem():
        ptok = jnp.dot(patches_ref[...], patch_w_ref[...],
                       preferred_element_type=jnp.float32)            # (NP, D_PAD)
        feat_ref[:1, :] = emb_bias_ref[:1, :]                          # cls + pos[0]
        feat_ref[1:, :] = ptok + emb_bias_ref[1:, :]                   # patches + b + pos

    x = feat_ref[...]
    x = _transformer_block(
        x,
        ln1_g_ref[...], ln1_b_ref[...], w_qkv_ref[...], b_qkv_ref[...],
        w_proj_ref[...], b_proj_ref[...], ln2_g_ref[...], ln2_b_ref[...],
        w_fc1_ref[...], b_fc1_ref[...], w_fc2_ref[...], b_fc2_ref[...])
    feat_ref[...] = x


def _head_kernel(feat_ref, word_ref,
                 word_w_ref, word_b_ref, tex_e_ref, vis_e_ref,
                 ln1_g_ref, ln1_b_ref, w_qkv_ref, b_qkv_ref, w_proj_ref, b_proj_ref,
                 ln2_g_ref, ln2_b_ref, w_fc1_ref, b_fc1_ref, w_fc2_ref, b_fc2_ref,
                 norm_g_ref, norm_b_ref, wl_w_ref, head_scale_ref, head_bias_ref,
                 x_out_ref, logits_ref):
    """grid = (batch[parallel]).  Word-embed + tex/vis assembly + shared last ViT block
    + final LayerNorm + per-attribute heads (eval-mode BatchNorm folded in)."""
    we = jnp.dot(word_ref[...], word_w_ref[...],
                 preferred_element_type=jnp.float32) + word_b_ref[...]   # (A, D_PAD)
    tex = we + tex_e_ref[...]
    vis = feat_ref[...] + vis_e_ref[...]                                  # (NVIS, D_PAD)

    # x = cat([tex, vis], dim=0) assembled directly in the VMEM-resident output block
    x_out_ref[:ATTR_NUM, :] = tex
    x_out_ref[ATTR_NUM:, :] = vis
    x = x_out_ref[...]

    x = _transformer_block(
        x,
        ln1_g_ref[...], ln1_b_ref[...], w_qkv_ref[...], b_qkv_ref[...],
        w_proj_ref[...], b_proj_ref[...], ln2_g_ref[...], ln2_b_ref[...],
        w_fc1_ref[...], b_fc1_ref[...], w_fc2_ref[...], b_fc2_ref[...])
    x = _layer_norm(x, norm_g_ref[...], norm_b_ref[...])
    x_out_ref[...] = x

    # per-attribute heads: logits[a] = x[a,:] . wl_w[a,:]  (BN folded into scale/bias)
    xa = x[:ATTR_NUM, :]
    lg = jnp.sum(xa * wl_w_ref[...], axis=-1, keepdims=True)             # (A, 1)
    lg = lg * head_scale_ref[...] + head_bias_ref[...]
    # lane-dense store: broadcast across 128 lanes; wrapper keeps lane 0
    logits_ref[...] = jnp.broadcast_to(lg, (ATTR_NUM, LANE))


# ------------------------------- JAX wrapper ----------------------------------
def patchify(imgs, p):
    """NCHW -> (B, num_patches, C*p*p); equivalent to stride-p conv unfolding."""
    b, c, h, w = imgs.shape
    gh, gw = h // p, w // p
    x = imgs.reshape(b, c, gh, p, gw, p)
    x = jnp.transpose(x, (0, 2, 4, 1, 3, 5))
    return x.reshape(b, gh * gw, c * p * p)


def forward(kp, imgs, word_vec):
    patches = patchify(imgs, PATCH).astype(jnp.bfloat16)          # (B, NP, CPP)
    word = word_vec.astype(jnp.bfloat16)                          # (A, WORD_IN)

    # -------- kernel A: ViT encoder, grid = (batch[parallel], depth[arbitrary]) ----
    vit_inputs = [patches, kp["patch_w"], kp["emb_bias"]] + [kp[k] for k in BLOCK_KEYS]
    vit_in_specs = (
        [pl.BlockSpec((None, NP, CPP), lambda b, l: (b, 0, 0)),
         pl.BlockSpec(kp["patch_w"].shape, lambda b, l: (0, 0)),
         pl.BlockSpec(kp["emb_bias"].shape, lambda b, l: (0, 0))]
        + [pl.BlockSpec((None,) + kp[k].shape[1:], lambda b, l: (l, 0, 0))
           for k in BLOCK_KEYS])
    feat = pl.pallas_call(
        _vit_kernel,
        grid=(BATCH, DEPTH),
        in_specs=vit_in_specs,
        out_specs=pl.BlockSpec((None, NVIS, D_PAD), lambda b, l: (b, 0, 0)),
        out_shape=jax.ShapeDtypeStruct((BATCH, NVIS, D_PAD), jnp.float32),
        compiler_params=pltpu.CompilerParams(
            dimension_semantics=("parallel", "arbitrary"),
            vmem_limit_bytes=VMEM_BUDGET),
    )(*vit_inputs)

    # -------- kernel B: tex/vis fusion + shared last block + heads, grid=(batch,) ----
    head_inputs = [feat, word] + [kp[k] for k in HEAD_KEYS]
    head_in_specs = (
        [pl.BlockSpec((None, NVIS, D_PAD), lambda b: (b, 0, 0)),
         pl.BlockSpec(word.shape, lambda b: (0, 0))]
        + [pl.BlockSpec(kp[k].shape, lambda b: (0, 0)) for k in HEAD_KEYS])
    x_pad, logits_pad = pl.pallas_call(
        _head_kernel,
        grid=(BATCH,),
        in_specs=head_in_specs,
        out_specs=[pl.BlockSpec((None, NTOT, D_PAD), lambda b: (b, 0, 0)),
                   pl.BlockSpec((None, ATTR_NUM, LANE), lambda b: (b, 0, 0))],
        out_shape=(jax.ShapeDtypeStruct((BATCH, NTOT, D_PAD), jnp.float32),
                   jax.ShapeDtypeStruct((BATCH, ATTR_NUM, LANE), jnp.float32)),
        compiler_params=pltpu.CompilerParams(
            dimension_semantics=("parallel",),
            vmem_limit_bytes=VMEM_BUDGET),
    )(*head_inputs)

    logits = logits_pad[:, :, 0]          # lane-dense store in-kernel; keep lane 0
    x = x_pad[:, :, :DIM]                 # un-pad the model dim
    return logits, x


# --------------------------- deterministic params -----------------------------
def init_params(key):
    # TODO(synk): original loads a pretrained ViT checkpoint (load_param); synthetic
    #             torch-layout weights are used here.
    keys = iter(jax.random.split(key, 32))

    def nrm(shape, scl=0.02):
        return scl * jax.random.normal(next(keys), shape, dtype=jnp.float32)

    blocks = []
    for _ in range(DEPTH):
        blocks.append(dict(
            ln1_g=jnp.ones((1, DIM), jnp.float32), ln1_b=jnp.zeros((1, DIM), jnp.float32),
            w_qkv=nrm((3 * DIM, DIM)), b_qkv=jnp.zeros((3 * DIM,), jnp.float32),
            w_proj=nrm((DIM, DIM)), b_proj=jnp.zeros((DIM,), jnp.float32),
            ln2_g=jnp.ones((1, DIM), jnp.float32), ln2_b=jnp.zeros((1, DIM), jnp.float32),
            w_fc1=nrm((HIDDEN, DIM)), b_fc1=jnp.zeros((HIDDEN,), jnp.float32),
            w_fc2=nrm((DIM, HIDDEN)), b_fc2=jnp.zeros((DIM,), jnp.float32),
        ))
    vit = dict(
        patch_w=nrm((DIM, CPP)), patch_b=jnp.zeros((DIM,), jnp.float32),
        cls_token=nrm((1, 1, DIM)), pos_embed=nrm((1, NVIS, DIM)),
        blocks=blocks,
        norm_g=jnp.ones((1, DIM), jnp.float32), norm_b=jnp.zeros((1, DIM), jnp.float32),
    )
    params = dict(
        vit=vit,
        word_embed_w=nrm((DIM, WORD_IN)),
        word_embed_b=jnp.zeros((DIM,), jnp.float32),
        tex_embed=jnp.zeros((1, 1, DIM), jnp.float32),   # nn.Parameter(torch.zeros(1,1,dim))
        vis_embed=jnp.zeros((1, 1, DIM), jnp.float32),
        wl_w=nrm((ATTR_NUM, DIM)),                        # stacked weight_layer[i] weights
        wl_b=jnp.zeros((ATTR_NUM,), jnp.float32),
        # BatchNorm1d(attr_num): rows = [gamma, beta, running_mean, running_var]
        bn=jnp.stack([jnp.ones((ATTR_NUM,), jnp.float32),
                      jnp.zeros((ATTR_NUM,), jnp.float32),
                      jnp.zeros((ATTR_NUM,), jnp.float32),
                      jnp.ones((ATTR_NUM,), jnp.float32)], axis=0),
    )
    # note: self.get_fc = nn.Linear(129, 1) is unused in forward -> not instantiated.
    return params


def _pad2(a, rows, cols):
    r, c = a.shape
    return jnp.pad(a, ((0, rows - r), (0, cols - c)))


def prep_params(params):
    """One-time conversion torch-layout -> kernel-ready: transposed, zero-lane-padded
    (DIM -> 128) weights, bf16 MXU operands, depth-stacked block weights,
    1/sqrt(head_dim) folded into Q, eval-mode BatchNorm folded into the head affine."""
    f32, bf16 = jnp.float32, jnp.bfloat16
    vit = params["vit"]
    scale = 1.0 / math.sqrt(HEAD_DIM)

    pos = vit["pos_embed"][0]                                   # (NVIS, DIM)
    cls = vit["cls_token"][0]                                   # (1, DIM)
    emb_bias = jnp.concatenate(
        [cls + pos[:1], vit["patch_b"][None, :] + pos[1:]], axis=0)

    kp = dict(
        patch_w=_pad2(vit["patch_w"].T, CPP, D_PAD).astype(bf16),
        emb_bias=_pad2(emb_bias, NVIS, D_PAD).astype(f32),
        word_w=_pad2(params["word_embed_w"].T, WORD_IN, D_PAD).astype(bf16),
        word_b=_pad2(params["word_embed_b"][None, :], 1, D_PAD).astype(f32),
        tex_e=_pad2(params["tex_embed"].reshape(1, DIM), 1, D_PAD).astype(f32),
        vis_e=_pad2(params["vis_embed"].reshape(1, DIM), 1, D_PAD).astype(f32),
        norm_g=_pad2(vit["norm_g"], 1, D_PAD).astype(f32),      # zero-padded gamma
        norm_b=_pad2(vit["norm_b"], 1, D_PAD).astype(f32),
    )

    prepped = []
    for bp in vit["blocks"]:
        wt = bp["w_qkv"].T                                      # (DIM, 3*DIM), in x out
        wq, wk, wv = wt[:, :DIM], wt[:, DIM:2 * DIM], wt[:, 2 * DIM:]
        bq, bk, bv = (bp["b_qkv"][:DIM], bp["b_qkv"][DIM:2 * DIM], bp["b_qkv"][2 * DIM:])
        prepped.append(dict(
            ln1_g=_pad2(bp["ln1_g"], 1, D_PAD).astype(f32),
            ln1_b=_pad2(bp["ln1_b"], 1, D_PAD).astype(f32),
            # three lane-aligned 128-wide panels [Q | K | V]; 1/sqrt(hd) folded into Q
            w_qkv=jnp.concatenate(
                [_pad2(wq * scale, D_PAD, D_PAD), _pad2(wk, D_PAD, D_PAD),
                 _pad2(wv, D_PAD, D_PAD)], axis=1).astype(bf16),
            b_qkv=jnp.concatenate(
                [_pad2((bq * scale)[None, :], 1, D_PAD),
                 _pad2(bk[None, :], 1, D_PAD),
                 _pad2(bv[None, :], 1, D_PAD)], axis=1).astype(f32),
            w_proj=_pad2(bp["w_proj"].T, D_PAD, D_PAD).astype(bf16),
            b_proj=_pad2(bp["b_proj"][None, :], 1, D_PAD).astype(f32),
            ln2_g=_pad2(bp["ln2_g"], 1, D_PAD).astype(f32),
            ln2_b=_pad2(bp["ln2_b"], 1, D_PAD).astype(f32),
            w_fc1=_pad2(bp["w_fc1"].T, D_PAD, HIDDEN).astype(bf16),
            b_fc1=bp["b_fc1"][None, :].astype(f32),             # HIDDEN already 128
            w_fc2=_pad2(bp["w_fc2"].T, HIDDEN, D_PAD).astype(bf16),
            b_fc2=_pad2(bp["b_fc2"][None, :], 1, D_PAD).astype(f32),
        ))
    for k in BLOCK_KEYS:
        kp[k] = jnp.stack([blk[k] for blk in prepped], axis=0)   # (DEPTH, r, c)
        kp["last_" + k] = prepped[-1][k]                         # shared last block

    # eval-mode BatchNorm1d fused into a per-attribute affine.
    # TODO(synk): train-mode batch statistics are not modeled.
    gamma, beta, rmean, rvar = params["bn"]
    bn_scale = gamma * jax.lax.rsqrt(rvar + BN_EPS)
    bn_bias = beta - rmean * bn_scale
    kp["wl_w"] = _pad2(params["wl_w"], ATTR_NUM, D_PAD).astype(f32)
    kp["head_scale"] = bn_scale.reshape(ATTR_NUM, 1).astype(f32)
    kp["head_bias"] = (params["wl_b"] * bn_scale + bn_bias).reshape(ATTR_NUM, 1).astype(f32)
    return kp


# ---------------------------------- main ---------------------------------------
if __name__ == "__main__":
    key = jax.random.PRNGKey(0)
    kpar, ki, kw = jax.random.split(key, 3)
    params = init_params(kpar)
    kernel_params = prep_params(params)

    imgs = jax.random.normal(ki, (BATCH, IN_CHANS, IMG, IMG), jnp.float32)      # NCHW
    word_vec = jax.random.normal(kw, (ATTR_NUM, WORD_IN), jnp.float32)

    logits, x = jax.jit(forward)(kernel_params, imgs, word_vec)
    jax.block_until_ready((logits, x))

    assert logits.shape == (BATCH, ATTR_NUM), logits.shape
    assert x.shape == (BATCH, NTOT, DIM), x.shape
    assert bool(jnp.all(jnp.isfinite(logits))) and bool(jnp.all(jnp.isfinite(x)))
    print("KERNEL_OK")
</pallas_src>

<mosaic_0001>
module attributes {stable_mosaic.version = 11 : i64} {
  func.func @_vit_kernel(%arg0: i32, %arg1: i32, %arg2: memref<1x4x768xbf16, #tpu.memory_space<vmem>>, %arg3: memref<768x128xbf16, #tpu.memory_space<vmem>>, %arg4: memref<5x128xf32, #tpu.memory_space<vmem>>, %arg5: memref<1x1x128xf32, #tpu.memory_space<vmem>>, %arg6: memref<1x1x128xf32, #tpu.memory_space<vmem>>, %arg7: memref<1x128x384xbf16, #tpu.memory_space<vmem>>, %arg8: memref<1x1x384xf32, #tpu.memory_space<vmem>>, %arg9: memref<1x128x128xbf16, #tpu.memory_space<vmem>>, %arg10: memref<1x1x128xf32, #tpu.memory_space<vmem>>, %arg11: memref<1x1x128xf32, #tpu.memory_space<vmem>>, %arg12: memref<1x1x128xf32, #tpu.memory_space<vmem>>, %arg13: memref<1x128x128xbf16, #tpu.memory_space<vmem>>, %arg14: memref<1x1x128xf32, #tpu.memory_space<vmem>>, %arg15: memref<1x128x128xbf16, #tpu.memory_space<vmem>>, %arg16: memref<1x1x128xf32, #tpu.memory_space<vmem>>, %arg17: memref<1x5x128xf32, #tpu.memory_space<vmem>>) attributes {dimension_semantics = [#tpu.dimension_semantics<parallel>, #tpu.dimension_semantics<arbitrary>], iteration_bounds = array<i64: 2, 2>, scalar_prefetch = 0 : i64, scratch_operands = 0 : i64, tpu.core_type = #tpu.core_type<tc>, window_params = [{transform_indices = @transform_0, window_bounds = array<i64: 1, 4, 768>}, {pipeline_mode = #tpu.pipeline_mode<synchronous>, transform_indices = @transform_1, window_bounds = array<i64: 768, 128>}, {pipeline_mode = #tpu.pipeline_mode<synchronous>, transform_indices = @transform_2, window_bounds = array<i64: 5, 128>}, {transform_indices = @transform_3, window_bounds = array<i64: 1, 1, 128>}, {transform_indices = @transform_4, window_bounds = array<i64: 1, 1, 128>}, {transform_indices = @transform_5, window_bounds = array<i64: 1, 128, 384>}, {transform_indices = @transform_6, window_bounds = array<i64: 1, 1, 384>}, {transform_indices = @transform_7, window_bounds = array<i64: 1, 128, 128>}, {transform_indices = @transform_8, window_bounds = array<i64: 1, 1, 128>}, {transform_indices = @transform_9, window_bounds = array<i64: 1, 1, 128>}, {transform_indices = @transform_10, window_bounds = array<i64: 1, 1, 128>}, {transform_indices = @transform_11, window_bounds = array<i64: 1, 128, 128>}, {transform_indices = @transform_12, window_bounds = array<i64: 1, 1, 128>}, {transform_indices = @transform_13, window_bounds = array<i64: 1, 128, 128>}, {transform_indices = @transform_14, window_bounds = array<i64: 1, 1, 128>}, {transform_indices = @transform_15, window_bounds = array<i64: 1, 5, 128>}]} {
    %c0_i32 = arith.constant 0 : i32
    %0 = arith.cmpi eq, %arg1, %c0_i32 : i32
    %1 = arith.extui %0 : i1 to i32
    %c0_i32_0 = arith.constant 0 : i32
    %2 = arith.cmpi ne, %1, %c0_i32_0 : i32
    scf.if %2 {
      %c0_88 = arith.constant 0 : index
      %c0_89 = arith.constant 0 : index
      %c0_90 = arith.constant 0 : index
      %222 = vector.load %arg2[%c0_88, %c0_89, %c0_90] : memref<1x4x768xbf16, #tpu.memory_space<vmem>>, vector<1x4x768xbf16>
      %223 = vector.shape_cast %222 : vector<1x4x768xbf16> to vector<4x768xbf16>
      %c0_91 = arith.constant 0 : index
      %c0_92 = arith.constant 0 : index
      %224 = vector.load %arg3[%c0_91, %c0_92] : memref<768x128xbf16, #tpu.memory_space<vmem>>, vector<768x128xbf16>
      %cst_93 = arith.constant dense<0.000000e+00> : vector<4x128xf32>
      %225 = tpu.matmul %223, %224, %cst_93 {dimension_numbers = #tpu.dot_dimension_numbers<[1], [0], [0], [1], [0, 0, 1, 1], [], []>} : vector<4x768xbf16>, vector<768x128xbf16>, vector<4x128xf32> -> vector<4x128xf32>
      %c0_94 = arith.constant 0 : index
      %c0_95 = arith.constant 0 : index
      %226 = vector.load %arg4[%c0_94, %c0_95] : memref<5x128xf32, #tpu.memory_space<vmem>>, vector<1x128xf32>
      %c0_96 = arith.constant 0 : index
      %c0_97 = arith.constant 0 : index
      %c0_98 = arith.constant 0 : index
      %227 = vector.load %arg17[%c0_96, %c0_97, %c0_98] : memref<1x5x128xf32, #tpu.memory_space<vmem>>, vector<1x1x128xf32>
      %228 = vector.shape_cast %227 : vector<1x1x128xf32> to vector<1x128xf32>
      %229 = vector.shape_cast %226 : vector<1x128xf32> to vector<1x1x128xf32>
      tpu.vector_store %arg17[%c0_96, %c0_97, %c0_98], %229 {strides = array<i32>} : memref<1x5x128xf32, #tpu.memory_space<vmem>>, vector<1x1x128xf32>,
      %c1 = arith.constant 1 : index
      %c0_99 = arith.constant 0 : index
      %230 = vector.load %arg4[%c1, %c0_99] : memref<5x128xf32, #tpu.memory_space<vmem>>, vector<4x128xf32>
      %231 = arith.addf %225, %230 : vector<4x128xf32>
      %c0_100 = arith.constant 0 : index
      %c1_101 = arith.constant 1 : index
      %c0_102 = arith.constant 0 : index
      %232 = vector.load %arg17[%c0_100, %c1_101, %c0_102] : memref<1x5x128xf32, #tpu.memory_space<vmem>>, vector<1x4x128xf32>
      %233 = vector.shape_cast %232 : vector<1x4x128xf32> to vector<4x128xf32>
      %234 = vector.shape_cast %231 : vector<4x128xf32> to vector<1x4x128xf32>
      tpu.vector_store %arg17[%c0_100, %c1_101, %c0_102], %234 {strides = array<i32>} : memref<1x5x128xf32, #tpu.memory_space<vmem>>, vector<1x4x128xf32>,
    } else {
    }
    %c0 = arith.constant 0 : index
    %c0_1 = arith.constant 0 : index
    %c0_2 = arith.constant 0 : index
    %3 = vector.load %arg17[%c0, %c0_1, %c0_2] : memref<1x5x128xf32, #tpu.memory_space<vmem>>, vector<1x5x128xf32>
    %4 = vector.shape_cast %3 : vector<1x5x128xf32> to vector<5x128xf32>
    %c0_3 = arith.constant 0 : index
    %c0_4 = arith.constant 0 : index
    %c0_5 = arith.constant 0 : index
    %5 = vector.load %arg5[%c0_3, %c0_4, %c0_5] : memref<1x1x128xf32, #tpu.memory_space<vmem>>, vector<1x1x128xf32>
    %6 = vector.shape_cast %5 : vector<1x1x128xf32> to vector<1x128xf32>
    %c0_6 = arith.constant 0 : index
    %c0_7 = arith.constant 0 : index
    %c0_8 = arith.constant 0 : index
    %7 = vector.load %arg6[%c0_6, %c0_7, %c0_8] : memref<1x1x128xf32, #tpu.memory_space<vmem>>, vector<1x1x128xf32>
    %8 = vector.shape_cast %7 : vector<1x1x128xf32> to vector<1x128xf32>
    %c0_9 = arith.constant 0 : index
    %c0_10 = arith.constant 0 : index
    %c0_11 = arith.constant 0 : index
    %9 = vector.load %arg7[%c0_9, %c0_10, %c0_11] : memref<1x128x384xbf16, #tpu.memory_space<vmem>>, vector<1x128x384xbf16>
    %10 = vector.shape_cast %9 : vector<1x128x384xbf16> to vector<128x384xbf16>
    %c0_12 = arith.constant 0 : index
    %c0_13 = arith.constant 0 : index
    %c0_14 = arith.constant 0 : index
    %11 = vector.load %arg8[%c0_12, %c0_13, %c0_14] : memref<1x1x384xf32, #tpu.memory_space<vmem>>, vector<1x1x384xf32>
    %12 = vector.shape_cast %11 : vector<1x1x384xf32> to vector<1x384xf32>
    %c0_15 = arith.constant 0 : index
    %c0_16 = arith.constant 0 : index
    %c0_17 = arith.constant 0 : index
    %13 = vector.load %arg9[%c0_15, %c0_16, %c0_17] : memref<1x128x128xbf16, #tpu.memory_space<vmem>>, vector<1x128x128xbf16>
    %14 = vector.shape_cast %13 : vector<1x128x128xbf16> to vector<128x128xbf16>
    %c0_18 = arith.constant 0 : index
    %c0_19 = arith.constant 0 : index
    %c0_20 = arith.constant 0 : index
    %15 = vector.load %arg10[%c0_18, %c0_19, %c0_20] : memref<1x1x128xf32, #tpu.memory_space<vmem>>, vector<1x1x128xf32>
    %16 = vector.shape_cast %15 : vector<1x1x128xf32> to vector<1x128xf32>
    %c0_21 = arith.constant 0 : index
    %c0_22 = arith.constant 0 : index
    %c0_23 = arith.constant 0 : index
    %17 = vector.load %arg11[%c0_21, %c0_22, %c0_23] : memref<1x1x128xf32, #tpu.memory_space<vmem>>, vector<1x1x128xf32>
    %18 = vector.shape_cast %17 : vector<1x1x128xf32> to vector<1x128xf32>
    %c0_24 = arith.constant 0 : index
    %c0_25 = arith.constant 0 : index
    %c0_26 = arith.constant 0 : index
    %19 = vector.load %arg12[%c0_24, %c0_25, %c0_26] : memref<1x1x128xf32, #tpu.memory_space<vmem>>, vector<1x1x128xf32>
    %20 = vector.shape_cast %19 : vector<1x1x128xf32> to vector<1x128xf32>
    %c0_27 = arith.constant 0 : index
    %c0_28 = arith.constant 0 : index
    %c0_29 = arith.constant 0 : index
    %21 = vector.load %arg13[%c0_27, %c0_28, %c0_29] : memref<1x128x128xbf16, #tpu.memory_space<vmem>>, vector<1x128x128xbf16>
    %22 = vector.shape_cast %21 : vector<1x128x128xbf16> to vector<128x128xbf16>
    %c0_30 = arith.constant 0 : index
    %c0_31 = arith.constant 0 : index
    %c0_32 = arith.constant 0 : index
    %23 = vector.load %arg14[%c0_30, %c0_31, %c0_32] : memref<1x1x128xf32, #tpu.memory_space<vmem>>, vector<1x1x128xf32>
    %24 = vector.shape_cast %23 : vector<1x1x128xf32> to vector<1x128xf32>
    %c0_33 = arith.constant 0 : index
    %c0_34 = arith.constant 0 : index
    %c0_35 = arith.constant 0 : index
    %25 = vector.load %arg15[%c0_33, %c0_34, %c0_35] : memref<1x128x128xbf16, #tpu.memory_space<vmem>>, vector<1x128x128xbf16>
    %26 = vector.shape_cast %25 : vector<1x128x128xbf16> to vector<128x128xbf16>
    %c0_36 = arith.constant 0 : index
    %c0_37 = arith.constant 0 : index
    %c0_38 = arith.constant 0 : index
    %27 = vector.load %arg16[%c0_36, %c0_37, %c0_38] : memref<1x1x128xf32, #tpu.memory_space<vmem>>, vector<1x1x128xf32>
    %28 = vector.shape_cast %27 : vector<1x1x128xf32> to vector<1x128xf32>
    %cst = arith.constant dense<0.000000e+00> : vector<5xf32>
    %29 = vector.multi_reduction <add>, %4, %cst [1] : vector<5x128xf32> to vector<5xf32>
    %30 = vector.shape_cast %29 : vector<5xf32> to vector<5x1xf32>
    %31 = arith.mulf %4, %4 : vector<5x128xf32>
    %cst_39 = arith.constant dense<0.000000e+00> : vector<5xf32>
    %32 = vector.multi_reduction <add>, %31, %cst_39 [1] : vector<5x128xf32> to vector<5xf32>
    %33 = vector.shape_cast %32 : vector<5xf32> to vector<5x1xf32>
    %cst_40 = arith.constant 3.125000e-02 : f32
    %34 = vector.broadcast %cst_40 : f32 to vector<5x1xf32>
    %35 = arith.mulf %30, %34 : vector<5x1xf32>
    %cst_41 = arith.constant 3.125000e-02 : f32
    %36 = vector.broadcast %cst_41 : f32 to vector<5x1xf32>
    %37 = arith.mulf %33, %36 : vector<5x1xf32>
    %38 = arith.mulf %35, %35 : vector<5x1xf32>
    %39 = arith.subf %37, %38 : vector<5x1xf32>
    %40 = vector.broadcast %35 : vector<5x1xf32> to vector<5x128xf32>
    %41 = arith.subf %4, %40 : vector<5x128xf32>
    %cst_42 = arith.constant 9.99999997E-7 : f32
    %42 = vector.broadcast %cst_42 : f32 to vector<5x1xf32>
    %43 = arith.addf %39, %42 : vector<5x1xf32>
    %44 = math.rsqrt %43 : vector<5x1xf32>
    %45 = vector.broadcast %44 : vector<5x1xf32> to vector<5x128xf32>
    %46 = arith.mulf %41, %45 : vector<5x128xf32>
    %47 = vector.broadcast %6 : vector<1x128xf32> to vector<5x128xf32>
    %48 = arith.mulf %46, %47 : vector<5x128xf32>
    %49 = vector.broadcast %8 : vector<1x128xf32> to vector<5x128xf32>
    %50 = arith.addf %48, %49 : vector<5x128xf32>
    %51 = arith.truncf %50 : vector<5x128xf32> to vector<5x128xbf16>
    %cst_43 = arith.constant dense<0.000000e+00> : vector<5x384xf32>
    %52 = tpu.matmul %51, %10, %cst_43 {dimension_numbers = #tpu.dot_dimension_numbers<[1], [0], [0], [1], [0, 0, 1, 1], [], []>} : vector<5x128xbf16>, vector<128x384xbf16>, vector<5x384xf32> -> vector<5x384xf32>
    %53 = vector.broadcast %12 : vector<1x384xf32> to vector<5x384xf32>
    %54 = arith.addf %52, %53 : vector<5x384xf32>
    %55 = vector.extract_strided_slice %54 {offsets = [0, 0], sizes = [5, 128], strides = [1, 1]} : vector<5x384xf32> to vector<5x128xf32>
    %56 = vector.extract_strided_slice %54 {offsets = [0, 128], sizes = [5, 128], strides = [1, 1]} : vector<5x384xf32> to vector<5x128xf32>
    %57 = vector.extract_strided_slice %54 {offsets = [0, 256], sizes = [5, 128], strides = [1, 1]} : vector<5x384xf32> to vector<5x128xf32>
    %58 = arith.truncf %56 : vector<5x128xf32> to vector<5x128xbf16>
    %59 = arith.truncf %57 : vector<5x128xf32> to vector<5x128xbf16>
    %60 = tpu.iota {dimensions = array<i32: 1>} : vector<1x128xi32>
    %cst_44 = arith.constant 0.000000e+00 : f32
    %61 = vector.broadcast %cst_44 : f32 to vector<5x128xf32>
    %c0_i32_45 = arith.constant 0 : i32
    %62 = vector.broadcast %c0_i32_45 : i32 to vector<1x128xi32>
    %63 = arith.cmpi sge, %60, %62 : vector<1x128xi32>
    %c8_i32 = arith.constant 8 : i32
    %64 = vector.broadcast %c8_i32 : i32 to vector<1x128xi32>
    %65 = arith.cmpi slt, %60, %64 : vector<1x128xi32>
    %66 = arith.andi %63, %65 : vector<1x128xi1>
    %cst_46 = arith.constant 1.000000e+00 : f32
    %cst_47 = arith.constant 0.000000e+00 : f32
    %67 = vector.broadcast %cst_46 : f32 to vector<1x128xf32>
    %68 = vector.broadcast %cst_47 : f32 to vector<1x128xf32>
    %69 = arith.select %66, %67, %68 : vector<1x128xi1>, vector<1x128xf32>
    %70 = vector.broadcast %69 : vector<1x128xf32> to vector<5x128xf32>
    %71 = arith.mulf %55, %70 : vector<5x128xf32>
    %72 = arith.truncf %71 : vector<5x128xf32> to vector<5x128xbf16>
    %cst_48 = arith.constant dense<0.000000e+00> : vector<5x5xf32>
    %73 = tpu.matmul %72, %58, %cst_48 {dimension_numbers = #tpu.dot_dimension_numbers<[1], [1], [0], [0], [0, 0, 1, 0], [], []>} : vector<5x128xbf16>, vector<5x128xbf16>, vector<5x5xf32> -> vector<5x5xf32>
    %cst_49 = arith.constant dense<0xFF800000> : vector<5xf32>
    %74 = vector.multi_reduction <maximumf>, %73, %cst_49 [1] : vector<5x5xf32> to vector<5xf32>
    %75 = vector.shape_cast %74 : vector<5xf32> to vector<5x1xf32>
    %76 = vector.broadcast %75 : vector<5x1xf32> to vector<5x5xf32>
    %77 = arith.subf %73, %76 : vector<5x5xf32>
    %78 = math.exp %77 : vector<5x5xf32>
    %cst_50 = arith.constant dense<0.000000e+00> : vector<5xf32>
    %79 = vector.multi_reduction <add>, %78, %cst_50 [1] : vector<5x5xf32> to vector<5xf32>
    %80 = vector.shape_cast %79 : vector<5xf32> to vector<5x1xf32>
    %81 = tpu.reciprocal %80 {approx = true} : vector<5x1xf32> -> vector<5x1xf32>
    %82 = vector.broadcast %81 : vector<5x1xf32> to vector<5x5xf32>
    %83 = arith.mulf %78, %82 : vector<5x5xf32>
    %84 = arith.truncf %83 : vector<5x5xf32> to vector<5x5xbf16>
    %cst_51 = arith.constant dense<0.000000e+00> : vector<5x128xf32>
    %85 = tpu.matmul %84, %59, %cst_51 {dimension_numbers = #tpu.dot_dimension_numbers<[1], [0], [0], [1], [0, 0, 1, 1], [], []>} : vector<5x5xbf16>, vector<5x128xbf16>, vector<5x128xf32> -> vector<5x128xf32>
    %86 = vector.broadcast %69 : vector<1x128xf32> to vector<5x128xf32>
    %87 = arith.mulf %86, %85 : vector<5x128xf32>
    %88 = arith.addf %61, %87 : vector<5x128xf32>
    %c8_i32_52 = arith.constant 8 : i32
    %89 = vector.broadcast %c8_i32_52 : i32 to vector<1x128xi32>
    %90 = arith.cmpi sge, %60, %89 : vector<1x128xi32>
    %c16_i32 = arith.constant 16 : i32
    %91 = vector.broadcast %c16_i32 : i32 to vector<1x128xi32>
    %92 = arith.cmpi slt, %60, %91 : vector<1x128xi32>
    %93 = arith.andi %90, %92 : vector<1x128xi1>
    %cst_53 = arith.constant 1.000000e+00 : f32
    %cst_54 = arith.constant 0.000000e+00 : f32
    %94 = vector.broadcast %cst_53 : f32 to vector<1x128xf32>
    %95 = vector.broadcast %cst_54 : f32 to vector<1x128xf32>
    %96 = arith.select %93, %94, %95 : vector<1x128xi1>, vector<1x128xf32>
    %97 = vector.broadcast %96 : vector<1x128xf32> to vector<5x128xf32>
    %98 = arith.mulf %55, %97 : vector<5x128xf32>
    %99 = arith.truncf %98 : vector<5x128xf32> to vector<5x128xbf16>
    %cst_55 = arith.constant dense<0.000000e+00> : vector<5x5xf32>
    %100 = tpu.matmul %99, %58, %cst_55 {dimension_numbers = #tpu.dot_dimension_numbers<[1], [1], [0], [0], [0, 0, 1, 0], [], []>} : vector<5x128xbf16>, vector<5x128xbf16>, vector<5x5xf32> -> vector<5x5xf32>
    %cst_56 = arith.constant dense<0xFF800000> : vector<5xf32>
    %101 = vector.multi_reduction <maximumf>, %100, %cst_56 [1] : vector<5x5xf32> to vector<5xf32>
    %102 = vector.shape_cast %101 : vector<5xf32> to vector<5x1xf32>
    %103 = vector.broadcast %102 : vector<5x1xf32> to vector<5x5xf32>
    %104 = arith.subf %100, %103 : vector<5x5xf32>
    %105 = math.exp %104 : vector<5x5xf32>
    %cst_57 = arith.constant dense<0.000000e+00> : vector<5xf32>
    %106 = vector.multi_reduction <add>, %105, %cst_57 [1] : vector<5x5xf32> to vector<5xf32>
    %107 = vector.shape_cast %106 : vector<5xf32> to vector<5x1xf32>
    %108 = tpu.reciprocal %107 {approx = true} : vector<5x1xf32> -> vector<5x1xf32>
    %109 = vector.broadcast %108 : vector<5x1xf32> to vector<5x5xf32>
    %110 = arith.mulf %105, %109 : vector<5x5xf32>
    %111 = arith.truncf %110 : vector<5x5xf32> to vector<5x5xbf16>
    %cst_58 = arith.constant dense<0.000000e+00> : vector<5x128xf32>
    %112 = tpu.matmul %111, %59, %cst_58 {dimension_numbers = #tpu.dot_dimension_numbers<[1], [0], [0], [1], [0, 0, 1, 1], [], []>} : vector<5x5xbf16>, vector<5x128xbf16>, vector<5x128xf32> -> vector<5x128xf32>
    %113 = vector.broadcast %96 : vector<1x128xf32> to vector<5x128xf32>
    %114 = arith.mulf %113, %112 : vector<5x128xf32>
    %115 = arith.addf %88, %114 : vector<5x128xf32>
    %c16_i32_59 = arith.constant 16 : i32
    %116 = vector.broadcast %c16_i32_59 : i32 to vector<1x128xi32>
    %117 = arith.cmpi sge, %60, %116 : vector<1x128xi32>
    %c24_i32 = arith.constant 24 : i32
    %118 = vector.broadcast %c24_i32 : i32 to vector<1x128xi32>
    %119 = arith.cmpi slt, %60, %118 : vector<1x128xi32>
    %120 = arith.andi %117, %119 : vector<1x128xi1>
    %cst_60 = arith.constant 1.000000e+00 : f32
    %cst_61 = arith.constant 0.000000e+00 : f32
    %121 = vector.broadcast %cst_60 : f32 to vector<1x128xf32>
    %122 = vector.broadcast %cst_61 : f32 to vector<1x128xf32>
    %123 = arith.select %120, %121, %122 : vector<1x128xi1>, vector<1x128xf32>
    %124 = vector.broadcast %123 : vector<1x128xf32> to vector<5x128xf32>
    %125 = arith.mulf %55, %124 : vector<5x128xf32>
    %126 = arith.truncf %125 : vector<5x128xf32> to vector<5x128xbf16>
    %cst_62 = arith.constant dense<0.000000e+00> : vector<5x5xf32>
    %127 = tpu.matmul %126, %58, %cst_62 {dimension_numbers = #tpu.dot_dimension_numbers<[1], [1], [0], [0], [0, 0, 1, 0], [], []>} : vector<5x128xbf16>, vector<5x128xbf16>, vector<5x5xf32> -> vector<5x5xf32>
    %cst_63 = arith.constant dense<0xFF800000> : vector<5xf32>
    %128 = vector.multi_reduction <maximumf>, %127, %cst_63 [1] : vector<5x5xf32> to vector<5xf32>
    %129 = vector.shape_cast %128 : vector<5xf32> to vector<5x1xf32>
    %130 = vector.broadcast %129 : vector<5x1xf32> to vector<5x5xf32>
    %131 = arith.subf %127, %130 : vector<5x5xf32>
    %132 = math.exp %131 : vector<5x5xf32>
    %cst_64 = arith.constant dense<0.000000e+00> : vector<5xf32>
    %133 = vector.multi_reduction <add>, %132, %cst_64 [1] : vector<5x5xf32> to vector<5xf32>
    %134 = vector.shape_cast %133 : vector<5xf32> to vector<5x1xf32>
    %135 = tpu.reciprocal %134 {approx = true} : vector<5x1xf32> -> vector<5x1xf32>
    %136 = vector.broadcast %135 : vector<5x1xf32> to vector<5x5xf32>
    %137 = arith.mulf %132, %136 : vector<5x5xf32>
    %138 = arith.truncf %137 : vector<5x5xf32> to vector<5x5xbf16>
    %cst_65 = arith.constant dense<0.000000e+00> : vector<5x128xf32>
    %139 = tpu.matmul %138, %59, %cst_65 {dimension_numbers = #tpu.dot_dimension_numbers<[1], [0], [0], [1], [0, 0, 1, 1], [], []>} : vector<5x5xbf16>, vector<5x128xbf16>, vector<5x128xf32> -> vector<5x128xf32>
    %140 = vector.broadcast %123 : vector<1x128xf32> to vector<5x128xf32>
    %141 = arith.mulf %140, %139 : vector<5x128xf32>
    %142 = arith.addf %115, %141 : vector<5x128xf32>
    %c24_i32_66 = arith.constant 24 : i32
    %143 = vector.broadcast %c24_i32_66 : i32 to vector<1x128xi32>
    %144 = arith.cmpi sge, %60, %143 : vector<1x128xi32>
    %c32_i32 = arith.constant 32 : i32
    %145 = vector.broadcast %c32_i32 : i32 to vector<1x128xi32>
    %146 = arith.cmpi slt, %60, %145 : vector<1x128xi32>
    %147 = arith.andi %144, %146 : vector<1x128xi1>
    %cst_67 = arith.constant 1.000000e+00 : f32
    %cst_68 = arith.constant 0.000000e+00 : f32
    %148 = vector.broadcast %cst_67 : f32 to vector<1x128xf32>
    %149 = vector.broadcast %cst_68 : f32 to vector<1x128xf32>
    %150 = arith.select %147, %148, %149 : vector<1x128xi1>, vector<1x128xf32>
    %151 = vector.broadcast %150 : vector<1x128xf32> to vector<5x128xf32>
    %152 = arith.mulf %55, %151 : vector<5x128xf32>
    %153 = arith.truncf %152 : vector<5x128xf32> to vector<5x128xbf16>
    %cst_69 = arith.constant dense<0.000000e+00> : vector<5x5xf32>
    %154 = tpu.matmul %153, %58, %cst_69 {dimension_numbers = #tpu.dot_dimension_numbers<[1], [1], [0], [0], [0, 0, 1, 0], [], []>} : vector<5x128xbf16>, vector<5x128xbf16>, vector<5x5xf32> -> vector<5x5xf32>
    %cst_70 = arith.constant dense<0xFF800000> : vector<5xf32>
    %155 = vector.multi_reduction <maximumf>, %154, %cst_70 [1] : vector<5x5xf32> to vector<5xf32>
    %156 = vector.shape_cast %155 : vector<5xf32> to vector<5x1xf32>
    %157 = vector.broadcast %156 : vector<5x1xf32> to vector<5x5xf32>
    %158 = arith.subf %154, %157 : vector<5x5xf32>
    %159 = math.exp %158 : vector<5x5xf32>
    %cst_71 = arith.constant dense<0.000000e+00> : vector<5xf32>
    %160 = vector.multi_reduction <add>, %159, %cst_71 [1] : vector<5x5xf32> to vector<5xf32>
    %161 = vector.shape_cast %160 : vector<5xf32> to vector<5x1xf32>
    %162 = tpu.reciprocal %161 {approx = true} : vector<5x1xf32> -> vector<5x1xf32>
    %163 = vector.broadcast %162 : vector<5x1xf32> to vector<5x5xf32>
    %164 = arith.mulf %159, %163 : vector<5x5xf32>
    %165 = arith.truncf %164 : vector<5x5xf32> to vector<5x5xbf16>
    %cst_72 = arith.constant dense<0.000000e+00> : vector<5x128xf32>
    %166 = tpu.matmul %165, %59, %cst_72 {dimension_numbers = #tpu.dot_dimension_numbers<[1], [0], [0], [1], [0, 0, 1, 1], [], []>} : vector<5x5xbf16>, vector<5x128xbf16>, vector<5x128xf32> -> vector<5x128xf32>
    %167 = vector.broadcast %150 : vector<1x128xf32> to vector<5x128xf32>
    %168 = arith.mulf %167, %166 : vector<5x128xf32>
    %169 = arith.addf %142, %168 : vector<5x128xf32>
    %170 = arith.truncf %169 : vector<5x128xf32> to vector<5x128xbf16>
    %cst_73 = arith.constant dense<0.000000e+00> : vector<5x128xf32>
    %171 = tpu.matmul %170, %14, %cst_73 {dimension_numbers = #tpu.dot_dimension_numbers<[1], [0], [0], [1], [0, 0, 1, 1], [], []>} : vector<5x128xbf16>, vector<128x128xbf16>, vector<5x128xf32> -> vector<5x128xf32>
    %172 = arith.addf %4, %171 : vector<5x128xf32>
    %173 = vector.broadcast %16 : vector<1x128xf32> to vector<5x128xf32>
    %174 = arith.addf %172, %173 : vector<5x128xf32>
    %cst_74 = arith.constant dense<0.000000e+00> : vector<5xf32>
    %175 = vector.multi_reduction <add>, %174, %cst_74 [1] : vector<5x128xf32> to vector<5xf32>
    %176 = vector.shape_cast %175 : vector<5xf32> to vector<5x1xf32>
    %177 = arith.mulf %174, %174 : vector<5x128xf32>
    %cst_75 = arith.constant dense<0.000000e+00> : vector<5xf32>
    %178 = vector.multi_reduction <add>, %177, %cst_75 [1] : vector<5x128xf32> to vector<5xf32>
    %179 = vector.shape_cast %178 : vector<5xf32> to vector<5x1xf32>
    %cst_76 = arith.constant 3.125000e-02 : f32
    %180 = vector.broadcast %cst_76 : f32 to vector<5x1xf32>
    %181 = arith.mulf %176, %180 : vector<5x1xf32>
    %cst_77 = arith.constant 3.125000e-02 : f32
    %182 = vector.broadcast %cst_77 : f32 to vector<5x1xf32>
    %183 = arith.mulf %179, %182 : vector<5x1xf32>
    %184 = arith.mulf %181, %181 : vector<5x1xf32>
    %185 = arith.subf %183, %184 : vector<5x1xf32>
    %186 = vector.broadcast %181 : vector<5x1xf32> to vector<5x128xf32>
    %187 = arith.subf %174, %186 : vector<5x128xf32>
    %cst_78 = arith.constant 9.99999997E-7 : f32
    %188 = vector.broadcast %cst_78 : f32 to vector<5x1xf32>
    %189 = arith.addf %185, %188 : vector<5x1xf32>
    %190 = math.rsqrt %189 : vector<5x1xf32>
    %191 = vector.broadcast %190 : vector<5x1xf32> to vector<5x128xf32>
    %192 = arith.mulf %187, %191 : vector<5x128xf32>
    %193 = vector.broadcast %18 : vector<1x128xf32> to vector<5x128xf32>
    %194 = arith.mulf %192, %193 : vector<5x128xf32>
    %195 = vector.broadcast %20 : vector<1x128xf32> to vector<5x128xf32>
    %196 = arith.addf %194, %195 : vector<5x128xf32>
    %197 = arith.truncf %196 : vector<5x128xf32> to vector<5x128xbf16>
    %cst_79 = arith.constant dense<0.000000e+00> : vector<5x128xf32>
    %198 = tpu.matmul %197, %22, %cst_79 {dimension_numbers = #tpu.dot_dimension_numbers<[1], [0], [0], [1], [0, 0, 1, 1], [], []>} : vector<5x128xbf16>, vector<128x128xbf16>, vector<5x128xf32> -> vector<5x128xf32>
    %199 = vector.broadcast %24 : vector<1x128xf32> to vector<5x128xf32>
    %200 = arith.addf %198, %199 : vector<5x128xf32>
    %201 = arith.mulf %200, %200 : vector<5x128xf32>
    %202 = arith.mulf %200, %201 : vector<5x128xf32>
    %cst_80 = arith.constant 4.471500e-02 : f32
    %203 = vector.broadcast %cst_80 : f32 to vector<5x128xf32>
    %204 = arith.mulf %203, %202 : vector<5x128xf32>
    %205 = arith.addf %200, %204 : vector<5x128xf32>
    %cst_81 = arith.constant 0.797884583 : f32
    %206 = vector.broadcast %cst_81 : f32 to vector<5x128xf32>
    %207 = arith.mulf %206, %205 : vector<5x128xf32>
    %208 = math.tanh %207 : vector<5x128xf32>
    %cst_82 = arith.constant 1.000000e+00 : f32
    %209 = vector.broadcast %cst_82 : f32 to vector<5x128xf32>
    %210 = arith.addf %209, %208 : vector<5x128xf32>
    %cst_83 = arith.constant 5.000000e-01 : f32
    %211 = vector.broadcast %cst_83 : f32 to vector<5x128xf32>
    %212 = arith.mulf %211, %210 : vector<5x128xf32>
    %213 = arith.mulf %200, %212 : vector<5x128xf32>
    %214 = arith.truncf %213 : vector<5x128xf32> to vector<5x128xbf16>
    %cst_84 = arith.constant dense<0.000000e+00> : vector<5x128xf32>
    %215 = tpu.matmul %214, %26, %cst_84 {dimension_numbers = #tpu.dot_dimension_numbers<[1], [0], [0], [1], [0, 0, 1, 1], [], []>} : vector<5x128xbf16>, vector<128x128xbf16>, vector<5x128xf32> -> vector<5x128xf32>
    %216 = arith.addf %174, %215 : vector<5x128xf32>
    %217 = vector.broadcast %28 : vector<1x128xf32> to vector<5x128xf32>
    %218 = arith.addf %216, %217 : vector<5x128xf32>
    %c0_85 = arith.constant 0 : index
    %c0_86 = arith.constant 0 : index
    %c0_87 = arith.constant 0 : index
    %219 = vector.load %arg17[%c0_85, %c0_86, %c0_87] : memref<1x5x128xf32, #tpu.memory_space<vmem>>, vector<1x5x128xf32>
    %220 = vector.shape_cast %219 : vector<1x5x128xf32> to vector<5x128xf32>
    %221 = vector.shape_cast %218 : vector<5x128xf32> to vector<1x5x128xf32>
    tpu.vector_store %arg17[%c0_85, %c0_86, %c0_87], %221 {strides = array<i32>} : memref<1x5x128xf32, #tpu.memory_space<vmem>>, vector<1x5x128xf32>,
    return
  }
  func.func @transform_0(%arg0: i32, %arg1: i32) -> (i32, i32, i32) {
    %c0_i32 = arith.constant 0 : i32
    %c0_i32_0 = arith.constant 0 : i32
    %c0_i32_1 = arith.constant 0 : i32
    return %arg0, %c0_i32, %c0_i32_0 : i32, i32, i32
  }
  func.func @transform_1(%arg0: i32, %arg1: i32) -> (i32, i32) {
    %c0_i32 = arith.constant 0 : i32
    %c0_i32_0 = arith.constant 0 : i32
    %c0_i32_1 = arith.constant 0 : i32
    return %c0_i32, %c0_i32_0 : i32, i32
  }
  func.func @transform_2(%arg0: i32, %arg1: i32) -> (i32, i32) {
    %c0_i32 = arith.constant 0 : i32
    %c0_i32_0 = arith.constant 0 : i32
    %c0_i32_1 = arith.constant 0 : i32
    return %c0_i32, %c0_i32_0 : i32, i32
  }
  func.func @transform_3(%arg0: i32, %arg1: i32) -> (i32, i32, i32) {
    %c0_i32 = arith.constant 0 : i32
    %c0_i32_0 = arith.constant 0 : i32
    %c0_i32_1 = arith.constant 0 : i32
    return %arg1, %c0_i32, %c0_i32_0 : i32, i32, i32
  }
  func.func @transform_4(%arg0: i32, %arg1: i32) -> (i32, i32, i32) {
    %c0_i32 = arith.constant 0 : i32
    %c0_i32_0 = arith.constant 0 : i32
    %c0_i32_1 = arith.constant 0 : i32
    return %arg1, %c0_i32, %c0_i32_0 : i32, i32, i32
  }
  func.func @transform_5(%arg0: i32, %arg1: i32) -> (i32, i32, i32) {
    %c0_i32 = arith.constant 0 : i32
    %c0_i32_0 = arith.constant 0 : i32
    %c0_i32_1 = arith.constant 0 : i32
    return %arg1, %c0_i32, %c0_i32_0 : i32, i32, i32
  }
  func.func @transform_6(%arg0: i32, %arg1: i32) -> (i32, i32, i32) {
    %c0_i32 = arith.constant 0 : i32
    %c0_i32_0 = arith.constant 0 : i32
    %c0_i32_1 = arith.constant 0 : i32
    return %arg1, %c0_i32, %c0_i32_0 : i32, i32, i32
  }
  func.func @transform_7(%arg0: i32, %arg1: i32) -> (i32, i32, i32) {
    %c0_i32 = arith.constant 0 : i32
    %c0_i32_0 = arith.constant 0 : i32
    %c0_i32_1 = arith.constant 0 : i32
    return %arg1, %c0_i32, %c0_i32_0 : i32, i32, i32
  }
  func.func @transform_8(%arg0: i32, %arg1: i32) -> (i32, i32, i32) {
    %c0_i32 = arith.constant 0 : i32
    %c0_i32_0 = arith.constant 0 : i32
    %c0_i32_1 = arith.constant 0 : i32
    return %arg1, %c0_i32, %c0_i32_0 : i32, i32, i32
  }
  func.func @transform_9(%arg0: i32, %arg1: i32) -> (i32, i32, i32) {
    %c0_i32 = arith.constant 0 : i32
    %c0_i32_0 = arith.constant 0 : i32
    %c0_i32_1 = arith.constant 0 : i32
    return %arg1, %c0_i32, %c0_i32_0 : i32, i32, i32
  }
  func.func @transform_10(%arg0: i32, %arg1: i32) -> (i32, i32, i32) {
    %c0_i32 = arith.constant 0 : i32
    %c0_i32_0 = arith.constant 0 : i32
    %c0_i32_1 = arith.constant 0 : i32
    return %arg1, %c0_i32, %c0_i32_0 : i32, i32, i32
  }
  func.func @transform_11(%arg0: i32, %arg1: i32) -> (i32, i32, i32) {
    %c0_i32 = arith.constant 0 : i32
    %c0_i32_0 = arith.constant 0 : i32
    %c0_i32_1 = arith.constant 0 : i32
    return %arg1, %c0_i32, %c0_i32_0 : i32, i32, i32
  }
  func.func @transform_12(%arg0: i32, %arg1: i32) -> (i32, i32, i32) {
    %c0_i32 = arith.constant 0 : i32
    %c0_i32_0 = arith.constant 0 : i32
    %c0_i32_1 = arith.constant 0 : i32
    return %arg1, %c0_i32, %c0_i32_0 : i32, i32, i32
  }
  func.func @transform_13(%arg0: i32, %arg1: i32) -> (i32, i32, i32) {
    %c0_i32 = arith.constant 0 : i32
    %c0_i32_0 = arith.constant 0 : i32
    %c0_i32_1 = arith.constant 0 : i32
    return %arg1, %c0_i32, %c0_i32_0 : i32, i32, i32
  }
  func.func @transform_14(%arg0: i32, %arg1: i32) -> (i32, i32, i32) {
    %c0_i32 = arith.constant 0 : i32
    %c0_i32_0 = arith.constant 0 : i32
    %c0_i32_1 = arith.constant 0 : i32
    return %arg1, %c0_i32, %c0_i32_0 : i32, i32, i32
  }
  func.func @transform_15(%arg0: i32, %arg1: i32) -> (i32, i32, i32) {
    %c0_i32 = arith.constant 0 : i32
    %c0_i32_0 = arith.constant 0 : i32
    %c0_i32_1 = arith.constant 0 : i32
    return %arg0, %c0_i32, %c0_i32_0 : i32, i32, i32
  }
}

module attributes {stable_mosaic.version = 11 : i64} {
  func.func @_head_kernel(%arg0: i32, %arg1: memref<1x5x128xf32, #tpu.memory_space<vmem>>, %arg2: memref<4x768xbf16, #tpu.memory_space<vmem>>, %arg3: memref<768x128xbf16, #tpu.memory_space<vmem>>, %arg4: memref<1x128xf32, #tpu.memory_space<vmem>>, %arg5: memref<1x128xf32, #tpu.memory_space<vmem>>, %arg6: memref<1x128xf32, #tpu.memory_space<vmem>>, %arg7: memref<1x128xf32, #tpu.memory_space<vmem>>, %arg8: memref<1x128xf32, #tpu.memory_space<vmem>>, %arg9: memref<128x384xbf16, #tpu.memory_space<vmem>>, %arg10: memref<1x384xf32, #tpu.memory_space<vmem>>, %arg11: memref<128x128xbf16, #tpu.memory_space<vmem>>, %arg12: memref<1x128xf32, #tpu.memory_space<vmem>>, %arg13: memref<1x128xf32, #tpu.memory_space<vmem>>, %arg14: memref<1x128xf32, #tpu.memory_space<vmem>>, %arg15: memref<128x128xbf16, #tpu.memory_space<vmem>>, %arg16: memref<1x128xf32, #tpu.memory_space<vmem>>, %arg17: memref<128x128xbf16, #tpu.memory_space<vmem>>, %arg18: memref<1x128xf32, #tpu.memory_space<vmem>>, %arg19: memref<1x128xf32, #tpu.memory_space<vmem>>, %arg20: memref<1x128xf32, #tpu.memory_space<vmem>>, %arg21: memref<4x128xf32, #tpu.memory_space<vmem>>, %arg22: memref<4x1xf32, #tpu.memory_space<vmem>>, %arg23: memref<4x1xf32, #tpu.memory_space<vmem>>, %arg24: memref<1x9x128xf32, #tpu.memory_space<vmem>>, %arg25: memref<1x4x128xf32, #tpu.memory_space<vmem>>) attributes {dimension_semantics = [#tpu.dimension_semantics<parallel>], iteration_bounds = array<i64: 2>, scalar_prefetch = 0 : i64, scratch_operands = 0 : i64, tpu.core_type = #tpu.core_type<tc>, window_params = [{transform_indices = @transform_0, window_bounds = array<i64: 1, 5, 128>}, {pipeline_mode = #tpu.pipeline_mode<synchronous>, transform_indices = @transform_1, window_bounds = array<i64: 4, 768>}, {pipeline_mode = #tpu.pipeline_mode<synchronous>, transform_indices = @transform_2, window_bounds = array<i64: 768, 128>}, {pipeline_mode = #tpu.pipeline_mode<synchronous>, transform_indices = @transform_3, window_bounds = array<i64: 1, 128>}, {pipeline_mode = #tpu.pipeline_mode<synchronous>, transform_indices = @transform_4, window_bounds = array<i64: 1, 128>}, {pipeline_mode = #tpu.pipeline_mode<synchronous>, transform_indices = @transform_5, window_bounds = array<i64: 1, 128>}, {pipeline_mode = #tpu.pipeline_mode<synchronous>, transform_indices = @transform_6, window_bounds = array<i64: 1, 128>}, {pipeline_mode = #tpu.pipeline_mode<synchronous>, transform_indices = @transform_7, window_bounds = array<i64: 1, 128>}, {pipeline_mode = #tpu.pipeline_mode<synchronous>, transform_indices = @transform_8, window_bounds = array<i64: 128, 384>}, {pipeline_mode = #tpu.pipeline_mode<synchronous>, transform_indices = @transform_9, window_bounds = array<i64: 1, 384>}, {pipeline_mode = #tpu.pipeline_mode<synchronous>, transform_indices = @transform_10, window_bounds = array<i64: 128, 128>}, {pipeline_mode = #tpu.pipeline_mode<synchronous>, transform_indices = @transform_11, window_bounds = array<i64: 1, 128>}, {pipeline_mode = #tpu.pipeline_mode<synchronous>, transform_indices = @transform_12, window_bounds = array<i64: 1, 128>}, {pipeline_mode = #tpu.pipeline_mode<synchronous>, transform_indices = @transform_13, window_bounds = array<i64: 1, 128>}, {pipeline_mode = #tpu.pipeline_mode<synchronous>, transform_indices = @transform_14, window_bounds = array<i64: 128, 128>}, {pipeline_mode = #tpu.pipeline_mode<synchronous>, transform_indices = @transform_15, window_bounds = array<i64: 1, 128>}, {pipeline_mode = #tpu.pipeline_mode<synchronous>, transform_indices = @transform_16, window_bounds = array<i64: 128, 128>}, {pipeline_mode = #tpu.pipeline_mode<synchronous>, transform_indices = @transform_17, window_bounds = array<i64: 1, 128>}, {pipeline_mode = #tpu.pipeline_mode<synchronous>, transform_indices = @transform_18, window_bounds = array<i64: 1, 128>}, {pipeline_mode = #tpu.pipeline_mode<synchronous>, transform_indices = @transform_19, window_bounds = array<i64: 1, 128>}, {pipeline_mode = #tpu.pipeline_mode<synchronous>, transform_indices = @transform_20, window_bounds = array<i64: 4, 128>}, {pipeline_mode = #tpu.pipeline_mode<synchronous>, transform_indices = @transform_21, window_bounds = array<i64: 4, 1>}, {pipeline_mode = #tpu.pipeline_mode<synchronous>, transform_indices = @transform_22, window_bounds = array<i64: 4, 1>}, {transform_indices = @transform_23, window_bounds = array<i64: 1, 9, 128>}, {transform_indices = @transform_24, window_bounds = array<i64: 1, 4, 128>}]} {
    %c0 = arith.constant 0 : index
    %c0_0 = arith.constant 0 : index
    %0 = vector.load %arg2[%c0, %c0_0] : memref<4x768xbf16, #tpu.memory_space<vmem>>, vector<4x768xbf16>
    %c0_1 = arith.constant 0 : index
    %c0_2 = arith.constant 0 : index
    %1 = vector.load %arg3[%c0_1, %c0_2] : memref<768x128xbf16, #tpu.memory_space<vmem>>, vector<768x128xbf16>
    %cst = arith.constant dense<0.000000e+00> : vector<4x128xf32>
    %2 = tpu.matmul %0, %1, %cst {dimension_numbers = #tpu.dot_dimension_numbers<[1], [0], [0], [1], [0, 0, 1, 1], [], []>} : vector<4x768xbf16>, vector<768x128xbf16>, vector<4x128xf32> -> vector<4x128xf32>
    %c0_3 = arith.constant 0 : index
    %c0_4 = arith.constant 0 : index
    %3 = vector.load %arg4[%c0_3, %c0_4] : memref<1x128xf32, #tpu.memory_space<vmem>>, vector<1x128xf32>
    %4 = vector.broadcast %3 : vector<1x128xf32> to vector<4x128xf32>
    %5 = arith.addf %2, %4 : vector<4x128xf32>
    %c0_5 = arith.constant 0 : index
    %c0_6 = arith.constant 0 : index
    %6 = vector.load %arg5[%c0_5, %c0_6] : memref<1x128xf32, #tpu.memory_space<vmem>>, vector<1x128xf32>
    %7 = vector.broadcast %6 : vector<1x128xf32> to vector<4x128xf32>
    %8 = arith.addf %5, %7 : vector<4x128xf32>
    %c0_7 = arith.constant 0 : index
    %c0_8 = arith.constant 0 : index
    %c0_9 = arith.constant 0 : index
    %9 = vector.load %arg1[%c0_7, %c0_8, %c0_9] : memref<1x5x128xf32, #tpu.memory_space<vmem>>, vector<1x5x128xf32>
    %10 = vector.shape_cast %9 : vector<1x5x128xf32> to vector<5x128xf32>
    %c0_10 = arith.constant 0 : index
    %c0_11 = arith.constant 0 : index
    %11 = vector.load %arg6[%c0_10, %c0_11] : memref<1x128xf32, #tpu.memory_space<vmem>>, vector<1x128xf32>
    %12 = vector.broadcast %11 : vector<1x128xf32> to vector<5x128xf32>
    %13 = arith.addf %10, %12 : vector<5x128xf32>
    %c0_12 = arith.constant 0 : index
    %c0_13 = arith.constant 0 : index
    %c0_14 = arith.constant 0 : index
    %14 = vector.load %arg24[%c0_12, %c0_13, %c0_14] : memref<1x9x128xf32, #tpu.memory_space<vmem>>, vector<1x4x128xf32>
    %15 = vector.shape_cast %14 : vector<1x4x128xf32> to vector<4x128xf32>
    %16 = vector.shape_cast %8 : vector<4x128xf32> to vector<1x4x128xf32>
    tpu.vector_store %arg24[%c0_12, %c0_13, %c0_14], %16 {strides = array<i32>} : memref<1x9x128xf32, #tpu.memory_space<vmem>>, vector<1x4x128xf32>,
    %c0_15 = arith.constant 0 : index
    %c4 = arith.constant 4 : index
    %c0_16 = arith.constant 0 : index
    %17 = vector.load %arg24[%c0_15, %c4, %c0_16] : memref<1x9x128xf32, #tpu.memory_space<vmem>>, vector<1x5x128xf32>
    %18 = vector.shape_cast %17 : vector<1x5x128xf32> to vector<5x128xf32>
    %19 = vector.shape_cast %13 : vector<5x128xf32> to vector<1x5x128xf32>
    tpu.vector_store %arg24[%c0_15, %c4, %c0_16], %19 {strides = array<i32>} : memref<1x9x128xf32, #tpu.memory_space<vmem>>, vector<1x5x128xf32>,
    %c0_17 = arith.constant 0 : index
    %c0_18 = arith.constant 0 : index
    %c0_19 = arith.constant 0 : index
    %20 = vector.load %arg24[%c0_17, %c0_18, %c0_19] : memref<1x9x128xf32, #tpu.memory_space<vmem>>, vector<1x9x128xf32>
    %21 = vector.shape_cast %20 : vector<1x9x128xf32> to vector<9x128xf32>
    %c0_20 = arith.constant 0 : index
    %c0_21 = arith.constant 0 : index
    %22 = vector.load %arg7[%c0_20, %c0_21] : memref<1x128xf32, #tpu.memory_space<vmem>>, vector<1x128xf32>
    %c0_22 = arith.constant 0 : index
    %c0_23 = arith.constant 0 : index
    %23 = vector.load %arg8[%c0_22, %c0_23] : memref<1x128xf32, #tpu.memory_space<vmem>>, vector<1x128xf32>
    %c0_24 = arith.constant 0 : index
    %c0_25 = arith.constant 0 : index
    %24 = vector.load %arg9[%c0_24, %c0_25] : memref<128x384xbf16, #tpu.memory_space<vmem>>, vector<128x384xbf16>
    %c0_26 = arith.constant 0 : index
    %c0_27 = arith.constant 0 : index
    %25 = vector.load %arg10[%c0_26, %c0_27] : memref<1x384xf32, #tpu.memory_space<vmem>>, vector<1x384xf32>
    %c0_28 = arith.constant 0 : index
    %c0_29 = arith.constant 0 : index
    %26 = vector.load %arg11[%c0_28, %c0_29] : memref<128x128xbf16, #tpu.memory_space<vmem>>, vector<128x128xbf16>
    %c0_30 = arith.constant 0 : index
    %c0_31 = arith.constant 0 : index
    %27 = vector.load %arg12[%c0_30, %c0_31] : memref<1x128xf32, #tpu.memory_space<vmem>>, vector<1x128xf32>
    %c0_32 = arith.constant 0 : index
    %c0_33 = arith.constant 0 : index
    %28 = vector.load %arg13[%c0_32, %c0_33] : memref<1x128xf32, #tpu.memory_space<vmem>>, vector<1x128xf32>
    %c0_34 = arith.constant 0 : index
    %c0_35 = arith.constant 0 : index
    %29 = vector.load %arg14[%c0_34, %c0_35] : memref<1x128xf32, #tpu.memory_space<vmem>>, vector<1x128xf32>
    %c0_36 = arith.constant 0 : index
    %c0_37 = arith.constant 0 : index
    %30 = vector.load %arg15[%c0_36, %c0_37] : memref<128x128xbf16, #tpu.memory_space<vmem>>, vector<128x128xbf16>
    %c0_38 = arith.constant 0 : index
    %c0_39 = arith.constant 0 : index
    %31 = vector.load %arg16[%c0_38, %c0_39] : memref<1x128xf32, #tpu.memory_space<vmem>>, vector<1x128xf32>
    %c0_40 = arith.constant 0 : index
    %c0_41 = arith.constant 0 : index
    %32 = vector.load %arg17[%c0_40, %c0_41] : memref<128x128xbf16, #tpu.memory_space<vmem>>, vector<128x128xbf16>
    %c0_42 = arith.constant 0 : index
    %c0_43 = arith.constant 0 : index
    %33 = vector.load %arg18[%c0_42, %c0_43] : memref<1x128xf32, #tpu.memory_space<vmem>>, vector<1x128xf32>
    %cst_44 = arith.constant dense<0.000000e+00> : vector<9xf32>
    %34 = vector.multi_reduction <add>, %21, %cst_44 [1] : vector<9x128xf32> to vector<9xf32>
    %35 = vector.shape_cast %34 : vector<9xf32> to vector<9x1xf32>
    %36 = arith.mulf %21, %21 : vector<9x128xf32>
    %cst_45 = arith.constant dense<0.000000e+00> : vector<9xf32>
    %37 = vector.multi_reduction <add>, %36, %cst_45 [1] : vector<9x128xf32> to vector<9xf32>
    %38 = vector.shape_cast %37 : vector<9xf32> to vector<9x1xf32>
    %cst_46 = arith.constant 3.125000e-02 : f32
    %39 = vector.broadcast %cst_46 : f32 to vector<9x1xf32>
    %40 = arith.mulf %35, %39 : vector<9x1xf32>
    %cst_47 = arith.constant 3.125000e-02 : f32
    %41 = vector.broadcast %cst_47 : f32 to vector<9x1xf32>
    %42 = arith.mulf %38, %41 : vector<9x1xf32>
    %43 = arith.mulf %40, %40 : vector<9x1xf32>
    %44 = arith.subf %42, %43 : vector<9x1xf32>
    %45 = vector.broadcast %40 : vector<9x1xf32> to vector<9x128xf32>
    %46 = arith.subf %21, %45 : vector<9x128xf32>
    %cst_48 = arith.constant 9.99999997E-7 : f32
    %47 = vector.broadcast %cst_48 : f32 to vector<9x1xf32>
    %48 = arith.addf %44, %47 : vector<9x1xf32>
    %49 = math.rsqrt %48 : vector<9x1xf32>
    %50 = vector.broadcast %49 : vector<9x1xf32> to vector<9x128xf32>
    %51 = arith.mulf %46, %50 : vector<9x128xf32>
    %52 = vector.broadcast %22 : vector<1x128xf32> to vector<9x128xf32>
    %53 = arith.mulf %51, %52 : vector<9x128xf32>
    %54 = vector.broadcast %23 : vector<1x128xf32> to vector<9x128xf32>
    %55 = arith.addf %53, %54 : vector<9x128xf32>
    %56 = arith.truncf %55 : vector<9x128xf32> to vector<9x128xbf16>
    %cst_49 = arith.constant dense<0.000000e+00> : vector<9x384xf32>
    %57 = tpu.matmul %56, %24, %cst_49 {dimension_numbers = #tpu.dot_dimension_numbers<[1], [0], [0], [1], [0, 0, 1, 1], [], []>} : vector<9x128xbf16>, vector<128x384xbf16>, vector<9x384xf32> -> vector<9x384xf32>
    %58 = vector.broadcast %25 : vector<1x384xf32> to vector<9x384xf32>
    %59 = arith.addf %57, %58 : vector<9x384xf32>
    %60 = vector.extract_strided_slice %59 {offsets = [0, 0], sizes = [9, 128], strides = [1, 1]} : vector<9x384xf32> to vector<9x128xf32>
    %61 = vector.extract_strided_slice %59 {offsets = [0, 128], sizes = [9, 128], strides = [1, 1]} : vector<9x384xf32> to vector<9x128xf32>
    %62 = vector.extract_strided_slice %59 {offsets = [0, 256], sizes = [9, 128], strides = [1, 1]} : vector<9x384xf32> to vector<9x128xf32>
    %63 = arith.truncf %61 : vector<9x128xf32> to vector<9x128xbf16>
    %64 = arith.truncf %62 : vector<9x128xf32> to vector<9x128xbf16>
    %65 = tpu.iota {dimensions = array<i32: 1>} : vector<1x128xi32>
    %cst_50 = arith.constant 0.000000e+00 : f32
    %66 = vector.broadcast %cst_50 : f32 to vector<9x128xf32>
    %c0_i32 = arith.constant 0 : i32
    %67 = vector.broadcast %c0_i32 : i32 to vector<1x128xi32>
    %68 = arith.cmpi sge, %65, %67 : vector<1x128xi32>
    %c8_i32 = arith.constant 8 : i32
    %69 = vector.broadcast %c8_i32 : i32 to vector<1x128xi32>
    %70 = arith.cmpi slt, %65, %69 : vector<1x128xi32>
    %71 = arith.andi %68, %70 : vector<1x128xi1>
    %cst_51 = arith.constant 1.000000e+00 : f32
    %cst_52 = arith.constant 0.000000e+00 : f32
    %72 = vector.broadcast %cst_51 : f32 to vector<1x128xf32>
    %73 = vector.broadcast %cst_52 : f32 to vector<1x128xf32>
    %74 = arith.select %71, %72, %73 : vector<1x128xi1>, vector<1x128xf32>
    %75 = vector.broadcast %74 : vector<1x128xf32> to vector<9x128xf32>
    %76 = arith.mulf %60, %75 : vector<9x128xf32>
    %77 = arith.truncf %76 : vector<9x128xf32> to vector<9x128xbf16>
    %cst_53 = arith.constant dense<0.000000e+00> : vector<9x9xf32>
    %78 = tpu.matmul %77, %63, %cst_53 {dimension_numbers = #tpu.dot_dimension_numbers<[1], [1], [0], [0], [0, 0, 1, 0], [], []>} : vector<9x128xbf16>, vector<9x128xbf16>, vector<9x9xf32> -> vector<9x9xf32>
    %cst_54 = arith.constant dense<0xFF800000> : vector<9xf32>
    %79 = vector.multi_reduction <maximumf>, %78, %cst_54 [1] : vector<9x9xf32> to vector<9xf32>
    %80 = vector.shape_cast %79 : vector<9xf32> to vector<9x1xf32>
    %81 = vector.broadcast %80 : vector<9x1xf32> to vector<9x9xf32>
    %82 = arith.subf %78, %81 : vector<9x9xf32>
    %83 = math.exp %82 : vector<9x9xf32>
    %cst_55 = arith.constant dense<0.000000e+00> : vector<9xf32>
    %84 = vector.multi_reduction <add>, %83, %cst_55 [1] : vector<9x9xf32> to vector<9xf32>
    %85 = vector.shape_cast %84 : vector<9xf32> to vector<9x1xf32>
    %86 = tpu.reciprocal %85 {approx = true} : vector<9x1xf32> -> vector<9x1xf32>
    %87 = vector.broadcast %86 : vector<9x1xf32> to vector<9x9xf32>
    %88 = arith.mulf %83, %87 : vector<9x9xf32>
    %89 = arith.truncf %88 : vector<9x9xf32> to vector<9x9xbf16>
    %cst_56 = arith.constant dense<0.000000e+00> : vector<9x128xf32>
    %90 = tpu.matmul %89, %64, %cst_56 {dimension_numbers = #tpu.dot_dimension_numbers<[1], [0], [0], [1], [0, 0, 1, 1], [], []>} : vector<9x9xbf16>, vector<9x128xbf16>, vector<9x128xf32> -> vector<9x128xf32>
    %91 = vector.broadcast %74 : vector<1x128xf32> to vector<9x128xf32>
    %92 = arith.mulf %91, %90 : vector<9x128xf32>
    %93 = arith.addf %66, %92 : vector<9x128xf32>
    %c8_i32_57 = arith.constant 8 : i32
    %94 = vector.broadcast %c8_i32_57 : i32 to vector<1x128xi32>
    %95 = arith.cmpi sge, %65, %94 : vector<1x128xi32>
    %c16_i32 = arith.constant 16 : i32
    %96 = vector.broadcast %c16_i32 : i32 to vector<1x128xi32>
    %97 = arith.cmpi slt, %65, %96 : vector<1x128xi32>
    %98 = arith.andi %95, %97 : vector<1x128xi1>
    %cst_58 = arith.constant 1.000000e+00 : f32
    %cst_59 = arith.constant 0.000000e+00 : f32
    %99 = vector.broadcast %cst_58 : f32 to vector<1x128xf32>
    %100 = vector.broadcast %cst_59 : f32 to vector<1x128xf32>
    %101 = arith.select %98, %99, %100 : vector<1x128xi1>, vector<1x128xf32>
    %102 = vector.broadcast %101 : vector<1x128xf32> to vector<9x128xf32>
    %103 = arith.mulf %60, %102 : vector<9x128xf32>
    %104 = arith.truncf %103 : vector<9x128xf32> to vector<9x128xbf16>
    %cst_60 = arith.constant dense<0.000000e+00> : vector<9x9xf32>
    %105 = tpu.matmul %104, %63, %cst_60 {dimension_numbers = #tpu.dot_dimension_numbers<[1], [1], [0], [0], [0, 0, 1, 0], [], []>} : vector<9x128xbf16>, vector<9x128xbf16>, vector<9x9xf32> -> vector<9x9xf32>
    %cst_61 = arith.constant dense<0xFF800000> : vector<9xf32>
    %106 = vector.multi_reduction <maximumf>, %105, %cst_61 [1] : vector<9x9xf32> to vector<9xf32>
    %107 = vector.shape_cast %106 : vector<9xf32> to vector<9x1xf32>
    %108 = vector.broadcast %107 : vector<9x1xf32> to vector<9x9xf32>
    %109 = arith.subf %105, %108 : vector<9x9xf32>
    %110 = math.exp %109 : vector<9x9xf32>
    %cst_62 = arith.constant dense<0.000000e+00> : vector<9xf32>
    %111 = vector.multi_reduction <add>, %110, %cst_62 [1] : vector<9x9xf32> to vector<9xf32>
    %112 = vector.shape_cast %111 : vector<9xf32> to vector<9x1xf32>
    %113 = tpu.reciprocal %112 {approx = true} : vector<9x1xf32> -> vector<9x1xf32>
    %114 = vector.broadcast %113 : vector<9x1xf32> to vector<9x9xf32>
    %115 = arith.mulf %110, %114 : vector<9x9xf32>
    %116 = arith.truncf %115 : vector<9x9xf32> to vector<9x9xbf16>
    %cst_63 = arith.constant dense<0.000000e+00> : vector<9x128xf32>
    %117 = tpu.matmul %116, %64, %cst_63 {dimension_numbers = #tpu.dot_dimension_numbers<[1], [0], [0], [1], [0, 0, 1, 1], [], []>} : vector<9x9xbf16>, vector<9x128xbf16>, vector<9x128xf32> -> vector<9x128xf32>
    %118 = vector.broadcast %101 : vector<1x128xf32> to vector<9x128xf32>
    %119 = arith.mulf %118, %117 : vector<9x128xf32>
    %120 = arith.addf %93, %119 : vector<9x128xf32>
    %c16_i32_64 = arith.constant 16 : i32
    %121 = vector.broadcast %c16_i32_64 : i32 to vector<1x128xi32>
    %122 = arith.cmpi sge, %65, %121 : vector<1x128xi32>
    %c24_i32 = arith.constant 24 : i32
    %123 = vector.broadcast %c24_i32 : i32 to vector<1x128xi32>
    %124 = arith.cmpi slt, %65, %123 : vector<1x128xi32>
    %125 = arith.andi %122, %124 : vector<1x128xi1>
    %cst_65 = arith.constant 1.000000e+00 : f32
    %cst_66 = arith.constant 0.000000e+00 : f32
    %126 = vector.broadcast %cst_65 : f32 to vector<1x128xf32>
    %127 = vector.broadcast %cst_66 : f32 to vector<1x128xf32>
    %128 = arith.select %125, %126, %127 : vector<1x128xi1>, vector<1x128xf32>
    %129 = vector.broadcast %128 : vector<1x128xf32> to vector<9x128xf32>
    %130 = arith.mulf %60, %129 : vector<9x128xf32>
    %131 = arith.truncf %130 : vector<9x128xf32> to vector<9x128xbf16>
    %cst_67 = arith.constant dense<0.000000e+00> : vector<9x9xf32>
    %132 = tpu.matmul %131, %63, %cst_67 {dimension_numbers = #tpu.dot_dimension_numbers<[1], [1], [0], [0], [0, 0, 1, 0], [], []>} : vector<9x128xbf16>, vector<9x128xbf16>, vector<9x9xf32> -> vector<9x9xf32>
    %cst_68 = arith.constant dense<0xFF800000> : vector<9xf32>
    %133 = vector.multi_reduction <maximumf>, %132, %cst_68 [1] : vector<9x9xf32> to vector<9xf32>
    %134 = vector.shape_cast %133 : vector<9xf32> to vector<9x1xf32>
    %135 = vector.broadcast %134 : vector<9x1xf32> to vector<9x9xf32>
    %136 = arith.subf %132, %135 : vector<9x9xf32>
    %137 = math.exp %136 : vector<9x9xf32>
    %cst_69 = arith.constant dense<0.000000e+00> : vector<9xf32>
    %138 = vector.multi_reduction <add>, %137, %cst_69 [1] : vector<9x9xf32> to vector<9xf32>
    %139 = vector.shape_cast %138 : vector<9xf32> to vector<9x1xf32>
    %140 = tpu.reciprocal %139 {approx = true} : vector<9x1xf32> -> vector<9x1xf32>
    %141 = vector.broadcast %140 : vector<9x1xf32> to vector<9x9xf32>
    %142 = arith.mulf %137, %141 : vector<9x9xf32>
    %143 = arith.truncf %142 : vector<9x9xf32> to vector<9x9xbf16>
    %cst_70 = arith.constant dense<0.000000e+00> : vector<9x128xf32>
    %144 = tpu.matmul %143, %64, %cst_70 {dimension_numbers = #tpu.dot_dimension_numbers<[1], [0], [0], [1], [0, 0, 1, 1], [], []>} : vector<9x9xbf16>, vector<9x128xbf16>, vector<9x128xf32> -> vector<9x128xf32>
    %145 = vector.broadcast %128 : vector<1x128xf32> to vector<9x128xf32>
    %146 = arith.mulf %145, %144 : vector<9x128xf32>
    %147 = arith.addf %120, %146 : vector<9x128xf32>
    %c24_i32_71 = arith.constant 24 : i32
    %148 = vector.broadcast %c24_i32_71 : i32 to vector<1x128xi32>
    %149 = arith.cmpi sge, %65, %148 : vector<1x128xi32>
    %c32_i32 = arith.constant 32 : i32
    %150 = vector.broadcast %c32_i32 : i32 to vector<1x128xi32>
    %151 = arith.cmpi slt, %65, %150 : vector<1x128xi32>
    %152 = arith.andi %149, %151 : vector<1x128xi1>
    %cst_72 = arith.constant 1.000000e+00 : f32
    %cst_73 = arith.constant 0.000000e+00 : f32
    %153 = vector.broadcast %cst_72 : f32 to vector<1x128xf32>
    %154 = vector.broadcast %cst_73 : f32 to vector<1x128xf32>
    %155 = arith.select %152, %153, %154 : vector<1x128xi1>, vector<1x128xf32>
    %156 = vector.broadcast %155 : vector<1x128xf32> to vector<9x128xf32>
    %157 = arith.mulf %60, %156 : vector<9x128xf32>
    %158 = arith.truncf %157 : vector<9x128xf32> to vector<9x128xbf16>
    %cst_74 = arith.constant dense<0.000000e+00> : vector<9x9xf32>
    %159 = tpu.matmul %158, %63, %cst_74 {dimension_numbers = #tpu.dot_dimension_numbers<[1], [1], [0], [0], [0, 0, 1, 0], [], []>} : vector<9x128xbf16>, vector<9x128xbf16>, vector<9x9xf32> -> vector<9x9xf32>
    %cst_75 = arith.constant dense<0xFF800000> : vector<9xf32>
    %160 = vector.multi_reduction <maximumf>, %159, %cst_75 [1] : vector<9x9xf32> to vector<9xf32>
    %161 = vector.shape_cast %160 : vector<9xf32> to vector<9x1xf32>
    %162 = vector.broadcast %161 : vector<9x1xf32> to vector<9x9xf32>
    %163 = arith.subf %159, %162 : vector<9x9xf32>
    %164 = math.exp %163 : vector<9x9xf32>
    %cst_76 = arith.constant dense<0.000000e+00> : vector<9xf32>
    %165 = vector.multi_reduction <add>, %164, %cst_76 [1] : vector<9x9xf32> to vector<9xf32>
    %166 = vector.shape_cast %165 : vector<9xf32> to vector<9x1xf32>
    %167 = tpu.reciprocal %166 {approx = true} : vector<9x1xf32> -> vector<9x1xf32>
    %168 = vector.broadcast %167 : vector<9x1xf32> to vector<9x9xf32>
    %169 = arith.mulf %164, %168 : vector<9x9xf32>
    %170 = arith.truncf %169 : vector<9x9xf32> to vector<9x9xbf16>
    %cst_77 = arith.constant dense<0.000000e+00> : vector<9x128xf32>
    %171 = tpu.matmul %170, %64, %cst_77 {dimension_numbers = #tpu.dot_dimension_numbers<[1], [0], [0], [1], [0, 0, 1, 1], [], []>} : vector<9x9xbf16>, vector<9x128xbf16>, vector<9x128xf32> -> vector<9x128xf32>
    %172 = vector.broadcast %155 : vector<1x128xf32> to vector<9x128xf32>
    %173 = arith.mulf %172, %171 : vector<9x128xf32>
    %174 = arith.addf %147, %173 : vector<9x128xf32>
    %175 = arith.truncf %174 : vector<9x128xf32> to vector<9x128xbf16>
    %cst_78 = arith.constant dense<0.000000e+00> : vector<9x128xf32>
    %176 = tpu.matmul %175, %26, %cst_78 {dimension_numbers = #tpu.dot_dimension_numbers<[1], [0], [0], [1], [0, 0, 1, 1], [], []>} : vector<9x128xbf16>, vector<128x128xbf16>, vector<9x128xf32> -> vector<9x128xf32>
    %177 = arith.addf %21, %176 : vector<9x128xf32>
    %178 = vector.broadcast %27 : vector<1x128xf32> to vector<9x128xf32>
    %179 = arith.addf %177, %178 : vector<9x128xf32>
    %cst_79 = arith.constant dense<0.000000e+00> : vector<9xf32>
    %180 = vector.multi_reduction <add>, %179, %cst_79 [1] : vector<9x128xf32> to vector<9xf32>
    %181 = vector.shape_cast %180 : vector<9xf32> to vector<9x1xf32>
    %182 = arith.mulf %179, %179 : vector<9x128xf32>
    %cst_80 = arith.constant dense<0.000000e+00> : vector<9xf32>
    %183 = vector.multi_reduction <add>, %182, %cst_80 [1] : vector<9x128xf32> to vector<9xf32>
    %184 = vector.shape_cast %183 : vector<9xf32> to vector<9x1xf32>
    %cst_81 = arith.constant 3.125000e-02 : f32
    %185 = vector.broadcast %cst_81 : f32 to vector<9x1xf32>
    %186 = arith.mulf %181, %185 : vector<9x1xf32>
    %cst_82 = arith.constant 3.125000e-02 : f32
    %187 = vector.broadcast %cst_82 : f32 to vector<9x1xf32>
    %188 = arith.mulf %184, %187 : vector<9x1xf32>
    %189 = arith.mulf %186, %186 : vector<9x1xf32>
    %190 = arith.subf %188, %189 : vector<9x1xf32>
    %191 = vector.broadcast %186 : vector<9x1xf32> to vector<9x128xf32>
    %192 = arith.subf %179, %191 : vector<9x128xf32>
    %cst_83 = arith.constant 9.99999997E-7 : f32
    %193 = vector.broadcast %cst_83 : f32 to vector<9x1xf32>
    %194 = arith.addf %190, %193 : vector<9x1xf32>
    %195 = math.rsqrt %194 : vector<9x1xf32>
    %196 = vector.broadcast %195 : vector<9x1xf32> to vector<9x128xf32>
    %197 = arith.mulf %192, %196 : vector<9x128xf32>
    %198 = vector.broadcast %28 : vector<1x128xf32> to vector<9x128xf32>
    %199 = arith.mulf %197, %198 : vector<9x128xf32>
    %200 = vector.broadcast %29 : vector<1x128xf32> to vector<9x128xf32>
    %201 = arith.addf %199, %200 : vector<9x128xf32>
    %202 = arith.truncf %201 : vector<9x128xf32> to vector<9x128xbf16>
    %cst_84 = arith.constant dense<0.000000e+00> : vector<9x128xf32>
    %203 = tpu.matmul %202, %30, %cst_84 {dimension_numbers = #tpu.dot_dimension_numbers<[1], [0], [0], [1], [0, 0, 1, 1], [], []>} : vector<9x128xbf16>, vector<128x128xbf16>, vector<9x128xf32> -> vector<9x128xf32>
    %204 = vector.broadcast %31 : vector<1x128xf32> to vector<9x128xf32>
    %205 = arith.addf %203, %204 : vector<9x128xf32>
    %206 = arith.mulf %205, %205 : vector<9x128xf32>
    %207 = arith.mulf %205, %206 : vector<9x128xf32>
    %cst_85 = arith.constant 4.471500e-02 : f32
    %208 = vector.broadcast %cst_85 : f32 to vector<9x128xf32>
    %209 = arith.mulf %208, %207 : vector<9x128xf32>
    %210 = arith.addf %205, %209 : vector<9x128xf32>
    %cst_86 = arith.constant 0.797884583 : f32
    %211 = vector.broadcast %cst_86 : f32 to vector<9x128xf32>
    %212 = arith.mulf %211, %210 : vector<9x128xf32>
    %213 = math.tanh %212 : vector<9x128xf32>
    %cst_87 = arith.constant 1.000000e+00 : f32
    %214 = vector.broadcast %cst_87 : f32 to vector<9x128xf32>
    %215 = arith.addf %214, %213 : vector<9x128xf32>
    %cst_88 = arith.constant 5.000000e-01 : f32
    %216 = vector.broadcast %cst_88 : f32 to vector<9x128xf32>
    %217 = arith.mulf %216, %215 : vector<9x128xf32>
    %218 = arith.mulf %205, %217 : vector<9x128xf32>
    %219 = arith.truncf %218 : vector<9x128xf32> to vector<9x128xbf16>
    %cst_89 = arith.constant dense<0.000000e+00> : vector<9x128xf32>
    %220 = tpu.matmul %219, %32, %cst_89 {dimension_numbers = #tpu.dot_dimension_numbers<[1], [0], [0], [1], [0, 0, 1, 1], [], []>} : vector<9x128xbf16>, vector<128x128xbf16>, vector<9x128xf32> -> vector<9x128xf32>
    %221 = arith.addf %179, %220 : vector<9x128xf32>
    %222 = vector.broadcast %33 : vector<1x128xf32> to vector<9x128xf32>
    %223 = arith.addf %221, %222 : vector<9x128xf32>
    %c0_90 = arith.constant 0 : index
    %c0_91 = arith.constant 0 : index
    %224 = vector.load %arg19[%c0_90, %c0_91] : memref<1x128xf32, #tpu.memory_space<vmem>>, vector<1x128xf32>
    %c0_92 = arith.constant 0 : index
    %c0_93 = arith.constant 0 : index
    %225 = vector.load %arg20[%c0_92, %c0_93] : memref<1x128xf32, #tpu.memory_space<vmem>>, vector<1x128xf32>
    %cst_94 = arith.constant dense<0.000000e+00> : vector<9xf32>
    %226 = vector.multi_reduction <add>, %223, %cst_94 [1] : vector<9x128xf32> to vector<9xf32>
    %227 = vector.shape_cast %226 : vector<9xf32> to vector<9x1xf32>
    %228 = arith.mulf %223, %223 : vector<9x128xf32>
    %cst_95 = arith.constant dense<0.000000e+00> : vector<9xf32>
    %229 = vector.multi_reduction <add>, %228, %cst_95 [1] : vector<9x128xf32> to vector<9xf32>
    %230 = vector.shape_cast %229 : vector<9xf32> to vector<9x1xf32>
    %cst_96 = arith.constant 3.125000e-02 : f32
    %231 = vector.broadcast %cst_96 : f32 to vector<9x1xf32>
    %232 = arith.mulf %227, %231 : vector<9x1xf32>
    %cst_97 = arith.constant 3.125000e-02 : f32
    %233 = vector.broadcast %cst_97 : f32 to vector<9x1xf32>
    %234 = arith.mulf %230, %233 : vector<9x1xf32>
    %235 = arith.mulf %232, %232 : vector<9x1xf32>
    %236 = arith.subf %234, %235 : vector<9x1xf32>
    %237 = vector.broadcast %232 : vector<9x1xf32> to vector<9x128xf32>
    %238 = arith.subf %223, %237 : vector<9x128xf32>
    %cst_98 = arith.constant 9.99999997E-7 : f32
    %239 = vector.broadcast %cst_98 : f32 to vector<9x1xf32>
    %240 = arith.addf %236, %239 : vector<9x1xf32>
    %241 = math.rsqrt %240 : vector<9x1xf32>
    %242 = vector.broadcast %241 : vector<9x1xf32> to vector<9x128xf32>
    %243 = arith.mulf %238, %242 : vector<9x128xf32>
    %244 = vector.broadcast %224 : vector<1x128xf32> to vector<9x128xf32>
    %245 = arith.mulf %243, %244 : vector<9x128xf32>
    %246 = vector.broadcast %225 : vector<1x128xf32> to vector<9x128xf32>
    %247 = arith.addf %245, %246 : vector<9x128xf32>
    %c0_99 = arith.constant 0 : index
    %c0_100 = arith.constant 0 : index
    %c0_101 = arith.constant 0 : index
    %248 = vector.load %arg24[%c0_99, %c0_100, %c0_101] : memref<1x9x128xf32, #tpu.memory_space<vmem>>, vector<1x9x128xf32>
    %249 = vector.shape_cast %248 : vector<1x9x128xf32> to vector<9x128xf32>
    %250 = vector.shape_cast %247 : vector<9x128xf32> to vector<1x9x128xf32>
    tpu.vector_store %arg24[%c0_99, %c0_100, %c0_101], %250 {strides = array<i32>} : memref<1x9x128xf32, #tpu.memory_space<vmem>>, vector<1x9x128xf32>,
    %251 = vector.extract_strided_slice %247 {offsets = [0, 0], sizes = [4, 128], strides = [1, 1]} : vector<9x128xf32> to vector<4x128xf32>
    %c0_102 = arith.constant 0 : index
    %c0_103 = arith.constant 0 : index
    %252 = vector.load %arg21[%c0_102, %c0_103] : memref<4x128xf32, #tpu.memory_space<vmem>>, vector<4x128xf32>
    %253 = arith.mulf %251, %252 : vector<4x128xf32>
    %cst_104 = arith.constant dense<0.000000e+00> : vector<4xf32>
    %254 = vector.multi_reduction <add>, %253, %cst_104 [1] : vector<4x128xf32> to vector<4xf32>
    %255 = vector.shape_cast %254 : vector<4xf32> to vector<4x1xf32>
    %c0_105 = arith.constant 0 : index
    %c0_106 = arith.constant 0 : index
    %256 = vector.load %arg22[%c0_105, %c0_106] : memref<4x1xf32, #tpu.memory_space<vmem>>, vector<4x1xf32>
    %257 = arith.mulf %255, %256 : vector<4x1xf32>
    %c0_107 = arith.constant 0 : index
    %c0_108 = arith.constant 0 : index
    %258 = vector.load %arg23[%c0_107, %c0_108] : memref<4x1xf32, #tpu.memory_space<vmem>>, vector<4x1xf32>
    %259 = arith.addf %257, %258 : vector<4x1xf32>
    %260 = vector.shape_cast %259 : vector<4x1xf32> to vector<4x1xf32>
    %261 = vector.broadcast %260 : vector<4x1xf32> to vector<4x128xf32>
    %c0_109 = arith.constant 0 : index
    %c0_110 = arith.constant 0 : index
    %c0_111 = arith.constant 0 : index
    %262 = vector.load %arg25[%c0_109, %c0_110, %c0_111] : memref<1x4x128xf32, #tpu.memory_space<vmem>>, vector<1x4x128xf32>
    %263 = vector.shape_cast %262 : vector<1x4x128xf32> to vector<4x128xf32>
    %264 = vector.shape_cast %261 : vector<4x128xf32> to vector<1x4x128xf32>
    tpu.vector_store %arg25[%c0_109, %c0_110, %c0_111], %264 {strides = array<i32>} : memref<1x4x128xf32, #tpu.memory_space<vmem>>, vector<1x4x128xf32>,
    return
  }
  func.func @transform_0(%arg0: i32) -> (i32, i32, i32) {
    %c0_i32 = arith.constant 0 : i32
    %c0_i32_0 = arith.constant 0 : i32
    %c0_i32_1 = arith.constant 0 : i32
    return %arg0, %c0_i32, %c0_i32_0 : i32, i32, i32
  }
  func.func @transform_1(%arg0: i32) -> (i32, i32) {
    %c0_i32 = arith.constant 0 : i32
    %c0_i32_0 = arith.constant 0 : i32
    %c0_i32_1 = arith.constant 0 : i32
    return %c0_i32, %c0_i32_0 : i32, i32
  }
  func.func @transform_2(%arg0: i32) -> (i32, i32) {
    %c0_i32 = arith.constant 0 : i32
    %c0_i32_0 = arith.constant 0 : i32
    %c0_i32_1 = arith.constant 0 : i32
    return %c0_i32, %c0_i32_0 : i32, i32
  }
  func.func @transform_3(%arg0: i32) -> (i32, i32) {
    %c0_i32 = arith.constant 0 : i32
    %c0_i32_0 = arith.constant 0 : i32
    %c0_i32_1 = arith.constant 0 : i32
    return %c0_i32, %c0_i32_0 : i32, i32
  }
  func.func @transform_4(%arg0: i32) -> (i32, i32) {
    %c0_i32 = arith.constant 0 : i32
    %c0_i32_0 = arith.constant 0 : i32
    %c0_i32_1 = arith.constant 0 : i32
    return %c0_i32, %c0_i32_0 : i32, i32
  }
  func.func @transform_5(%arg0: i32) -> (i32, i32) {
    %c0_i32 = arith.constant 0 : i32
    %c0_i32_0 = arith.constant 0 : i32
    %c0_i32_1 = arith.constant 0 : i32
    return %c0_i32, %c0_i32_0 : i32, i32
  }
  func.func @transform_6(%arg0: i32) -> (i32, i32) {
    %c0_i32 = arith.constant 0 : i32
    %c0_i32_0 = arith.constant 0 : i32
    %c0_i32_1 = arith.constant 0 : i32
    return %c0_i32, %c0_i32_0 : i32, i32
  }
  func.func @transform_7(%arg0: i32) -> (i32, i32) {
    %c0_i32 = arith.constant 0 : i32
    %c0_i32_0 = arith.constant 0 : i32
    %c0_i32_1 = arith.constant 0 : i32
    return %c0_i32, %c0_i32_0 : i32, i32
  }
  func.func @transform_8(%arg0: i32) -> (i32, i32) {
    %c0_i32 = arith.constant 0 : i32
    %c0_i32_0 = arith.constant 0 : i32
    %c0_i32_1 = arith.constant 0 : i32
    return %c0_i32, %c0_i32_0 : i32, i32
  }
  func.func @transform_9(%arg0: i32) -> (i32, i32) {
    %c0_i32 = arith.constant 0 : i32
    %c0_i32_0 = arith.constant 0 : i32
    %c0_i32_1 = arith.constant 0 : i32
    return %c0_i32, %c0_i32_0 : i32, i32
  }
  func.func @transform_10(%arg0: i32) -> (i32, i32) {
    %c0_i32 = arith.constant 0 : i32
    %c0_i32_0 = arith.constant 0 : i32
    %c0_i32_1 = arith.constant 0 : i32
    return %c0_i32, %c0_i32_0 : i32, i32
  }
  func.func @transform_11(%arg0: i32) -> (i32, i32) {
    %c0_i32 = arith.constant 0 : i32
    %c0_i32_0 = arith.constant 0 : i32
    %c0_i32_1 = arith.constant 0 : i32
    return %c0_i32, %c0_i32_0 : i32, i32
  }
  func.func @transform_12(%arg0: i32) -> (i32, i32) {
    %c0_i32 = arith.constant 0 : i32
    %c0_i32_0 = arith.constant 0 : i32
    %c0_i32_1 = arith.constant 0 : i32
    return %c0_i32, %c0_i32_0 : i32, i32
  }
  func.func @transform_13(%arg0: i32) -> (i32, i32) {
    %c0_i32 = arith.constant 0 : i32
    %c0_i32_0 = arith.constant 0 : i32
    %c0_i32_1 = arith.constant 0 : i32
    return %c0_i32, %c0_i32_0 : i32, i32
  }
  func.func @transform_14(%arg0: i32) -> (i32, i32) {
    %c0_i32 = arith.constant 0 : i32
    %c0_i32_0 = arith.constant 0 : i32
    %c0_i32_1 = arith.constant 0 : i32
    return %c0_i32, %c0_i32_0 : i32, i32
  }
  func.func @transform_15(%arg0: i32) -> (i32, i32) {
    %c0_i32 = arith.constant 0 : i32
    %c0_i32_0 = arith.constant 0 : i32
    %c0_i32_1 = arith.constant 0 : i32
    return %c0_i32, %c0_i32_0 : i32, i32
  }
  func.func @transform_16(%arg0: i32) -> (i32, i32) {
    %c0_i32 = arith.constant 0 : i32
    %c0_i32_0 = arith.constant 0 : i32
    %c0_i32_1 = arith.constant 0 : i32
    return %c0_i32, %c0_i32_0 : i32, i32
  }
  func.func @transform_17(%arg0: i32) -> (i32, i32) {
    %c0_i32 = arith.constant 0 : i32
    %c0_i32_0 = arith.constant 0 : i32
    %c0_i32_1 = arith.constant 0 : i32
    return %c0_i32, %c0_i32_0 : i32, i32
  }
  func.func @transform_18(%arg0: i32) -> (i32, i32) {
    %c0_i32 = arith.constant 0 : i32
    %c0_i32_0 = arith.constant 0 : i32
    %c0_i32_1 = arith.constant 0 : i32
    return %c0_i32, %c0_i32_0 : i32, i32
  }
  func.func @transform_19(%arg0: i32) -> (i32, i32) {
    %c0_i32 = arith.constant 0 : i32
    %c0_i32_0 = arith.constant 0 : i32
    %c0_i32_1 = arith.constant 0 : i32
    return %c0_i32, %c0_i32_0 : i32, i32
  }
  func.func @transform_20(%arg0: i32) -> (i32, i32) {
    %c0_i32 = arith.constant 0 : i32
    %c0_i32_0 = arith.constant 0 : i32
    %c0_i32_1 = arith.constant 0 : i32
    return %c0_i32, %c0_i32_0 : i32, i32
  }
  func.func @transform_21(%arg0: i32) -> (i32, i32) {
    %c0_i32 = arith.constant 0 : i32
    %c0_i32_0 = arith.constant 0 : i32
    %c0_i32_1 = arith.constant 0 : i32
    return %c0_i32, %c0_i32_0 : i32, i32
  }
  func.func @transform_22(%arg0: i32) -> (i32, i32) {
    %c0_i32 = arith.constant 0 : i32
    %c0_i32_0 = arith.constant 0 : i32
    %c0_i32_1 = arith.constant 0 : i32
    return %c0_i32, %c0_i32_0 : i32, i32
  }
  func.func @transform_23(%arg0: i32) -> (i32, i32, i32) {
    %c0_i32 = arith.constant 0 : i32
    %c0_i32_0 = arith.constant 0 : i32
    %c0_i32_1 = arith.constant 0 : i32
    return %arg0, %c0_i32, %c0_i32_0 : i32, i32, i32
  }
  func.func @transform_24(%arg0: i32) -> (i32, i32, i32) {
    %c0_i32 = arith.constant 0 : i32
    %c0_i32_0 = arith.constant 0 : i32
    %c0_i32_1 = arith.constant 0 : i32
    return %arg0, %c0_i32, %c0_i32_0 : i32, i32, i32
  }
}

</mosaic_0001>

<llo_original>
// kernel: forward.2
$region0: #{forward.2}
  #allocation0 [shape = 'u32[]', space=smem, size = 0x4, offset = 0x4, fixed_abs, tag = 'smem constant byte address 0x4 - core index']
  #allocation1 [shape = 'u32[144,128]{1,0:T(1,128)}', space=vmem, size = 0x12000, scoped, tag = 'internal scratch']
  %s0 = inlined_call_operand.vmem [shape: bf16[2,4,768], index: 0, kind: input, shape index: {}]
  %s1 = inlined_call_operand.vmem [shape: bf16[768,128], index: 1, kind: input, shape index: {}]
  %s2 = inlined_call_operand.vmem [shape: f32[5,128], index: 2, kind: input, shape index: {}]
  %s3 = inlined_call_operand.vmem [shape: f32[2,1,128], index: 3, kind: input, shape index: {}]
  %s4 = inlined_call_operand.vmem [shape: f32[2,1,128], index: 4, kind: input, shape index: {}]
  %s5 = inlined_call_operand.vmem [shape: bf16[2,128,384], index: 5, kind: input, shape index: {}]
  %s6 = inlined_call_operand.vmem [shape: f32[2,1,384], index: 6, kind: input, shape index: {}]
  %s7 = inlined_call_operand.vmem [shape: bf16[2,128,128], index: 7, kind: input, shape index: {}]
  %s8 = inlined_call_operand.vmem [shape: f32[2,1,128], index: 8, kind: input, shape index: {}]
  %s9 = inlined_call_operand.vmem [shape: f32[2,1,128], index: 9, kind: input, shape index: {}]
  %s10 = inlined_call_operand.vmem [shape: f32[2,1,128], index: 10, kind: input, shape index: {}]
  %s11 = inlined_call_operand.vmem [shape: bf16[2,128,128], index: 11, kind: input, shape index: {}]
  %s12 = inlined_call_operand.vmem [shape: f32[2,1,128], index: 12, kind: input, shape index: {}]
  %s13 = inlined_call_operand.vmem [shape: bf16[2,128,128], index: 13, kind: input, shape index: {}]
  %s14 = inlined_call_operand.vmem [shape: f32[2,1,128], index: 14, kind: input, shape index: {}]
  %s15 = inlined_call_operand.vmem [shape: f32[2,5,128], index: 15, kind: output, shape index: {}]
  %s16 = sld [smem:[#allocation0]]
  $region97: #{forward.2} parent=0
    _
  %s18 = ssub.s32 1, %s16
  %s19 = scalar_select 0, %s18, %s16
  loop: start=0, step=1, limit=6
  $region2: #{forward.2} parent=0 // loop_pre_header
    _
  $region3: #{forward.2} parent=0 // loop_header
    %s21 = sphi 0, %s25
    %p22 = scmp.ge.s32.totalorder %s21, 6
    %s28 = sphi 0, %s40
    %s29 = sphi 0, %s36
    %s30 = sphi 0, %s28
    %s31 = sphi 0, %s29
    %s32 = sphi 0, %s30
    %s33 = sphi 0, %s31
    %s43 = sphi 0, %s45
    %s46 = sphi 0, %s43
    %s47 = sphi 0, %s46
    %s63 = sphi 0, %s47
    %s67 = sphi 0, %s67
    %s69 = sphi 0, %s67
    %s70 = sphi 0, %s69
    %s84 = sphi 0, %s70
    %s88 = sphi 0, %s88
    %s90 = sphi 0, %s88
    %s91 = sphi 0, %s90
    %s105 = sphi 0, %s91
    %s111 = sphi 0, %s113
    %s114 = sphi 0, %s111
    %s115 = sphi 0, %s114
    %s131 = sphi 0, %s115
    %s137 = sphi 0, %s139
    %s140 = sphi 0, %s137
    %s141 = sphi 0, %s140
    %s157 = sphi 0, %s141
    %s163 = sphi 0, %s165
    %s166 = sphi 0, %s163
    %s167 = sphi 0, %s166
    %s183 = sphi 0, %s167
    %s189 = sphi 0, %s191
    %s192 = sphi 0, %s189
    %s193 = sphi 0, %s192
    %s209 = sphi 0, %s193
    %s215 = sphi 0, %s217
    %s218 = sphi 0, %s215
    %s219 = sphi 0, %s218
    %s235 = sphi 0, %s219
    %s241 = sphi 0, %s243
    %s244 = sphi 0, %s241
    %s245 = sphi 0, %s244
    %s261 = sphi 0, %s245
    %s267 = sphi 0, %s269
    %s270 = sphi 0, %s267
    %s271 = sphi 0, %s270
    %s287 = sphi 0, %s271
    %s293 = sphi 0, %s295
    %s296 = sphi 0, %s293
    %s297 = sphi 0, %s296
    %s313 = sphi 0, %s297
    %s319 = sphi 0, %s321
    %s322 = sphi 0, %s319
    %s323 = sphi 0, %s322
    %s339 = sphi 0, %s323
    %s345 = sphi 0, %s347
    %s348 = sphi 0, %s345
    %s349 = sphi 0, %s348
    %s365 = sphi 0, %s349
    %s371 = sphi 0, %s373
    %s374 = sphi 0, %s371
    %s375 = sphi 0, %s374
    %s391 = sphi 0, %s375
    %s397 = sphi 0, %s399
    %s400 = sphi 0, %s397
    %s401 = sphi 0, %s400
    %s417 = sphi 0, %s401
    %s423 = sphi 0, %s425
    %s426 = sphi 0, %s423
    %s427 = sphi 0, %s426
    %s443 = sphi 0, %s427
  $region4: #{forward.2} parent=0 // loop_header_branch
    %24 = sbr.rel (%p22) target = $region8
  $region5: #{forward.2} parent=0 // loop_body
    %s26 = ssub.s32 %s21, 1
    %s27 = ssub.s32 %s21, 2
    %s34 = sadd.s32 1, %s29
    %p35 = scmp.ge.s32.totalorder %s34, 2
    %s36 = scalar_select %p35, 0, %s34
    %s37 = sadd.s32 1, %s28
    %s38 = scalar_select %p35, %s37, %s28
    %p39 = scmp.ge.s32.totalorder %s38, 2
    %s40 = scalar_select %p39, 0, %s38
    %s41 = ssub.s32 %s28, %s40
    %p42 = scmp.eq.s32.totalorder %s41, 0
    %s44 = sadd.s32 %s43, 1
    %s45 = scalar_select %p42, %s43, %s44
    %p48 = pneg %p42
    %p49 = scmp.eq.s32.totalorder %s21, 3
    %p50 = por %p48, %p49
    %p51 = scmp.ne.s32.totalorder %s43, %s46
    %p52 = scmp.eq.s32.totalorder %s21, 0
    %p53 = por %p51, %p52
    %p54 = scmp.ne.s32.totalorder %s43, %s46
    %p55 = scmp.eq.s32.totalorder %s26, 3
    %p56 = por %p54, %p55
    %p57 = scmp.ne.s32.totalorder %s46, %s47
    %p58 = scmp.eq.s32.totalorder %s26, 0
    %p59 = por %p57, %p58
    %p60 = scmp.ne.s32.totalorder %s46, %s47
    %p61 = scmp.eq.s32.totalorder %s27, 3
    %p62 = por %p60, %p61
    %p64 = scmp.ne.s32.totalorder %s47, %s63
    %p65 = scmp.eq.s32.totalorder %s27, 0
    %p66 = por %p64, %p65
    %s68 = sadd.s32 %s67, 1
    %p71 = scmp.eq.s32.totalorder %s21, 3
    %p72 = scmp.ne.s32.totalorder %s67, %s69
    %p73 = scmp.eq.s32.totalorder %s21, 0
    %p74 = por %p72, %p73
    %p75 = scmp.ne.s32.totalorder %s67, %s69
    %p76 = scmp.eq.s32.totalorder %s26, 3
    %p77 = por %p75, %p76
    %p78 = scmp.ne.s32.totalorder %s69, %s70
    %p79 = scmp.eq.s32.totalorder %s26, 0
    %p80 = por %p78, %p79
    %p81 = scmp.ne.s32.totalorder %s69, %s70
    %p82 = scmp.eq.s32.totalorder %s27, 3
    %p83 = por %p81, %p82
    %p85 = scmp.ne.s32.totalorder %s70, %s84
    %p86 = scmp.eq.s32.totalorder %s27, 0
    %p87 = por %p85, %p86
    %s89 = sadd.s32 %s88, 1
    %p92 = scmp.eq.s32.totalorder %s21, 3
    %p93 = scmp.ne.s32.totalorder %s88, %s90
    %p94 = scmp.eq.s32.totalorder %s21, 0
    %p95 = por %p93, %p94
    %p96 = scmp.ne.s32.totalorder %s88, %s90
    %p97 = scmp.eq.s32.totalorder %s26, 3
    %p98 = por %p96, %p97
    %p99 = scmp.ne.s32.totalorder %s90, %s91
    %p100 = scmp.eq.s32.totalorder %s26, 0
    %p101 = por %p99, %p100
    %p102 = scmp.ne.s32.totalorder %s90, %s91
    %p103 = scmp.eq.s32.totalorder %s27, 3
    %p104 = por %p102, %p103
    %p106 = scmp.ne.s32.totalorder %s91, %s105
    %p107 = scmp.eq.s32.totalorder %s27, 0
    %p108 = por %p106, %p107
    %s109 = ssub.s32 %s29, %s36
    %p110 = scmp.eq.s32.totalorder %s109, 0
    %s112 = sadd.s32 %s111, 1
    %s113 = scalar_select %p110, %s111, %s112
    %p116 = pneg %p110
    %p117 = scmp.eq.s32.totalorder %s21, 3
    %p118 = por %p116, %p117
    %p119 = scmp.ne.s32.totalorder %s111, %s114
    %p120 = scmp.eq.s32.totalorder %s21, 0
    %p121 = por %p119, %p120
    %p122 = scmp.ne.s32.totalorder %s111, %s114
    %p123 = scmp.eq.s32.totalorder %s26, 3
    %p124 = por %p122, %p123
    %p125 = scmp.ne.s32.totalorder %s114, %s115
    %p126 = scmp.eq.s32.totalorder %s26, 0
    %p127 = por %p125, %p126
    %p128 = scmp.ne.s32.totalorder %s114, %s115
    %p129 = scmp.eq.s32.totalorder %s27, 3
    %p130 = por %p128, %p129
    %p132 = scmp.ne.s32.totalorder %s115, %s131
    %p133 = scmp.eq.s32.totalorder %s27, 0
    %p134 = por %p132, %p133
    %s135 = ssub.s32 %s29, %s36
    %p136 = scmp.eq.s32.totalorder %s135, 0
    %s138 = sadd.s32 %s137, 1
    %s139 = scalar_select %p136, %s137, %s138
    %p142 = pneg %p136
    %p143 = scmp.eq.s32.totalorder %s21, 3
    %p144 = por %p142, %p143
    %p145 = scmp.ne.s32.totalorder %s137, %s140
    %p146 = scmp.eq.s32.totalorder %s21, 0
    %p147 = por %p145, %p146
    %p148 = scmp.ne.s32.totalorder %s137, %s140
    %p149 = scmp.eq.s32.totalorder %s26, 3
    %p150 = por %p148, %p149
    %p151 = scmp.ne.s32.totalorder %s140, %s141
    %p152 = scmp.eq.s32.totalorder %s26, 0
    %p153 = por %p151, %p152
    %p154 = scmp.ne.s32.totalorder %s140, %s141
    %p155 = scmp.eq.s32.totalorder %s27, 3
    %p156 = por %p154, %p155
    %p158 = scmp.ne.s32.totalorder %s141, %s157
    %p159 = scmp.eq.s32.totalorder %s27, 0
    %p160 = por %p158, %p159
    %s161 = ssub.s32 %s29, %s36
    %p162 = scmp.eq.s32.totalorder %s161, 0
    %s164 = sadd.s32 %s163, 1
    %s165 = scalar_select %p162, %s163, %s164
    %p168 = pneg %p162
    %p169 = scmp.eq.s32.totalorder %s21, 3
    %p170 = por %p168, %p169
    %p171 = scmp.ne.s32.totalorder %s163, %s166
    %p172 = scmp.eq.s32.totalorder %s21, 0
    %p173 = por %p171, %p172
    %p174 = scmp.ne.s32.totalorder %s163, %s166
    %p175 = scmp.eq.s32.totalorder %s26, 3
    %p176 = por %p174, %p175
    %p177 = scmp.ne.s32.totalorder %s166, %s167
    %p178 = scmp.eq.s32.totalorder %s26, 0
    %p179 = por %p177, %p178
    %p180 = scmp.ne.s32.totalorder %s166, %s167
    %p181 = scmp.eq.s32.totalorder %s27, 3
    %p182 = por %p180, %p181
    %p184 = scmp.ne.s32.totalorder %s167, %s183
    %p185 = scmp.eq.s32.totalorder %s27, 0
    %p186 = por %p184, %p185
    %s187 = ssub.s32 %s29, %s36
    %p188 = scmp.eq.s32.totalorder %s187, 0
    %s190 = sadd.s32 %s189, 1
    %s191 = scalar_select %p188, %s189, %s190
    %p194 = pneg %p188
    %p195 = scmp.eq.s32.totalorder %s21, 3
    %p196 = por %p194, %p195
    %p197 = scmp.ne.s32.totalorder %s189, %s192
    %p198 = scmp.eq.s32.totalorder %s21, 0
    %p199 = por %p197, %p198
    %p200 = scmp.ne.s32.totalorder %s189, %s192
    %p201 = scmp.eq.s32.totalorder %s26, 3
    %p202 = por %p200, %p201
    %p203 = scmp.ne.s32.totalorder %s192, %s193
    %p204 = scmp.eq.s32.totalorder %s26, 0
    %p205 = por %p203, %p204
    %p206 = scmp.ne.s32.totalorder %s192, %s193
    %p207 = scmp.eq.s32.totalorder %s27, 3
    %p208 = por %p206, %p207
    %p210 = scmp.ne.s32.totalorder %s193, %s209
    %p211 = scmp.eq.s32.totalorder %s27, 0
    %p212 = por %p210, %p211
    %s213 = ssub.s32 %s29, %s36
    %p214 = scmp.eq.s32.totalorder %s213, 0
    %s216 = sadd.s32 %s215, 1
    %s217 = scalar_select %p214, %s215, %s216
    %p220 = pneg %p214
    %p221 = scmp.eq.s32.totalorder %s21, 3
    %p222 = por %p220, %p221
    %p223 = scmp.ne.s32.totalorder %s215, %s218
    %p224 = scmp.eq.s32.totalorder %s21, 0
    %p225 = por %p223, %p224
    %p226 = scmp.ne.s32.totalorder %s215, %s218
    %p227 = scmp.eq.s32.totalorder %s26, 3
    %p228 = por %p226, %p227
    %p229 = scmp.ne.s32.totalorder %s218, %s219
    %p230 = scmp.eq.s32.totalorder %s26, 0
    %p231 = por %p229, %p230
    %p232 = scmp.ne.s32.totalorder %s218, %s219
    %p233 = scmp.eq.s32.totalorder %s27, 3
    %p234 = por %p232, %p233
    %p236 = scmp.ne.s32.totalorder %s219, %s235
    %p237 = scmp.eq.s32.totalorder %s27, 0
    %p238 = por %p236, %p237
    %s239 = ssub.s32 %s29, %s36
    %p240 = scmp.eq.s32.totalorder %s239, 0
    %s242 = sadd.s32 %s241, 1
    %s243 = scalar_select %p240, %s241, %s242
    %p246 = pneg %p240
    %p247 = scmp.eq.s32.totalorder %s21, 3
    %p248 = por %p246, %p247
    %p249 = scmp.ne.s32.totalorder %s241, %s244
    %p250 = scmp.eq.s32.totalorder %s21, 0
    %p251 = por %p249, %p250
    %p252 = scmp.ne.s32.totalorder %s241, %s244
    %p253 = scmp.eq.s32.totalorder %s26, 3
    %p254 = por %p252, %p253
    %p255 = scmp.ne.s32.totalorder %s244, %s245
    %p256 = scmp.eq.s32.totalorder %s26, 0
    %p257 = por %p255, %p256
    %p258 = scmp.ne.s32.totalorder %s244, %s245
    %p259 = scmp.eq.s32.totalorder %s27, 3
    %p260 = por %p258, %p259
    %p262 = scmp.ne.s32.totalorder %s245, %s261
    %p263 = scmp.eq.s32.totalorder %s27, 0
    %p264 = por %p262, %p263
    %s265 = ssub.s32 %s29, %s36
    %p266 = scmp.eq.s32.totalorder %s265, 0
    %s268 = sadd.s32 %s267, 1
    %s269 = scalar_select %p266, %s267, %s268
    %p272 = pneg %p266
    %p273 = scmp.eq.s32.totalorder %s21, 3
    %p274 = por %p272, %p273
    %p275 = scmp.ne.s32.totalorder %s267, %s270
    %p276 = scmp.eq.s32.totalorder %s21, 0
    %p277 = por %p275, %p276
    %p278 = scmp.ne.s32.totalorder %s267, %s270
    %p279 = scmp.eq.s32.totalorder %s26, 3
    %p280 = por %p278, %p279
    %p281 = scmp.ne.s32.totalorder %s270, %s271
    %p282 = scmp.eq.s32.totalorder %s26, 0
    %p283 = por %p281, %p282
    %p284 = scmp.ne.s32.totalorder %s270, %s271
    %p285 = scmp.eq.s32.totalorder %s27, 3
    %p286 = por %p284, %p285
    %p288 = scmp.ne.s32.totalorder %s271, %s287
    %p289 = scmp.eq.s32.totalorder %s27, 0
    %p290 = por %p288, %p289
    %s291 = ssub.s32 %s29, %s36
    %p292 = scmp.eq.s32.totalorder %s291, 0
    %s294 = sadd.s32 %s293, 1
    %s295 = scalar_select %p292, %s293, %s294
    %p298 = pneg %p292
    %p299 = scmp.eq.s32.totalorder %s21, 3
    %p300 = por %p298, %p299
    %p301 = scmp.ne.s32.totalorder %s293, %s296
    %p302 = scmp.eq.s32.totalorder %s21, 0
    %p303 = por %p301, %p302
    %p304 = scmp.ne.s32.totalorder %s293, %s296
    %p305 = scmp.eq.s32.totalorder %s26, 3
    %p306 = por %p304, %p305
    %p307 = scmp.ne.s32.totalorder %s296, %s297
    %p308 = scmp.eq.s32.totalorder %s26, 0
    %p309 = por %p307, %p308
    %p310 = scmp.ne.s32.totalorder %s296, %s297
    %p311 = scmp.eq.s32.totalorder %s27, 3
    %p312 = por %p310, %p311
    %p314 = scmp.ne.s32.totalorder %s297, %s313
    %p315 = scmp.eq.s32.totalorder %s27, 0
    %p316 = por %p314, %p315
    %s317 = ssub.s32 %s29, %s36
    %p318 = scmp.eq.s32.totalorder %s317, 0
    %s320 = sadd.s32 %s319, 1
    %s321 = scalar_select %p318, %s319, %s320
    %p324 = pneg %p318
    %p325 = scmp.eq.s32.totalorder %s21, 3
    %p326 = por %p324, %p325
    %p327 = scmp.ne.s32.totalorder %s319, %s322
    %p328 = scmp.eq.s32.totalorder %s21, 0
    %p329 = por %p327, %p328
    %p330 = scmp.ne.s32.totalorder %s319, %s322
    %p331 = scmp.eq.s32.totalorder %s26, 3
    %p332 = por %p330, %p331
    %p333 = scmp.ne.s32.totalorder %s322, %s323
    %p334 = scmp.eq.s32.totalorder %s26, 0
    %p335 = por %p333, %p334
    %p336 = scmp.ne.s32.totalorder %s322, %s323
    %p337 = scmp.eq.s32.totalorder %s27, 3
    %p338 = por %p336, %p337
    %p340 = scmp.ne.s32.totalorder %s323, %s339
    %p341 = scmp.eq.s32.totalorder %s27, 0
    %p342 = por %p340, %p341
    %s343 = ssub.s32 %s29, %s36
    %p344 = scmp.eq.s32.totalorder %s343, 0
    %s346 = sadd.s32 %s345, 1
    %s347 = scalar_select %p344, %s345, %s346
    %p350 = pneg %p344
    %p351 = scmp.eq.s32.totalorder %s21, 3
    %p352 = por %p350, %p351
    %p353 = scmp.ne.s32.totalorder %s345, %s348
    %p354 = scmp.eq.s32.totalorder %s21, 0
    %p355 = por %p353, %p354
    %p356 = scmp.ne.s32.totalorder %s345, %s348
    %p357 = scmp.eq.s32.totalorder %s26, 3
    %p358 = por %p356, %p357
    %p359 = scmp.ne.s32.totalorder %s348, %s349
    %p360 = scmp.eq.s32.totalorder %s26, 0
    %p361 = por %p359, %p360
    %p362 = scmp.ne.s32.totalorder %s348, %s349
    %p363 = scmp.eq.s32.totalorder %s27, 3
    %p364 = por %p362, %p363
    %p366 = scmp.ne.s32.totalorder %s349, %s365
    %p367 = scmp.eq.s32.totalorder %s27, 0
    %p368 = por %p366, %p367
    %s369 = ssub.s32 %s29, %s36
    %p370 = scmp.eq.s32.totalorder %s369, 0
    %s372 = sadd.s32 %s371, 1
    %s373 = scalar_select %p370, %s371, %s372
    %p376 = pneg %p370
    %p377 = scmp.eq.s32.totalorder %s21, 3
    %p378 = por %p376, %p377
    %p379 = scmp.ne.s32.totalorder %s371, %s374
    %p380 = scmp.eq.s32.totalorder %s21, 0
    %p381 = por %p379, %p380
    %p382 = scmp.ne.s32.totalorder %s371, %s374
    %p383 = scmp.eq.s32.totalorder %s26, 3
    %p384 = por %p382, %p383
    %p385 = scmp.ne.s32.totalorder %s374, %s375
    %p386 = scmp.eq.s32.totalorder %s26, 0
    %p387 = por %p385, %p386
    %p388 = scmp.ne.s32.totalorder %s374, %s375
    %p389 = scmp.eq.s32.totalorder %s27, 3
    %p390 = por %p388, %p389
    %p392 = scmp.ne.s32.totalorder %s375, %s391
    %p393 = scmp.eq.s32.totalorder %s27, 0
    %p394 = por %p392, %p393
    %s395 = ssub.s32 %s29, %s36
    %p396 = scmp.eq.s32.totalorder %s395, 0
    %s398 = sadd.s32 %s397, 1
    %s399 = scalar_select %p396, %s397, %s398
    %p402 = pneg %p396
    %p403 = scmp.eq.s32.totalorder %s21, 3
    %p404 = por %p402, %p403
    %p405 = scmp.ne.s32.totalorder %s397, %s400
    %p406 = scmp.eq.s32.totalorder %s21, 0
    %p407 = por %p405, %p406
    %p408 = scmp.ne.s32.totalorder %s397, %s400
    %p409 = scmp.eq.s32.totalorder %s26, 3
    %p410 = por %p408, %p409
    %p411 = scmp.ne.s32.totalorder %s400, %s401
    %p412 = scmp.eq.s32.totalorder %s26, 0
    %p413 = por %p411, %p412
    %p414 = scmp.ne.s32.totalorder %s400, %s401
    %p415 = scmp.eq.s32.totalorder %s27, 3
    %p416 = por %p414, %p415
    %p418 = scmp.ne.s32.totalorder %s401, %s417
    %p419 = scmp.eq.s32.totalorder %s27, 0
    %p420 = por %p418, %p419
    %s421 = ssub.s32 %s28, %s40
    %p422 = scmp.eq.s32.totalorder %s421, 0
    %s424 = sadd.s32 %s423, 1
    %s425 = scalar_select %p422, %s423, %s424
    %p428 = pneg %p422
    %p429 = scmp.eq.s32.totalorder %s21, 3
    %p430 = por %p428, %p429
    %p431 = scmp.ne.s32.totalorder %s423, %s426
    %p432 = scmp.eq.s32.totalorder %s21, 0
    %p433 = por %p431, %p432
    %p434 = scmp.ne.s32.totalorder %s423, %s426
    %p435 = scmp.eq.s32.totalorder %s26, 3
    %p436 = por %p434, %p435
    %p437 = scmp.ne.s32.totalorder %s426, %s427
    %p438 = scmp.eq.s32.totalorder %s26, 0
    %p439 = por %p437, %p438
    %p440 = scmp.ne.s32.totalorder %s426, %s427
    %p441 = scmp.eq.s32.totalorder %s27, 3
    %p442 = por %p440, %p441
    %p444 = scmp.ne.s32.totalorder %s427, %s443
    %p445 = scmp.eq.s32.totalorder %s27, 0
    %p446 = por %p444, %p445
    %p447 = scmp.le.s32.totalorder 1, %s21
    %p448 = scmp.lt.s32.totalorder %s21, 5
    %p449 = pnand %p447, %p448
    %p450 = pneg %p449
    // Predicated region
    $region9: #{forward.2} parent=5 // pred_check
      _
    $region10: #{forward.2} parent=5 // pred_check_branch
      %452 = sbr.rel (%p449) target = $region12
    $region11: #{forward.2} parent=5 // pred_region
      %s453 = ssub.s32 %s21, 1
      // Predicated region
      $region13: #{forward.2} parent=11 // pred_check
        %p454 = pneg %p80
      $region14: #{forward.2} parent=11 // pred_check_branch
        %456 = sbr.rel (%p454) target = $region16
      $region15: #{forward.2} parent=11 // pred_region
        _
      $region16: #{forward.2} parent=11 // pred_fallthru
        _
      // Predicated region
      $region17: #{forward.2} parent=11 // pred_check
        %p457 = pneg %p101
      $region18: #{forward.2} parent=11 // pred_check_branch
        %459 = sbr.rel (%p457) target = $region20
      $region19: #{forward.2} parent=11 // pred_region
        _
      $region20: #{forward.2} parent=11 // pred_fallthru
        _
    $region12: #{forward.2} parent=5 // pred_fallthru
      _
    %p460 = scmp.lt.s32.totalorder %s21, 4
    // Predicated region
    $region21: #{forward.2} parent=5 // pred_check
      %p461 = pneg %p460
    $region22: #{forward.2} parent=5 // pred_check_branch
      %463 = sbr.rel (%p461) target = $region24
    $region23: #{forward.2} parent=5 // pred_region
      // Predicated region
      $region25: #{forward.2} parent=23 // pred_check
        %p464 = pneg %p53
      $region26: #{forward.2} parent=23 // pred_check_branch
        %466 = sbr.rel (%p464) target = $region28
      $region27: #{forward.2} parent=23 // pred_region
        %p467 = scmp.lt.s32.totalorder %s28, 1
        %s468 = scalar_select %p467, %s28, 1
        %s469 = smul.addr %s468, 6
        %s470 = smul.addr %s469, 2
        %s471 = scalar_lea.vmem %s0, %s470
      $region28: #{forward.2} parent=23 // pred_fallthru
        _
      // Predicated region
      $region29: #{forward.2} parent=23 // pred_check
        %p472 = pneg %p121
      $region30: #{forward.2} parent=23 // pred_check_branch
        %474 = sbr.rel (%p472) target = $region32
      $region31: #{forward.2} parent=23 // pred_region
        %p475 = scmp.lt.s32.totalorder %s29, 1
        %s476 = scalar_select %p475, %s29, 1
        %s477 = scalar_lea.vmem %s3, %s476
      $region32: #{forward.2} parent=23 // pred_fallthru
        _
      // Predicated region
      $region33: #{forward.2} parent=23 // pred_check
        %p478 = pneg %p147
      $region34: #{forward.2} parent=23 // pred_check_branch
        %480 = sbr.rel (%p478) target = $region36
      $region35: #{forward.2} parent=23 // pred_region
        %p481 = scmp.lt.s32.totalorder %s29, 1
        %s482 = scalar_select %p481, %s29, 1
        %s483 = scalar_lea.vmem %s4, %s482
      $region36: #{forward.2} parent=23 // pred_fallthru
        _
      // Predicated region
      $region37: #{forward.2} parent=23 // pred_check
        %p484 = pneg %p173
      $region38: #{forward.2} parent=23 // pred_check_branch
        %486 = sbr.rel (%p484) target = $region40
      $region39: #{forward.2} parent=23 // pred_region
        %p487 = scmp.lt.s32.totalorder %s29, 1
        %s488 = scalar_select %p487, %s29, 1
        %s489 = smul.addr %s488, 48
        %s490 = smul.addr %s489, 4
        %s491 = scalar_lea.vmem %s5, %s490
      $region40: #{forward.2} parent=23 // pred_fallthru
        _
      // Predicated region
      $region41: #{forward.2} parent=23 // pred_check
        %p492 = pneg %p199
      $region42: #{forward.2} parent=23 // pred_check_branch
        %494 = sbr.rel (%p492) target = $region44
      $region43: #{forward.2} parent=23 // pred_region
        %p495 = scmp.lt.s32.totalorder %s29, 1
        %s496 = scalar_select %p495, %s29, 1
        %s497 = smul.addr %s496, 3
        %s498 = scalar_lea.vmem %s6, %s497
      $region44: #{forward.2} parent=23 // pred_fallthru
        _
      // Predicated region
      $region45: #{forward.2} parent=23 // pred_check
        %p499 = pneg %p225
      $region46: #{forward.2} parent=23 // pred_check_branch
        %501 = sbr.rel (%p499) target = $region48
      $region47: #{forward.2} parent=23 // pred_region
        %p502 = scmp.lt.s32.totalorder %s29, 1
        %s503 = scalar_select %p502, %s29, 1
        %s504 = smul.addr %s503, 16
        %s505 = smul.addr %s504, 4
        %s506 = scalar_lea.vmem %s7, %s505
      $region48: #{forward.2} parent=23 // pred_fallthru
        _
      // Predicated region
      $region49: #{forward.2} parent=23 // pred_check
        %p507 = pneg %p251
      $region50: #{forward.2} parent=23 // pred_check_branch
        %509 = sbr.rel (%p507) target = $region52
      $region51: #{forward.2} parent=23 // pred_region
        %p510 = scmp.lt.s32.totalorder %s29, 1
        %s511 = scalar_select %p510, %s29, 1
        %s512 = scalar_lea.vmem %s8, %s511
      $region52: #{forward.2} parent=23 // pred_fallthru
        _
      // Predicated region
      $region53: #{forward.2} parent=23 // pred_check
        %p513 = pneg %p277
      $region54: #{forward.2} parent=23 // pred_check_branch
        %515 = sbr.rel (%p513) target = $region56
      $region55: #{forward.2} parent=23 // pred_region
        %p516 = scmp.lt.s32.totalorder %s29, 1
        %s517 = scalar_select %p516, %s29, 1
        %s518 = scalar_lea.vmem %s9, %s517
      $region56: #{forward.2} parent=23 // pred_fallthru
        _
      // Predicated region
      $region57: #{forward.2} parent=23 // pred_check
        %p519 = pneg %p303
      $region58: #{forward.2} parent=23 // pred_check_branch
        %521 = sbr.rel (%p519) target = $region60
      $region59: #{forward.2} parent=23 // pred_region
        %p522 = scmp.lt.s32.totalorder %s29, 1
        %s523 = scalar_select %p522, %s29, 1
        %s524 = scalar_lea.vmem %s10, %s523
      $region60: #{forward.2} parent=23 // pred_fallthru
        _
      // Predicated region
      $region61: #{forward.2} parent=23 // pred_check
        %p525 = pneg %p329
      $region62: #{forward.2} parent=23 // pred_check_branch
        %527 = sbr.rel (%p525) target = $region64
      $region63: #{forward.2} parent=23 // pred_region
        %p528 = scmp.lt.s32.totalorder %s29, 1
        %s529 = scalar_select %p528, %s29, 1
        %s530 = smul.addr %s529, 16
        %s531 = smul.addr %s530, 4
        %s532 = scalar_lea.vmem %s11, %s531
      $region64: #{forward.2} parent=23 // pred_fallthru
        _
      // Predicated region
      $region65: #{forward.2} parent=23 // pred_check
        %p533 = pneg %p355
      $region66: #{forward.2} parent=23 // pred_check_branch
        %535 = sbr.rel (%p533) target = $region68
      $region67: #{forward.2} parent=23 // pred_region
        %p536 = scmp.lt.s32.totalorder %s29, 1
        %s537 = scalar_select %p536, %s29, 1
        %s538 = scalar_lea.vmem %s12, %s537
      $region68: #{forward.2} parent=23 // pred_fallthru
        _
      // Predicated region
      $region69: #{forward.2} parent=23 // pred_check
        %p539 = pneg %p381
      $region70: #{forward.2} parent=23 // pred_check_branch
        %541 = sbr.rel (%p539) target = $region72
      $region71: #{forward.2} parent=23 // pred_region
        %p542 = scmp.lt.s32.totalorder %s29, 1
        %s543 = scalar_select %p542, %s29, 1
        %s544 = smul.addr %s543, 16
        %s545 = smul.addr %s544, 4
        %s546 = scalar_lea.vmem %s13, %s545
      $region72: #{forward.2} parent=23 // pred_fallthru
        _
      // Predicated region
      $region73: #{forward.2} parent=23 // pred_check
        %p547 = pneg %p407
      $region74: #{forward.2} parent=23 // pred_check_branch
        %549 = sbr.rel (%p547) target = $region76
      $region75: #{forward.2} parent=23 // pred_region
        %p550 = scmp.lt.s32.totalorder %s29, 1
        %s551 = scalar_select %p550, %s29, 1
        %s552 = scalar_lea.vmem %s14, %s551
      $region76: #{forward.2} parent=23 // pred_fallthru
        _
    $region24: #{forward.2} parent=5 // pred_fallthru
      _
    %p553 = scmp.le.s32.totalorder 1, %s21
    %p554 = scmp.lt.s32.totalorder %s21, 5
    %p555 = pnand %p553, %p554
    %p556 = pneg %p555
    // Predicated region
    $region77: #{forward.2} parent=5 // pred_check
      _
    $region78: #{forward.2} parent=5 // pred_check_branch
      %558 = sbr.rel (%p555) target = $region80
    $region79: #{forward.2} parent=5 // pred_region
      %s559 = ssub.s32 %s21, 1
      %p560 = scmp.lt.s32.totalorder %s30, 1
      %s561 = scalar_select %p560, %s30, 1
      %s562 = smul.addr %s561, 6
      %s563 = smul.addr %s562, 2
      %s564 = scalar_lea.vmem %s0, %s563
      %p565 = pneg %p59
      %p566 = pneg %p56
      %p567 = pneg %p80
      %p568 = pneg %p77
      %p569 = pneg %p101
      %p570 = pneg %p98
      %p571 = scmp.lt.s32.totalorder %s31, 1
      %s572 = scalar_select %p571, %s31, 1
      %s573 = scalar_lea.vmem %s3, %s572
      %p574 = pneg %p127
      %p575 = pneg %p124
      %p576 = scmp.lt.s32.totalorder %s31, 1
      %s577 = scalar_select %p576, %s31, 1
      %s578 = scalar_lea.vmem %s4, %s577
      %p579 = pneg %p153
      %p580 = pneg %p150
      %p581 = scmp.lt.s32.totalorder %s31, 1
      %s582 = scalar_select %p581, %s31, 1
      %s583 = smul.addr %s582, 48
      %s584 = smul.addr %s583, 4
      %s585 = scalar_lea.vmem %s5, %s584
      %p586 = pneg %p179
      %p587 = pneg %p176
      %p588 = scmp.lt.s32.totalorder %s31, 1
      %s589 = scalar_select %p588, %s31, 1
      %s590 = smul.addr %s589, 3
      %s591 = scalar_lea.vmem %s6, %s590
      %p592 = pneg %p205
      %p593 = pneg %p202
      %p594 = scmp.lt.s32.totalorder %s31, 1
      %s595 = scalar_select %p594, %s31, 1
      %s596 = smul.addr %s595, 16
      %s597 = smul.addr %s596, 4
      %s598 = scalar_lea.vmem %s7, %s597
      %p599 = pneg %p231
      %p600 = pneg %p228
      %p601 = scmp.lt.s32.totalorder %s31, 1
      %s602 = scalar_select %p601, %s31, 1
      %s603 = scalar_lea.vmem %s8, %s602
      %p604 = pneg %p257
      %p605 = pneg %p254
      %p606 = scmp.lt.s32.totalorder %s31, 1
      %s607 = scalar_select %p606, %s31, 1
      %s608 = scalar_lea.vmem %s9, %s607
      %p609 = pneg %p283
      %p610 = pneg %p280
      %p611 = scmp.lt.s32.totalorder %s31, 1
      %s612 = scalar_select %p611, %s31, 1
      %s613 = scalar_lea.vmem %s10, %s612
      %p614 = pneg %p309
      %p615 = pneg %p306
      %p616 = scmp.lt.s32.totalorder %s31, 1
      %s617 = scalar_select %p616, %s31, 1
      %s618 = smul.addr %s617, 16
      %s619 = smul.addr %s618, 4
      %s620 = scalar_lea.vmem %s11, %s619
      %p621 = pneg %p335
      %p622 = pneg %p332
      %p623 = scmp.lt.s32.totalorder %s31, 1
      %s624 = scalar_select %p623, %s31, 1
      %s625 = scalar_lea.vmem %s12, %s624
      %p626 = pneg %p361
      %p627 = pneg %p358
      %p628 = scmp.lt.s32.totalorder %s31, 1
      %s629 = scalar_select %p628, %s31, 1
      %s630 = smul.addr %s629, 16
      %s631 = smul.addr %s630, 4
      %s632 = scalar_lea.vmem %s13, %s631
      %p633 = pneg %p387
      %p634 = pneg %p384
      %p635 = scmp.lt.s32.totalorder %s31, 1
      %s636 = scalar_select %p635, %s31, 1
      %s637 = scalar_lea.vmem %s14, %s636
      %p638 = pneg %p413
      %p639 = pneg %p410
      %p640 = pneg %p439
      %p641 = pneg %p436
      %p642 = scmp.lt.s32.totalorder %s30, 1
      %s643 = scalar_select %p642, %s30, 1
      %s644 = smul.addr %s643, 8
      %s645 = scalar_lea.vmem %s15, %s644
      %p646 = scmp.lt.s32.totalorder %s30, 1
      %s647 = scalar_select %p646, %s30, 1
      %s648 = smul.addr %s647, 6
      %s649 = smul.addr %s648, 2
      %s650 = scalar_lea.vmem %s0, %s649
      %p651 = scmp.lt.s32.totalorder %s31, 1
      %s652 = scalar_select %p651, %s31, 1
      %s653 = scalar_lea.vmem %s3, %s652
      %p654 = scmp.lt.s32.totalorder %s31, 1
      %s655 = scalar_select %p654, %s31, 1
      %s656 = scalar_lea.vmem %s4, %s655
      %p657 = scmp.lt.s32.totalorder %s31, 1
      %s658 = scalar_select %p657, %s31, 1
      %s659 = smul.addr %s658, 48
      %s660 = smul.addr %s659, 4
      %s661 = scalar_lea.vmem %s5, %s660
      %p662 = scmp.lt.s32.totalorder %s31, 1
      %s663 = scalar_select %p662, %s31, 1
      %s664 = smul.addr %s663, 3
      %s665 = scalar_lea.vmem %s6, %s664
      %p666 = scmp.lt.s32.totalorder %s31, 1
      %s667 = scalar_select %p666, %s31, 1
      %s668 = smul.addr %s667, 16
      %s669 = smul.addr %s668, 4
      %s670 = scalar_lea.vmem %s7, %s669
      %p671 = scmp.lt.s32.totalorder %s31, 1
      %s672 = scalar_select %p671, %s31, 1
      %s673 = scalar_lea.vmem %s8, %s672
      %p674 = scmp.lt.s32.totalorder %s31, 1
      %s675 = scalar_select %p674, %s31, 1
      %s676 = scalar_lea.vmem %s9, %s675
      %p677 = scmp.lt.s32.totalorder %s31, 1
      %s678 = scalar_select %p677, %s31, 1
      %s679 = scalar_lea.vmem %s10, %s678
      %p680 = scmp.lt.s32.totalorder %s31, 1
      %s681 = scalar_select %p680, %s31, 1
      %s682 = smul.addr %s681, 16
      %s683 = smul.addr %s682, 4
      %s684 = scalar_lea.vmem %s11, %s683
      %p685 = scmp.lt.s32.totalorder %s31, 1
      %s686 = scalar_select %p685, %s31, 1
      %s687 = scalar_lea.vmem %s12, %s686
      %p688 = scmp.lt.s32.totalorder %s31, 1
      %s689 = scalar_select %p688, %s31, 1
      %s690 = smul.addr %s689, 16
      %s691 = smul.addr %s690, 4
      %s692 = scalar_lea.vmem %s13, %s691
      %p693 = scmp.lt.s32.totalorder %s31, 1
      %s694 = scalar_select %p693, %s31, 1
      %s695 = scalar_lea.vmem %s14, %s694
      %p696 = scmp.lt.s32.totalorder %s30, 1
      %s697 = scalar_select %p696, %s30, 1
      %s698 = smul.addr %s697, 8
      %s699 = scalar_lea.vmem %s15, %s698
      %p701 = scmp.eq.s32.totalorder %s31, 0
      // Predicated region
      $region81: #{forward.2} parent=79 // pred_check
        %p702 = pneg %p701
      $region82: #{forward.2} parent=79 // pred_check_branch
        %704 = sbr.rel (%p702) target = $region84
      $region83: #{forward.2} parent=79 // pred_region
        %v705 = vld [vmem:[%s650] sm:$0xff]
        %v706 = vld [vmem:[%s650 + $0x8] sm:$0xf]
        %v707 = vld [vmem:[%s1] sm:$0xf]
        %v708 = vld [vmem:[%s1 + $0x4] sm:$0xf]
        %v709 = vld [vmem:[%s1 + $0x8] sm:$0xf]
        %v710 = vld [vmem:[%s1 + $0xc] sm:$0xf]
        %v711 = vld [vmem:[%s1 + $0x10] sm:$0xf]
        %v712 = vld [vmem:[%s1 + $0x14] sm:$0xf]
        %v713 = vld [vmem:[%s1 + $0x18] sm:$0xf]
        %v714 = vld [vmem:[%s1 + $0x1c] sm:$0xf]
        %v715 = vld [vmem:[%s1 + $0x20] sm:$0xf]
        %v716 = vld [vmem:[%s1 + $0x24] sm:$0xf]
        %v717 = vld [vmem:[%s1 + $0x28] sm:$0xf]
        %v718 = vld [vmem:[%s1 + $0x2c] sm:$0xf]
        %v719 = vld [vmem:[%s1 + $0x30] sm:$0xf]
        %v720 = vld [vmem:[%s1 + $0x34] sm:$0xf]
        %v721 = vld [vmem:[%s1 + $0x38] sm:$0xf]
        %v722 = vld [vmem:[%s1 + $0x3c] sm:$0xf]
        %v723 = vld [vmem:[%s1 + $0x40] sm:$0xf]
        %v724 = vld [vmem:[%s1 + $0x44] sm:$0xf]
        %v725 = vld [vmem:[%s1 + $0x48] sm:$0xf]
        %v726 = vld [vmem:[%s1 + $0x4c] sm:$0xf]
        %v727 = vld [vmem:[%s1 + $0x50] sm:$0xf]
        %v728 = vld [vmem:[%s1 + $0x54] sm:$0xf]
        %v729 = vld [vmem:[%s1 + $0x58] sm:$0xf]
        %v730 = vld [vmem:[%s1 + $0x5c] sm:$0xf]
        %v731 = vld [vmem:[%s1 + $0x60] sm:$0xf]
        %v732 = vld [vmem:[%s1 + $0x64] sm:$0xf]
        %v733 = vld [vmem:[%s1 + $0x68] sm:$0xf]
        %v734 = vld [vmem:[%s1 + $0x6c] sm:$0xf]
        %v735 = vld [vmem:[%s1 + $0x70] sm:$0xf]
        %v736 = vld [vmem:[%s1 + $0x74] sm:$0xf]
        %v737 = vld [vmem:[%s1 + $0x78] sm:$0xf]
        %v738 = vld [vmem:[%s1 + $0x7c] sm:$0xf]
        %v739 = vld [vmem:[%s1 + $0x80] sm:$0xf]
        %v740 = vld [vmem:[%s1 + $0x84] sm:$0xf]
        %v741 = vld [vmem:[%s1 + $0x88] sm:$0xf]
        %v742 = vld [vmem:[%s1 + $0x8c] sm:$0xf]
        %v743 = vld [vmem:[%s1 + $0x90] sm:$0xf]
        %v744 = vld [vmem:[%s1 + $0x94] sm:$0xf]
        %v745 = vld [vmem:[%s1 + $0x98] sm:$0xf]
        %v746 = vld [vmem:[%s1 + $0x9c] sm:$0xf]
        %v747 = vld [vmem:[%s1 + $0xa0] sm:$0xf]
        %v748 = vld [vmem:[%s1 + $0xa4] sm:$0xf]
        %v749 = vld [vmem:[%s1 + $0xa8] sm:$0xf]
        %v750 = vld [vmem:[%s1 + $0xac] sm:$0xf]
        %v751 = vld [vmem:[%s1 + $0xb0] sm:$0xf]
        %v752 = vld [vmem:[%s1 + $0xb4] sm:$0xf]
        %v753 = vld [vmem:[%s1 + $0xb8] sm:$0xf]
        %v754 = vld [vmem:[%s1 + $0xbc] sm:$0xf]
        %v755 = vld [vmem:[%s1 + $0xc0] sm:$0xf]
        %v756 = vld [vmem:[%s1 + $0xc4] sm:$0xf]
        %v757 = vld [vmem:[%s1 + $0xc8] sm:$0xf]
        %v758 = vld [vmem:[%s1 + $0xcc] sm:$0xf]
        %v759 = vld [vmem:[%s1 + $0xd0] sm:$0xf]
        %v760 = vld [vmem:[%s1 + $0xd4] sm:$0xf]
        %v761 = vld [vmem:[%s1 + $0xd8] sm:$0xf]
        %v762 = vld [vmem:[%s1 + $0xdc] sm:$0xf]
        %v763 = vld [vmem:[%s1 + $0xe0] sm:$0xf]
        %v764 = vld [vmem:[%s1 + $0xe4] sm:$0xf]
        %v765 = vld [vmem:[%s1 + $0xe8] sm:$0xf]
        %v766 = vld [vmem:[%s1 + $0xec] sm:$0xf]
        %v767 = vld [vmem:[%s1 + $0xf0] sm:$0xf]
        %v768 = vld [vmem:[%s1 + $0xf4] sm:$0xf]
        %v769 = vld [vmem:[%s1 + $0xf8] sm:$0xf]
        %v770 = vld [vmem:[%s1 + $0xfc] sm:$0xf]
        %v771 = vld [vmem:[%s1 + $0x100] sm:$0xf]
        %v772 = vld [vmem:[%s1 + $0x104] sm:$0xf]
        %v773 = vld [vmem:[%s1 + $0x108] sm:$0xf]
        %v774 = vld [vmem:[%s1 + $0x10c] sm:$0xf]
        %v775 = vld [vmem:[%s1 + $0x110] sm:$0xf]
        %v776 = vld [vmem:[%s1 + $0x114] sm:$0xf]
        %v777 = vld [vmem:[%s1 + $0x118] sm:$0xf]
        %v778 = vld [vmem:[%s1 + $0x11c] sm:$0xf]
        %v779 = vld [vmem:[%s1 + $0x120] sm:$0xf]
        %v780 = vld [vmem:[%s1 + $0x124] sm:$0xf]
        %v781 = vld [vmem:[%s1 + $0x128] sm:$0xf]
        %v782 = vld [vmem:[%s1 + $0x12c] sm:$0xf]
        %v783 = vld [vmem:[%s1 + $0x130] sm:$0xf]
        %v784 = vld [vmem:[%s1 + $0x134] sm:$0xf]
        %v785 = vld [vmem:[%s1 + $0x138] sm:$0xf]
        %v786 = vld [vmem:[%s1 + $0x13c] sm:$0xf]
        %v787 = vld [vmem:[%s1 + $0x140] sm:$0xf]
        %v788 = vld [vmem:[%s1 + $0x144] sm:$0xf]
        %v789 = vld [vmem:[%s1 + $0x148] sm:$0xf]
        %v790 = vld [vmem:[%s1 + $0x14c] sm:$0xf]
        %v791 = vld [vmem:[%s1 + $0x150] sm:$0xf]
        %v792 = vld [vmem:[%s1 + $0x154] sm:$0xf]
        %v793 = vld [vmem:[%s1 + $0x158] sm:$0xf]
        %v794 = vld [vmem:[%s1 + $0x15c] sm:$0xf]
        %v795 = vld [vmem:[%s1 + $0x160] sm:$0xf]
        %v796 = vld [vmem:[%s1 + $0x164] sm:$0xf]
        %v797 = vld [vmem:[%s1 + $0x168] sm:$0xf]
        %v798 = vld [vmem:[%s1 + $0x16c] sm:$0xf]
        %v799 = vld [vmem:[%s1 + $0x170] sm:$0xf]
        %v800 = vld [vmem:[%s1 + $0x174] sm:$0xf]
        %v801 = vld [vmem:[%s1 + $0x178] sm:$0xf]
        %v802 = vld [vmem:[%s1 + $0x17c] sm:$0xf]
        %v803 = vld [vmem:[%s2] sm:$0x1]
        %804 = vst [vmem:[%s699] sm:$0x1] %v803
        %v805 = vld [vmem:[%s2 + $0x1] sm:$0xf]
        %v808 = vcombine.high %v705, %v705
        %v810 = vunpack.c.l.s4 1983009808
        %v811 = vunpack.c.0.s8 %v810
        %v812 = vlaneseq
        %v813 = vshrl.u32 %v812, 7
        %v814 = vsub.s32 %v811, %v813
        %v815 = vrot.slane %v705, %v814
        %v817 = vunpack.c.l.s4 1983009808
        %v818 = vunpack.c.0.s8 %v817
        %v819 = vlaneseq
        %v820 = vshrl.u32 %v819, 7
        %v821 = vsub.s32 %v818, %v820
        %v822 = vrot.slane %v808, %v821
        %v823 = vcombine.high %v815, %v815
        %v824 = vcombine.high %v822, %v822
        %v826 = vunpack.c.l.s4 1983009808
        %v827 = vunpack.c.0.s8 %v826
        %v828 = vlaneseq
        %v829 = vshrl.u32 %v828, 7
        %v830 = vsub.s32 %v827, %v829
        %v831 = vrot.slane %v706, %v830
        %v832 = vcombine.high %v831, %v831
        %v935 = vunpack.c.l.b16 %v707
        %v936 = vunpack.c.l.b16 %v708
        %v937 = vunpack.c.l.b16 %v709
        %v938 = vunpack.c.l.b16 %v710
        %v939 = vunpack.c.l.b16 %v711
        %v940 = vunpack.c.l.b16 %v712
        %v941 = vunpack.c.l.b16 %v713
        %v942 = vunpack.c.l.b16 %v714
        %v943 = vunpack.c.l.b16 %v715
        %v944 = vunpack.c.l.b16 %v716
        %v945 = vunpack.c.l.b16 %v717
        %v946 = vunpack.c.l.b16 %v718
        %v947 = vunpack.c.l.b16 %v719
        %v948 = vunpack.c.l.b16 %v720
        %v949 = vunpack.c.l.b16 %v721
        %v950 = vunpack.c.l.b16 %v722
        %v951 = vunpack.c.l.b16 %v723
        %v952 = vunpack.c.l.b16 %v724
        %v953 = vunpack.c.l.b16 %v725
        %v954 = vunpack.c.l.b16 %v726
        %v955 = vunpack.c.l.b16 %v727
        %v956 = vunpack.c.l.b16 %v728
        %v957 = vunpack.c.l.b16 %v729
        %v958 = vunpack.c.l.b16 %v730
        %v959 = vunpack.c.l.b16 %v731
        %v960 = vunpack.c.l.b16 %v732
        %v961 = vunpack.c.l.b16 %v733
        %v962 = vunpack.c.l.b16 %v734
        %v963 = vunpack.c.l.b16 %v735
        %v964 = vunpack.c.l.b16 %v736
        %v965 = vunpack.c.l.b16 %v737
        %v966 = vunpack.c.l.b16 %v738
        %v967 = vunpack.c.l.b16 %v739
        %v968 = vunpack.c.l.b16 %v740
        %v969 = vunpack.c.l.b16 %v741
        %v970 = vunpack.c.l.b16 %v742
        %v971 = vunpack.c.l.b16 %v743
        %v972 = vunpack.c.l.b16 %v744
        %v973 = vunpack.c.l.b16 %v745
        %v974 = vunpack.c.l.b16 %v746
        %v975 = vunpack.c.l.b16 %v747
        %v976 = vunpack.c.l.b16 %v748
        %v977 = vunpack.c.l.b16 %v749
        %v978 = vunpack.c.l.b16 %v750
        %v979 = vunpack.c.l.b16 %v751
        %v980 = vunpack.c.l.b16 %v752
        %v981 = vunpack.c.l.b16 %v753
        %v982 = vunpack.c.l.b16 %v754
        %v983 = vunpack.c.l.b16 %v755
        %v984 = vunpack.c.l.b16 %v756
        %v985 = vunpack.c.l.b16 %v757
        %v986 = vunpack.c.l.b16 %v758
        %v987 = vunpack.c.l.b16 %v759
        %v988 = vunpack.c.l.b16 %v760
        %v989 = vunpack.c.l.b16 %v761
        %v990 = vunpack.c.l.b16 %v762
        %v991 = vunpack.c.l.b16 %v763
        %v992 = vunpack.c.l.b16 %v764
        %v993 = vunpack.c.l.b16 %v765
        %v994 = vunpack.c.l.b16 %v766
        %v995 = vunpack.c.l.b16 %v767
        %v996 = vunpack.c.l.b16 %v768
        %v997 = vunpack.c.l.b16 %v769
        %v998 = vunpack.c.l.b16 %v770
        %v999 = vunpack.c.l.b16 %v771
        %v1000 = vunpack.c.l.b16 %v772
        %v1001 = vunpack.c.l.b16 %v773
        %v1002 = vunpack.c.l.b16 %v774
        %v1003 = vunpack.c.l.b16 %v775
        %v1004 = vunpack.c.l.b16 %v776
        %v1005 = vunpack.c.l.b16 %v777
        %v1006 = vunpack.c.l.b16 %v778
        %v1007 = vunpack.c.l.b16 %v779
        %v1008 = vunpack.c.l.b16 %v780
        %v1009 = vunpack.c.l.b16 %v781
        %v1010 = vunpack.c.l.b16 %v782
        %v1011 = vunpack.c.l.b16 %v783
        %v1012 = vunpack.c.l.b16 %v784
        %v1013 = vunpack.c.l.b16 %v785
        %v1014 = vunpack.c.l.b16 %v786
        %v1015 = vunpack.c.l.b16 %v787
        %v1016 = vunpack.c.l.b16 %v788
        %v1017 = vunpack.c.l.b16 %v789
        %v1018 = vunpack.c.l.b16 %v790
        %v1019 = vunpack.c.l.b16 %v791
        %v1020 = vunpack.c.l.b16 %v792
        %v1021 = vunpack.c.l.b16 %v793
        %v1022 = vunpack.c.l.b16 %v794
        %v1023 = vunpack.c.l.b16 %v795
        %v1024 = vunpack.c.l.b16 %v796
        %v1025 = vunpack.c.l.b16 %v797
        %v1026 = vunpack.c.l.b16 %v798
        %v1027 = vunpack.c.l.b16 %v799
        %v1028 = vunpack.c.l.b16 %v800
        %v1029 = vunpack.c.l.b16 %v801
        %v1030 = vunpack.c.l.b16 %v802
        %v1031 = vpack.c.b16 %v936, %v935
        %v1032 = vpack.c.b16 %v938, %v937
        %v1033 = vpack.c.b16 %v940, %v939
        %v1034 = vpack.c.b16 %v942, %v941
        %v1035 = vpack.c.b16 %v944, %v943
        %v1036 = vpack.c.b16 %v946, %v945
        %v1037 = vpack.c.b16 %v948, %v947
        %v1038 = vpack.c.b16 %v950, %v949
        %v1039 = vpack.c.b16 %v952, %v951
        %v1040 = vpack.c.b16 %v954, %v953
        %v1041 = vpack.c.b16 %v956, %v955
        %v1042 = vpack.c.b16 %v958, %v957
        %v1043 = vpack.c.b16 %v960, %v959
        %v1044 = vpack.c.b16 %v962, %v961
        %v1045 = vpack.c.b16 %v964, %v963
        %v1046 = vpack.c.b16 %v966, %v965
        %v1047 = vpack.c.b16 %v968, %v967
        %v1048 = vpack.c.b16 %v970, %v969
        %v1049 = vpack.c.b16 %v972, %v971
        %v1050 = vpack.c.b16 %v974, %v973
        %v1051 = vpack.c.b16 %v976, %v975
        %v1052 = vpack.c.b16 %v978, %v977
        %v1053 = vpack.c.b16 %v980, %v979
        %v1054 = vpack.c.b16 %v982, %v981
        %v1055 = vpack.c.b16 %v984, %v983
        %v1056 = vpack.c.b16 %v986, %v985
        %v1057 = vpack.c.b16 %v988, %v987
        %v1058 = vpack.c.b16 %v990, %v989
        %v1059 = vpack.c.b16 %v992, %v991
        %v1060 = vpack.c.b16 %v994, %v993
        %v1061 = vpack.c.b16 %v996, %v995
        %v1062 = vpack.c.b16 %v998, %v997
        %v1063 = vpack.c.b16 %v1000, %v999
        %v1064 = vpack.c.b16 %v1002, %v1001
        %v1065 = vpack.c.b16 %v1004, %v1003
        %v1066 = vpack.c.b16 %v1006, %v1005
        %v1067 = vpack.c.b16 %v1008, %v1007
        %v1068 = vpack.c.b16 %v1010, %v1009
        %v1069 = vpack.c.b16 %v1012, %v1011
        %v1070 = vpack.c.b16 %v1014, %v1013
        %v1071 = vpack.c.b16 %v1016, %v1015
        %v1072 = vpack.c.b16 %v1018, %v1017
        %v1073 = vpack.c.b16 %v1020, %v1019
        %v1074 = vpack.c.b16 %v1022, %v1021
        %v1075 = vpack.c.b16 %v1024, %v1023
        %v1076 = vpack.c.b16 %v1026, %v1025
        %v1077 = vpack.c.b16 %v1028, %v1027
        %v1078 = vpack.c.b16 %v1030, %v1029
        %1127 = vmatprep.subr.bf16.mxu0 0
        %1128 = vmatpush1.bf16.msra.mxu0 %v1031
        %1129 = vmatprep.subr.bf16.mxu0 0
        %1130 = vmatpush1.bf16.msra.mxu0 %v1032
        %1131 = vmatprep.subr.bf16.mxu0 0
        %1132 = vmatpush1.bf16.msra.mxu0 %v1033
        %1133 = vmatprep.subr.bf16.mxu0 0
        %1134 = vmatpush1.bf16.msra.mxu0 %v1034
        %1135 = vmatprep.subr.bf16.mxu0 0
        %1136 = vmatpush1.bf16.msra.mxu0 %v1035
        %1137 = vmatprep.subr.bf16.mxu0 0
        %1138 = vmatpush1.bf16.msra.mxu0 %v1036
        %1139 = vmatprep.subr.bf16.mxu0 0
        %1140 = vmatpush1.bf16.msra.mxu0 %v1037
        %1141 = vmatprep.subr.bf16.mxu0 0
        %1142 = vmatpush1.bf16.msra.mxu0 %v1038
        %1143 = vmatprep.subr.bf16.mxu0 0
        %1144 = vmatpush1.bf16.msra.mxu0 %v1039
        %1145 = vmatprep.subr.bf16.mxu0 0
        %1146 = vmatpush1.bf16.msra.mxu0 %v1040
        %1147 = vmatprep.subr.bf16.mxu0 0
        %1148 = vmatpush1.bf16.msra.mxu0 %v1041
        %1149 = vmatprep.subr.bf16.mxu0 0
        %1150 = vmatpush1.bf16.msra.mxu0 %v1042
        %1151 = vmatprep.subr.bf16.mxu0 0
        %1152 = vmatpush1.bf16.msra.mxu0 %v1043
        %1153 = vmatprep.subr.bf16.mxu0 0
        %1154 = vmatpush1.bf16.msra.mxu0 %v1044
        %1155 = vmatprep.subr.bf16.mxu0 0
        %1156 = vmatpush1.bf16.msra.mxu0 %v1045
        %1157 = vmatprep.subr.bf16.mxu0 0
        %1158 = vmatpush1.bf16.msra.mxu0 %v1046
        %1159 = vmatprep.mubr.bf16.mxu0 %v823
        %1160 = vmatmul.mubr.bf16.gmra.mrb[0].mxu0 %v815
        %v1161 = vpop.f32.mrb[0].mxu0
        %v1162 = vadd.f32 %v805, %v1161
        %v1163 = vpop.f32.mrb[0].mxu0
        %v1164 = vpop.f32.mrb[0].mxu0
        %v1165 = vpop.f32.mrb[0].mxu0
        %1166 = vdwg.mxu0
        %1167 = vmatprep.subr.bf16.mxu0 0
        %1168 = vmatpush1.bf16.msra.mxu0 %v1047
        %1169 = vmatprep.subr.bf16.mxu0 0
        %1170 = vmatpush1.bf16.msra.mxu0 %v1048
        %1171 = vmatprep.subr.bf16.mxu0 0
        %1172 = vmatpush1.bf16.msra.mxu0 %v1049
        %1173 = vmatprep.subr.bf16.mxu0 0
        %1174 = vmatpush1.bf16.msra.mxu0 %v1050
        %1175 = vmatprep.subr.bf16.mxu0 0
        %1176 = vmatpush1.bf16.msra.mxu0 %v1051
        %1177 = vmatprep.subr.bf16.mxu0 0
        %1178 = vmatpush1.bf16.msra.mxu0 %v1052
        %1179 = vmatprep.subr.bf16.mxu0 0
        %1180 = vmatpush1.bf16.msra.mxu0 %v1053
        %1181 = vmatprep.subr.bf16.mxu0 0
        %1182 = vmatpush1.bf16.msra.mxu0 %v1054
        %1183 = vmatprep.subr.bf16.mxu0 0
        %1184 = vmatpush1.bf16.msra.mxu0 %v1055
        %1185 = vmatprep.subr.bf16.mxu0 0
        %1186 = vmatpush1.bf16.msra.mxu0 %v1056
        %1187 = vmatprep.subr.bf16.mxu0 0
        %1188 = vmatpush1.bf16.msra.mxu0 %v1057
        %1189 = vmatprep.subr.bf16.mxu0 0
        %1190 = vmatpush1.bf16.msra.mxu0 %v1058
        %1191 = vmatprep.subr.bf16.mxu0 0
        %1192 = vmatpush1.bf16.msra.mxu0 %v1059
        %1193 = vmatprep.subr.bf16.mxu0 0
        %1194 = vmatpush1.bf16.msra.mxu0 %v1060
        %1195 = vmatprep.subr.bf16.mxu0 0
        %1196 = vmatpush1.bf16.msra.mxu0 %v1061
        %1197 = vmatprep.subr.bf16.mxu0 0
        %1198 = vmatpush1.bf16.msra.mxu0 %v1062
        %1199 = vmatprep.mubr.bf16.mxu0 %v824
        %1200 = vmatmul.mubr.bf16.gmra.mrb[0].mxu0 %v822
        %v1201 = vpop.f32.mrb[0].mxu0
        %v1202 = vadd.f32 %v1162, %v1201
        %v1203 = vpop.f32.mrb[0].mxu0
        %v1204 = vpop.f32.mrb[0].mxu0
        %v1205 = vpop.f32.mrb[0].mxu0
        %1206 = vdwg.mxu0
        %1207 = vmatprep.subr.bf16.mxu0 0
        %1208 = vmatpush1.bf16.msra.mxu0 %v1063
        %1209 = vmatprep.subr.bf16.mxu0 0
        %1210 = vmatpush1.bf16.msra.mxu0 %v1064
        %1211 = vmatprep.subr.bf16.mxu0 0
        %1212 = vmatpush1.bf16.msra.mxu0 %v1065
        %1213 = vmatprep.subr.bf16.mxu0 0
        %1214 = vmatpush1.bf16.msra.mxu0 %v1066
        %1215 = vmatprep.subr.bf16.mxu0 0
        %1216 = vmatpush1.bf16.msra.mxu0 %v1067
        %1217 = vmatprep.subr.bf16.mxu0 0
        %1218 = vmatpush1.bf16.msra.mxu0 %v1068
        %1219 = vmatprep.subr.bf16.mxu0 0
        %1220 = vmatpush1.bf16.msra.mxu0 %v1069
        %1221 = vmatprep.subr.bf16.mxu0 0
        %1222 = vmatpush1.bf16.msra.mxu0 %v1070
        %1223 = vmatprep.subr.bf16.mxu0 0
        %1224 = vmatpush1.bf16.msra.mxu0 %v1071
        %1225 = vmatprep.subr.bf16.mxu0 0
        %1226 = vmatpush1.bf16.msra.mxu0 %v1072
        %1227 = vmatprep.subr.bf16.mxu0 0
        %1228 = vmatpush1.bf16.msra.mxu0 %v1073
        %1229 = vmatprep.subr.bf16.mxu0 0
        %1230 = vmatpush1.bf16.msra.mxu0 %v1074
        %1231 = vmatprep.subr.bf16.mxu0 0
        %1232 = vmatpush1.bf16.msra.mxu0 %v1075
        %1233 = vmatprep.subr.bf16.mxu0 0
        %1234 = vmatpush1.bf16.msra.mxu0 %v1076
        %1235 = vmatprep.subr.bf16.mxu0 0
        %1236 = vmatpush1.bf16.msra.mxu0 %v1077
        %1237 = vmatprep.subr.bf16.mxu0 0
        %1238 = vmatpush1.bf16.msra.mxu0 %v1078
        %1239 = vmatprep.mubr.bf16.mxu0 %v832
        %1240 = vmatmul.mubr.bf16.gmra.mrb[0].mxu0 %v831
        %v1241 = vpop.f32.mrb[0].mxu0
        %v1242 = vadd.f32 %v1202, %v1241
        %v1243 = vpop.f32.mrb[0].mxu0
        %v1244 = vpop.f32.mrb[0].mxu0
        %v1245 = vpop.f32.mrb[0].mxu0
        %1246 = vdwg.mxu0
        %1247 = vst [vmem:[%s699 + $0x1] sm:$0xf] %v1242
      $region84: #{forward.2} parent=79 // pred_fallthru
        _
      %v1248 = vld [vmem:[%s699] sm:$0x1f]
      %v1249 = vld [vmem:[%s653] sm:$0x1]
      %v1250 = vld [vmem:[%s656] sm:$0x1]
      %v1251 = vld [vmem:[%s661] sm:$0xff]
      %v1252 = vld [vmem:[%s661 + $0x8] sm:$0xf]
      %v1253 = vld [vmem:[%s661 + $0xc] sm:$0xff]
      %v1254 = vld [vmem:[%s661 + $0x14] sm:$0xf]
      %v1255 = vld [vmem:[%s661 + $0x18] sm:$0xff]
      %v1256 = vld [vmem:[%s661 + $0x20] sm:$0xf]
      %v1257 = vld [vmem:[%s661 + $0x24] sm:$0xff]
      %v1258 = vld [vmem:[%s661 + $0x2c] sm:$0xf]
      %v1259 = vld [vmem:[%s661 + $0x30] sm:$0xff]
      %v1260 = vld [vmem:[%s661 + $0x38] sm:$0xf]
      %v1261 = vld [vmem:[%s661 + $0x3c] sm:$0xff]
      %v1262 = vld [vmem:[%s661 + $0x44] sm:$0xf]
      %v1263 = vld [vmem:[%s661 + $0x48] sm:$0xff]
      %v1264 = vld [vmem:[%s661 + $0x50] sm:$0xf]
      %v1265 = vld [vmem:[%s661 + $0x54] sm:$0xff]
      %v1266 = vld [vmem:[%s661 + $0x5c] sm:$0xf]
      %v1267 = vld [vmem:[%s661 + $0x60] sm:$0xff]
      %v1268 = vld [vmem:[%s661 + $0x68] sm:$0xf]
      %v1269 = vld [vmem:[%s661 + $0x6c] sm:$0xff]
      %v1270 = vld [vmem:[%s661 + $0x74] sm:$0xf]
      %v1271 = vld [vmem:[%s661 + $0x78] sm:$0xff]
      %v1272 = vld [vmem:[%s661 + $0x80] sm:$0xf]
      %v1273 = vld [vmem:[%s661 + $0x84] sm:$0xff]
      %v1274 = vld [vmem:[%s661 + $0x8c] sm:$0xf]
      %v1275 = vld [vmem:[%s661 + $0x90] sm:$0xff]
      %v1276 = vld [vmem:[%s661 + $0x98] sm:$0xf]
      %v1277 = vld [vmem:[%s661 + $0x9c] sm:$0xff]
      %v1278 = vld [vmem:[%s661 + $0xa4] sm:$0xf]
      %v1279 = vld [vmem:[%s661 + $0xa8] sm:$0xff]
      %v1280 = vld [vmem:[%s661 + $0xb0] sm:$0xf]
      %v1281 = vld [vmem:[%s661 + $0xb4] sm:$0xff]
      %v1282 = vld [vmem:[%s661 + $0xbc] sm:$0xf]
      %v1283 = vld [vmem:[%s665] sm:$0x7]
      %v1284 = vld [vmem:[%s670] sm:$0xf]
      %v1285 = vld [vmem:[%s670 + $0x4] sm:$0xf]
      %v1286 = vld [vmem:[%s670 + $0x8] sm:$0xf]
      %v1287 = vld [vmem:[%s670 + $0xc] sm:$0xf]
      %v1288 = vld [vmem:[%s670 + $0x10] sm:$0xf]
      %v1289 = vld [vmem:[%s670 + $0x14] sm:$0xf]
      %v1290 = vld [vmem:[%s670 + $0x18] sm:$0xf]
      %v1291 = vld [vmem:[%s670 + $0x1c] sm:$0xf]
      %v1292 = vld [vmem:[%s670 + $0x20] sm:$0xf]
      %v1293 = vld [vmem:[%s670 + $0x24] sm:$0xf]
      %v1294 = vld [vmem:[%s670 + $0x28] sm:$0xf]
      %v1295 = vld [vmem:[%s670 + $0x2c] sm:$0xf]
      %v1296 = vld [vmem:[%s670 + $0x30] sm:$0xf]
      %v1297 = vld [vmem:[%s670 + $0x34] sm:$0xf]
      %v1298 = vld [vmem:[%s670 + $0x38] sm:$0xf]
      %v1299 = vld [vmem:[%s670 + $0x3c] sm:$0xf]
      %v1300 = vld [vmem:[%s673] sm:$0x1]
      %v1301 = vld [vmem:[%s676] sm:$0x1]
      %v1302 = vld [vmem:[%s679] sm:$0x1]
      %v1303 = vld [vmem:[%s684] sm:$0xf]
      %v1304 = vld [vmem:[%s684 + $0x4] sm:$0xf]
      %v1305 = vld [vmem:[%s684 + $0x8] sm:$0xf]
      %v1306 = vld [vmem:[%s684 + $0xc] sm:$0xf]
      %v1307 = vld [vmem:[%s684 + $0x10] sm:$0xf]
      %v1308 = vld [vmem:[%s684 + $0x14] sm:$0xf]
      %v1309 = vld [vmem:[%s684 + $0x18] sm:$0xf]
      %v1310 = vld [vmem:[%s684 + $0x1c] sm:$0xf]
      %v1311 = vld [vmem:[%s684 + $0x20] sm:$0xf]
      %v1312 = vld [vmem:[%s684 + $0x24] sm:$0xf]
      %v1313 = vld [vmem:[%s684 + $0x28] sm:$0xf]
      %v1314 = vld [vmem:[%s684 + $0x2c] sm:$0xf]
      %v1315 = vld [vmem:[%s684 + $0x30] sm:$0xf]
      %v1316 = vld [vmem:[%s684 + $0x34] sm:$0xf]
      %v1317 = vld [vmem:[%s684 + $0x38] sm:$0xf]
      %v1318 = vld [vmem:[%s684 + $0x3c] sm:$0xf]
      %v1319 = vld [vmem:[%s687] sm:$0x1]
      %v1320 = vld [vmem:[%s692] sm:$0xf]
      %v1321 = vld [vmem:[%s692 + $0x4] sm:$0xf]
      %v1322 = vld [vmem:[%s692 + $0x8] sm:$0xf]
      %v1323 = vld [vmem:[%s692 + $0xc] sm:$0xf]
      %v1324 = vld [vmem:[%s692 + $0x10] sm:$0xf]
      %v1325 = vld [vmem:[%s692 + $0x14] sm:$0xf]
      %v1326 = vld [vmem:[%s692 + $0x18] sm:$0xf]
      %v1327 = vld [vmem:[%s692 + $0x1c] sm:$0xf]
      %v1328 = vld [vmem:[%s692 + $0x20] sm:$0xf]
      %v1329 = vld [vmem:[%s692 + $0x24] sm:$0xf]
      %v1330 = vld [vmem:[%s692 + $0x28] sm:$0xf]
      %v1331 = vld [vmem:[%s692 + $0x2c] sm:$0xf]
      %v1332 = vld [vmem:[%s692 + $0x30] sm:$0xf]
      %v1333 = vld [vmem:[%s692 + $0x34] sm:$0xf]
      %v1334 = vld [vmem:[%s692 + $0x38] sm:$0xf]
      %v1335 = vld [vmem:[%s692 + $0x3c] sm:$0xf]
      %v1336 = vld [vmem:[%s695] sm:$0x1]
      %vm1337 = vcmask 1044480
      %v1338 = vsel %vm1337, %v1248, 0.0
      %1339 = vadd.xlane.f32.xlu0 %v1338
      %v1340 = vpop.xlane.xlu0 %1339
      %v1341 = vmul.f32 %v1248, %v1248
      %v1342 = vsel %vm1337, %v1341, 0.0
      %1343 = vadd.xlane.f32.xlu0 %v1342
      %v1344 = vpop.xlane.xlu0 %1343
      %v1345 = vmul.f32 %v1340, 0.03125
      %v1346 = vmul.f32 %v1344, 0.03125
      %v1347 = vmul.f32 %v1345, %v1345
      %v1348 = vsub.f32 %v1346, %v1347
      %v1349 = vsub.f32 %v1248, %v1345
      %v1350 = vadd.f32 %v1348, 1e-06
      %v1351 = vrsqrt.pop %v1350
      %v1352 = vmul.f32 %v1349, %v1351
      %v1354 = vlaneseq
      %v1355 = vshrl.u32 %v1354, 7
      %v1356 = vsub.s32 0, %v1355
      %v1357 = vrot.slane %v1249, %v1356
      %v1359 = vmul.f32 %v1352, %v1357
      %v1361 = vlaneseq
      %v1362 = vshrl.u32 %v1361, 7
      %v1363 = vsub.s32 0, %v1362
      %v1364 = vrot.slane %v1250, %v1363
      %v1366 = vadd.f32 %v1359, %v1364
      %v1367 = vpack.c.bf16 %v1366, %v1366
      %v1369 = vlaneseq
      %v1370 = vshrl.u32 %v1369, 7
      %v1371 = vsub.s32 0, %v1370
      %v1372 = vrot.slane %v1283, %v1371
      %v1373 = vlaneseq
      %v1374 = vshrl.u32 %v1373, 7
      %v1375 = vsub.s32 1, %v1374
      %v1376 = vrot.slane %v1283, %v1375
      %v1377 = vlaneseq
      %v1378 = vshrl.u32 %v1377, 7
      %v1379 = vsub.s32 2, %v1378
      %v1380 = vrot.slane %v1283, %v1379
      %v1416 = vunpack.c.l.b16 %v1251
      %v1417 = vunpack.c.h.b16 %v1251
      %v1418 = vunpack.c.l.b16 %v1252
      %v1419 = vunpack.c.l.b16 %v1253
      %v1420 = vunpack.c.h.b16 %v1253
      %v1421 = vunpack.c.l.b16 %v1254
      %v1422 = vunpack.c.l.b16 %v1255
      %v1423 = vunpack.c.h.b16 %v1255
      %v1424 = vunpack.c.l.b16 %v1256
      %v1425 = vunpack.c.l.b16 %v1257
      %v1426 = vunpack.c.h.b16 %v1257
      %v1427 = vunpack.c.l.b16 %v1258
      %v1428 = vunpack.c.l.b16 %v1259
      %v1429 = vunpack.c.h.b16 %v1259
      %v1430 = vunpack.c.l.b16 %v1260
      %v1431 = vunpack.c.l.b16 %v1261
      %v1432 = vunpack.c.h.b16 %v1261
      %v1433 = vunpack.c.l.b16 %v1262
      %v1434 = vunpack.c.l.b16 %v1263
      %v1435 = vunpack.c.h.b16 %v1263
      %v1436 = vunpack.c.l.b16 %v1264
      %v1437 = vunpack.c.l.b16 %v1265
      %v1438 = vunpack.c.h.b16 %v1265
      %v1439 = vunpack.c.l.b16 %v1266
      %v1440 = vunpack.c.l.b16 %v1267
      %v1441 = vunpack.c.h.b16 %v1267
      %v1442 = vunpack.c.l.b16 %v1268
      %v1443 = vunpack.c.l.b16 %v1269
      %v1444 = vunpack.c.h.b16 %v1269
      %v1445 = vunpack.c.l.b16 %v1270
      %v1446 = vunpack.c.l.b16 %v1271
      %v1447 = vunpack.c.h.b16 %v1271
      %v1448 = vunpack.c.l.b16 %v1272
      %v1449 = vunpack.c.l.b16 %v1273
      %v1450 = vunpack.c.h.b16 %v1273
      %v1451 = vunpack.c.l.b16 %v1274
      %v1452 = vunpack.c.l.b16 %v1275
      %v1453 = vunpack.c.h.b16 %v1275
      %v1454 = vunpack.c.l.b16 %v1276
      %v1455 = vunpack.c.l.b16 %v1277
      %v1456 = vunpack.c.h.b16 %v1277
      %v1457 = vunpack.c.l.b16 %v1278
      %v1458 = vunpack.c.l.b16 %v1279
      %v1459 = vunpack.c.h.b16 %v1279
      %v1460 = vunpack.c.l.b16 %v1280
      %v1461 = vunpack.c.l.b16 %v1281
      %v1462 = vunpack.c.h.b16 %v1281
      %v1463 = vunpack.c.l.b16 %v1282
      %v1464 = vpack.c.b16 %v1419, %v1416
      %v1465 = vpack.c.b16 %v1420, %v1417
      %v1466 = vpack.c.b16 %v1421, %v1418
      %v1467 = vpack.c.b16 %v1425, %v1422
      %v1468 = vpack.c.b16 %v1426, %v1423
      %v1469 = vpack.c.b16 %v1427, %v1424
      %v1470 = vpack.c.b16 %v1431, %v1428
      %v1471 = vpack.c.b16 %v1432, %v1429
      %v1472 = vpack.c.b16 %v1433, %v1430
      %v1473 = vpack.c.b16 %v1437, %v1434
      %v1474 = vpack.c.b16 %v1438, %v1435
      %v1475 = vpack.c.b16 %v1439, %v1436
      %v1476 = vpack.c.b16 %v1443, %v1440
      %v1477 = vpack.c.b16 %v1444, %v1441
      %v1478 = vpack.c.b16 %v1445, %v1442
      %v1479 = vpack.c.b16 %v1449, %v1446
      %v1480 = vpack.c.b16 %v1450, %v1447
      %v1481 = vpack.c.b16 %v1451, %v1448
      %v1482 = vpack.c.b16 %v1455, %v1452
      %v1483 = vpack.c.b16 %v1456, %v1453
      %v1484 = vpack.c.b16 %v1457, %v1454
      %v1485 = vpack.c.b16 %v1461, %v1458
      %v1486 = vpack.c.b16 %v1462, %v1459
      %v1487 = vpack.c.b16 %v1463, %v1460
      %1512 = vmatprep.subr.bf16.mxu0 %v1465
      %1513 = vmatpush1.bf16.msra.mxu0 %v1464
      %1514 = vmatprep.subr.bf16.mxu0 %v1468
      %1515 = vmatpush1.bf16.msra.mxu0 %v1467
      %1516 = vmatprep.subr.bf16.mxu0 %v1471
      %1517 = vmatpush1.bf16.msra.mxu0 %v1470
      %1518 = vmatprep.subr.bf16.mxu0 %v1474
      %1519 = vmatpush1.bf16.msra.mxu0 %v1473
      %1520 = vmatprep.subr.bf16.mxu0 %v1477
      %1521 = vmatpush1.bf16.msra.mxu0 %v1476
      %1522 = vmatprep.subr.bf16.mxu0 %v1480
      %1523 = vmatpush1.bf16.msra.mxu0 %v1479
      %1524 = vmatprep.subr.bf16.mxu0 %v1483
      %1525 = vmatpush1.bf16.msra.mxu0 %v1482
      %1526 = vmatprep.subr.bf16.mxu0 %v1486
      %1527 = vmatpush1.bf16.msra.mxu0 %v1485
      %1528 = vmatprep.subr.bf16.mxu0 0
      %1529 = vmatpush1.bf16.msra.mxu0 0
      %1530 = vmatprep.subr.bf16.mxu0 0
      %1531 = vmatpush1.bf16.msra.mxu0 0
      %1532 = vmatprep.subr.bf16.mxu0 0
      %1533 = vmatpush1.bf16.msra.mxu0 0
      %1534 = vmatprep.subr.bf16.mxu0 0
      %1535 = vmatpush1.bf16.msra.mxu0 0
      %1536 = vmatprep.subr.bf16.mxu0 0
      %1537 = vmatpush1.bf16.msra.mxu0 0
      %1538 = vmatprep.subr.bf16.mxu0 0
      %1539 = vmatpush1.bf16.msra.mxu0 0
      %1540 = vmatprep.subr.bf16.mxu0 0
      %1541 = vmatpush1.bf16.msra.mxu0 0
      %1542 = vmatprep.subr.bf16.mxu0 0
      %1543 = vmatpush1.bf16.msra.mxu0 0
      %1544 = vmatprep.mubr.bf16.mxu0 0
      %1545 = vmatmul.mubr.bf16.gmra.mrb[0].mxu0 %v1367
      %v1546 = vpop.f32.mrb[0].mxu0
      %v1547 = vadd.f32 %v1372, %v1546
      %v1548 = vpop.f32.mrb[0].mxu0
      %v1549 = vadd.f32 %v1376, %v1548
      %v1550 = vpop.f32.mrb[0].mxu0
      %v1551 = vpop.f32.mrb[0].mxu0
      %1552 = vdwg.mxu0
      %1553 = vmatprep.subr.bf16.mxu0 0
      %1554 = vmatpush1.bf16.msra.mxu0 %v1466
      %1555 = vmatprep.subr.bf16.mxu0 0
      %1556 = vmatpush1.bf16.msra.mxu0 %v1469
      %1557 = vmatprep.subr.bf16.mxu0 0
      %1558 = vmatpush1.bf16.msra.mxu0 %v1472
      %1559 = vmatprep.subr.bf16.mxu0 0
      %1560 = vmatpush1.bf16.msra.mxu0 %v1475
      %1561 = vmatprep.subr.bf16.mxu0 0
      %1562 = vmatpush1.bf16.msra.mxu0 %v1478
      %1563 = vmatprep.subr.bf16.mxu0 0
      %1564 = vmatpush1.bf16.msra.mxu0 %v1481
      %1565 = vmatprep.subr.bf16.mxu0 0
      %1566 = vmatpush1.bf16.msra.mxu0 %v1484
      %1567 = vmatprep.subr.bf16.mxu0 0
      %1568 = vmatpush1.bf16.msra.mxu0 %v1487
      %1569 = vmatprep.subr.bf16.mxu0 0
      %1570 = vmatpush1.bf16.msra.mxu0 0
      %1571 = vmatprep.subr.bf16.mxu0 0
      %1572 = vmatpush1.bf16.msra.mxu0 0
      %1573 = vmatprep.subr.bf16.mxu0 0
      %1574 = vmatpush1.bf16.msra.mxu0 0
      %1575 = vmatprep.subr.bf16.mxu0 0
      %1576 = vmatpush1.bf16.msra.mxu0 0
      %1577 = vmatprep.subr.bf16.mxu0 0
      %1578 = vmatpush1.bf16.msra.mxu0 0
      %1579 = vmatprep.subr.bf16.mxu0 0
      %1580 = vmatpush1.bf16.msra.mxu0 0
      %1581 = vmatprep.subr.bf16.mxu0 0
      %1582 = vmatpush1.bf16.msra.mxu0 0
      %1583 = vmatprep.subr.bf16.mxu0 0
      %1584 = vmatpush1.bf16.msra.mxu0 0
      %1585 = vmatprep.mubr.bf16.mxu0 0
      %1586 = vmatmul.mubr.bf16.gmra.mrb[0].mxu0 %v1367
      %v1587 = vpop.f32.mrb[0].mxu0
      %v1588 = vadd.f32 %v1380, %v1587
      %v1589 = vpop.f32.mrb[0].mxu0
      %v1590 = vpop.f32.mrb[0].mxu0
      %v1591 = vpop.f32.mrb[0].mxu0
      %1592 = vdwg.mxu0
      %v1593 = vpack.c.bf16 %v1549, %v1549
      %v1594 = vpack.c.bf16 %v1588, %v1588
      %v1595 = vlaneseq
      %v1596 = vand.u32 %v1595, 127
      %vm1597 = vcmp.ge.s32.totalorder %v1596, 0
      %vm1598 = vcmp.lt.s32.totalorder %v1596, 8
      %vm1599 = vmand %vm1597, %vm1598
      %v1600 = vsel %vm1599, 1.0, 0.0
      %v1601 = vmul.f32 %v1547, %v1600
      %v1602 = vpack.c.bf16 %v1601, %v1601
      %1603 = vmatprep.subr.bf16.mxu0 0
      %1604 = vmatpush1.bf16.xpose.msra.mxu0 %v1593
      %1605 = vmatprep.subr.bf16.mxu0 0
      %1606 = vmatpush1.bf16.xpose.msra.mxu0 0
      %1607 = vmatprep.subr.bf16.mxu0 0
      %1608 = vmatpush1.bf16.xpose.msra.mxu0 0
      %1609 = vmatprep.subr.bf16.mxu0 0
      %1610 = vmatpush1.bf16.xpose.msra.mxu0 0
      %1611 = vmatprep.subr.bf16.mxu0 0
      %1612 = vmatpush1.bf16.xpose.msra.mxu0 0
      %1613 = vmatprep.subr.bf16.mxu0 0
      %1614 = vmatpush1.bf16.xpose.msra.mxu0 0
      %1615 = vmatprep.subr.bf16.mxu0 0
      %1616 = vmatpush1.bf16.xpose.msra.mxu0 0
      %1617 = vmatprep.subr.bf16.mxu0 0
      %1618 = vmatpush1.bf16.xpose.msra.mxu0 0
      %1619 = vmatprep.subr.bf16.mxu0 0
      %1620 = vmatpush1.bf16.xpose.msra.mxu0 0
      %1621 = vmatprep.subr.bf16.mxu0 0
      %1622 = vmatpush1.bf16.xpose.msra.mxu0 0
      %1623 = vmatprep.subr.bf16.mxu0 0
      %1624 = vmatpush1.bf16.xpose.msra.mxu0 0
      %1625 = vmatprep.subr.bf16.mxu0 0
      %1626 = vmatpush1.bf16.xpose.msra.mxu0 0
      %1627 = vmatprep.subr.bf16.mxu0 0
      %1628 = vmatpush1.bf16.xpose.msra.mxu0 0
      %1629 = vmatprep.subr.bf16.mxu0 0
      %1630 = vmatpush1.bf16.xpose.msra.mxu0 0
      %1631 = vmatprep.subr.bf16.mxu0 0
      %1632 = vmatpush1.bf16.xpose.msra.mxu0 0
      %1633 = vmatprep.subr.bf16.mxu0 0
      %1634 = vmatpush1.bf16.xpose.msra.mxu0 0
      %1635 = vmatprep.mubr.bf16.mxu0 0
      %1636 = vmatmul.mubr.bf16.gmra.mrb[0].mxu0 %v1602
      %v1637 = vpop.f32.mrb[0].mxu0
      %v1638 = vadd.f32 0.0, %v1637
      %v1639 = vpop.f32.mrb[0].mxu0
      %v1640 = vpop.f32.mrb[0].mxu0
      %v1641 = vpop.f32.mrb[0].mxu0
      %1642 = vdwg.mxu0
      %vm1643 = vcmask 36864
      %v1644 = vsel %vm1643, %v1638, -inf
      %1645 = vmax.xlane.f32.xlu0 %v1644
      %v1646 = vpop.xlane.xlu0 %1645
      %v1647 = vsub.f32 %v1638, %v1646
      %v1648 = vmul.f32 %v1647, 1.442695
      %v1649 = vpow.pop %v1648
      %v1650 = vsel %vm1643, %v1649, 0.0
      %1651 = vadd.xlane.f32.xlu0 %v1650
      %v1652 = vpop.xlane.xlu0 %1651
      %v1653 = vrcp.pop %v1652
      %v1654 = vmul.f32 %v1649, %v1653
      %v1655 = vpack.c.bf16 %v1654, %v1654
      %vm1656 = vcmask 39936
      %v1658 = vsel %vm1656, %v1655, 0
      %vm1660 = vcmask 1041408
      %vm1661 = vcmask 1042432
      %v1662 = vsel %vm1660, 4294967295, 65535
      %v1663 = vsel %vm1661, %v1662, 0
      %v1665 = vand.u32 %v1594, %v1663
      %1667 = vmatprep.subr.bf16.mxu0 0
      %1668 = vmatpush1.bf16.msra.mxu0 %v1665
      %1669 = vmatprep.subr.bf16.mxu0 0
      %1670 = vmatpush1.bf16.msra.mxu0 0
      %1671 = vmatprep.subr.bf16.mxu0 0
      %1672 = vmatpush1.bf16.msra.mxu0 0
      %1673 = vmatprep.subr.bf16.mxu0 0
      %1674 = vmatpush1.bf16.msra.mxu0 0
      %1675 = vmatprep.subr.bf16.mxu0 0
      %1676 = vmatpush1.bf16.msra.mxu0 0
      %1677 = vmatprep.subr.bf16.mxu0 0
      %1678 = vmatpush1.bf16.msra.mxu0 0
      %1679 = vmatprep.subr.bf16.mxu0 0
      %1680 = vmatpush1.bf16.msra.mxu0 0
      %1681 = vmatprep.subr.bf16.mxu0 0
      %1682 = vmatpush1.bf16.msra.mxu0 0
      %1683 = vmatprep.subr.bf16.mxu0 0
      %1684 = vmatpush1.bf16.msra.mxu0 0
      %1685 = vmatprep.subr.bf16.mxu0 0
      %1686 = vmatpush1.bf16.msra.mxu0 0
      %1687 = vmatprep.subr.bf16.mxu0 0
      %1688 = vmatpush1.bf16.msra.mxu0 0
      %1689 = vmatprep.subr.bf16.mxu0 0
      %1690 = vmatpush1.bf16.msra.mxu0 0
      %1691 = vmatprep.subr.bf16.mxu0 0
      %1692 = vmatpush1.bf16.msra.mxu0 0
      %1693 = vmatprep.subr.bf16.mxu0 0
      %1694 = vmatpush1.bf16.msra.mxu0 0
      %1695 = vmatprep.subr.bf16.mxu0 0
      %1696 = vmatpush1.bf16.msra.mxu0 0
      %1697 = vmatprep.subr.bf16.mxu0 0
      %1698 = vmatpush1.bf16.msra.mxu0 0
      %1699 = vmatprep.mubr.bf16.mxu0 0
      %1700 = vmatmul.mubr.bf16.gmra.mrb[0].mxu0 %v1658
      %v1701 = vpop.f32.mrb[0].mxu0
      %v1702 = vadd.f32 0.0, %v1701
      %v1703 = vpop.f32.mrb[0].mxu0
      %v1704 = vpop.f32.mrb[0].mxu0
      %v1705 = vpop.f32.mrb[0].mxu0
      %1706 = vdwg.mxu0
      %v1707 = vmul.f32 %v1600, %v1702
      %v1708 = vadd.f32 %v1707, 0.0
      %vm1709 = vcmp.ge.s32.totalorder %v1596, 8
      %vm1710 = vcmp.lt.s32.totalorder %v1596, 16
      %vm1711 = vmand %vm1709, %vm1710
      %v1712 = vsel %vm1711, 1.0, 0.0
      %v1713 = vmul.f32 %v1547, %v1712
      %v1714 = vpack.c.bf16 %v1713, %v1713
      %1715 = vmatprep.subr.bf16.mxu0 0
      %1716 = vmatpush1.bf16.xpose.msra.mxu0 %v1593
      %1717 = vmatprep.subr.bf16.mxu0 0
      %1718 = vmatpush1.bf16.xpose.msra.mxu0 0
      %1719 = vmatprep.subr.bf16.mxu0 0
      %1720 = vmatpush1.bf16.xpose.msra.mxu0 0
      %1721 = vmatprep.subr.bf16.mxu0 0
      %1722 = vmatpush1.bf16.xpose.msra.mxu0 0
      %1723 = vmatprep.subr.bf16.mxu0 0
      %1724 = vmatpush1.bf16.xpose.msra.mxu0 0
      %1725 = vmatprep.subr.bf16.mxu0 0
      %1726 = vmatpush1.bf16.xpose.msra.mxu0 0
      %1727 = vmatprep.subr.bf16.mxu0 0
      %1728 = vmatpush1.bf16.xpose.msra.mxu0 0
      %1729 = vmatprep.subr.bf16.mxu0 0
      %1730 = vmatpush1.bf16.xpose.msra.mxu0 0
      %1731 = vmatprep.subr.bf16.mxu0 0
      %1732 = vmatpush1.bf16.xpose.msra.mxu0 0
      %1733 = vmatprep.subr.bf16.mxu0 0
      %1734 = vmatpush1.bf16.xpose.msra.mxu0 0
      %1735 = vmatprep.subr.bf16.mxu0 0
      %1736 = vmatpush1.bf16.xpose.msra.mxu0 0
      %1737 = vmatprep.subr.bf16.mxu0 0
      %1738 = vmatpush1.bf16.xpose.msra.mxu0 0
      %1739 = vmatprep.subr.bf16.mxu0 0
      %1740 = vmatpush1.bf16.xpose.msra.mxu0 0
      %1741 = vmatprep.subr.bf16.mxu0 0
      %1742 = vmatpush1.bf16.xpose.msra.mxu0 0
      %1743 = vmatprep.subr.bf16.mxu0 0
      %1744 = vmatpush1.bf16.xpose.msra.mxu0 0
      %1745 = vmatprep.subr.bf16.mxu0 0
      %1746 = vmatpush1.bf16.xpose.msra.mxu0 0
      %1747 = vmatprep.mubr.bf16.mxu0 0
      %1748 = vmatmul.mubr.bf16.gmra.mrb[0].mxu0 %v1714
      %v1749 = vpop.f32.mrb[0].mxu0
      %v1750 = vadd.f32 0.0, %v1749
      %v1751 = vpop.f32.mrb[0].mxu0
      %v1752 = vpop.f32.mrb[0].mxu0
      %v1753 = vpop.f32.mrb[0].mxu0
      %1754 = vdwg.mxu0
      %v1755 = vsel %vm1643, %v1750, -inf
      %1756 = vmax.xlane.f32.xlu0 %v1755
      %v1757 = vpop.xlane.xlu0 %1756
      %v1758 = vsub.f32 %v1750, %v1757
      %v1759 = vmul.f32 %v1758, 1.442695
      %v1760 = vpow.pop %v1759
      %v1761 = vsel %vm1643, %v1760, 0.0
      %1762 = vadd.xlane.f32.xlu0 %v1761
      %v1763 = vpop.xlane.xlu0 %1762
      %v1764 = vrcp.pop %v1763
      %v1765 = vmul.f32 %v1760, %v1764
      %v1766 = vpack.c.bf16 %v1765, %v1765
      %v1768 = vsel %vm1656, %v1766, 0
      %1770 = vmatprep.subr.bf16.mxu0 0
      %1771 = vmatpush1.bf16.msra.mxu0 %v1665
      %1772 = vmatprep.subr.bf16.mxu0 0
      %1773 = vmatpush1.bf16.msra.mxu0 0
      %1774 = vmatprep.subr.bf16.mxu0 0
      %1775 = vmatpush1.bf16.msra.mxu0 0
      %1776 = vmatprep.subr.bf16.mxu0 0
      %1777 = vmatpush1.bf16.msra.mxu0 0
      %1778 = vmatprep.subr.bf16.mxu0 0
      %1779 = vmatpush1.bf16.msra.mxu0 0
      %1780 = vmatprep.subr.bf16.mxu0 0
      %1781 = vmatpush1.bf16.msra.mxu0 0
      %1782 = vmatprep.subr.bf16.mxu0 0
      %1783 = vmatpush1.bf16.msra.mxu0 0
      %1784 = vmatprep.subr.bf16.mxu0 0
      %1785 = vmatpush1.bf16.msra.mxu0 0
      %1786 = vmatprep.subr.bf16.mxu0 0
      %1787 = vmatpush1.bf16.msra.mxu0 0
      %1788 = vmatprep.subr.bf16.mxu0 0
      %1789 = vmatpush1.bf16.msra.mxu0 0
      %1790 = vmatprep.subr.bf16.mxu0 0
      %1791 = vmatpush1.bf16.msra.mxu0 0
      %1792 = vmatprep.subr.bf16.mxu0 0
      %1793 = vmatpush1.bf16.msra.mxu0 0
      %1794 = vmatprep.subr.bf16.mxu0 0
      %1795 = vmatpush1.bf16.msra.mxu0 0
      %1796 = vmatprep.subr.bf16.mxu0 0
      %1797 = vmatpush1.bf16.msra.mxu0 0
      %1798 = vmatprep.subr.bf16.mxu0 0
      %1799 = vmatpush1.bf16.msra.mxu0 0
      %1800 = vmatprep.subr.bf16.mxu0 0
      %1801 = vmatpush1.bf16.msra.mxu0 0
      %1802 = vmatprep.mubr.bf16.mxu0 0
      %1803 = vmatmul.mubr.bf16.gmra.mrb[0].mxu0 %v1768
      %v1804 = vpop.f32.mrb[0].mxu0
      %v1805 = vadd.f32 0.0, %v1804
      %v1806 = vpop.f32.mrb[0].mxu0
      %v1807 = vpop.f32.mrb[0].mxu0
      %v1808 = vpop.f32.mrb[0].mxu0
      %1809 = vdwg.mxu0
      %v1810 = vmul.f32 %v1712, %v1805
      %v1811 = vadd.f32 %v1708, %v1810
      %vm1812 = vcmp.ge.s32.totalorder %v1596, 16
      %vm1813 = vcmp.lt.s32.totalorder %v1596, 24
      %vm1814 = vmand %vm1812, %vm1813
      %v1815 = vsel %vm1814, 1.0, 0.0
      %v1816 = vmul.f32 %v1547, %v1815
      %v1817 = vpack.c.bf16 %v1816, %v1816
      %1818 = vmatprep.subr.bf16.mxu0 0
      %1819 = vmatpush1.bf16.xpose.msra.mxu0 %v1593
      %1820 = vmatprep.subr.bf16.mxu0 0
      %1821 = vmatpush1.bf16.xpose.msra.mxu0 0
      %1822 = vmatprep.subr.bf16.mxu0 0
      %1823 = vmatpush1.bf16.xpose.msra.mxu0 0
      %1824 = vmatprep.subr.bf16.mxu0 0
      %1825 = vmatpush1.bf16.xpose.msra.mxu0 0
      %1826 = vmatprep.subr.bf16.mxu0 0
      %1827 = vmatpush1.bf16.xpose.msra.mxu0 0
      %1828 = vmatprep.subr.bf16.mxu0 0
      %1829 = vmatpush1.bf16.xpose.msra.mxu0 0
      %1830 = vmatprep.subr.bf16.mxu0 0
      %1831 = vmatpush1.bf16.xpose.msra.mxu0 0
      %1832 = vmatprep.subr.bf16.mxu0 0
      %1833 = vmatpush1.bf16.xpose.msra.mxu0 0
      %1834 = vmatprep.subr.bf16.mxu0 0
      %1835 = vmatpush1.bf16.xpose.msra.mxu0 0
      %1836 = vmatprep.subr.bf16.mxu0 0
      %1837 = vmatpush1.bf16.xpose.msra.mxu0 0
      %1838 = vmatprep.subr.bf16.mxu0 0
      %1839 = vmatpush1.bf16.xpose.msra.mxu0 0
      %1840 = vmatprep.subr.bf16.mxu0 0
      %1841 = vmatpush1.bf16.xpose.msra.mxu0 0
      %1842 = vmatprep.subr.bf16.mxu0 0
      %1843 = vmatpush1.bf16.xpose.msra.mxu0 0
      %1844 = vmatprep.subr.bf16.mxu0 0
      %1845 = vmatpush1.bf16.xpose.msra.mxu0 0
      %1846 = vmatprep.subr.bf16.mxu0 0
      %1847 = vmatpush1.bf16.xpose.msra.mxu0 0
      %1848 = vmatprep.subr.bf16.mxu0 0
      %1849 = vmatpush1.bf16.xpose.msra.mxu0 0
      %1850 = vmatprep.mubr.bf16.mxu0 0
      %1851 = vmatmul.mubr.bf16.gmra.mrb[0].mxu0 %v1817
      %v1852 = vpop.f32.mrb[0].mxu0
      %v1853 = vadd.f32 0.0, %v1852
      %v1854 = vpop.f32.mrb[0].mxu0
      %v1855 = vpop.f32.mrb[0].mxu0
      %v1856 = vpop.f32.mrb[0].mxu0
      %1857 = vdwg.mxu0
      %v1858 = vsel %vm1643, %v1853, -inf
      %1859 = vmax.xlane.f32.xlu0 %v1858
      %v1860 = vpop.xlane.xlu0 %1859
      %v1861 = vsub.f32 %v1853, %v1860
      %v1862 = vmul.f32 %v1861, 1.442695
      %v1863 = vpow.pop %v1862
      %v1864 = vsel %vm1643, %v1863, 0.0
      %1865 = vadd.xlane.f32.xlu0 %v1864
      %v1866 = vpop.xlane.xlu0 %1865
      %v1867 = vrcp.pop %v1866
      %v1868 = vmul.f32 %v1863, %v1867
      %v1869 = vpack.c.bf16 %v1868, %v1868
      %v1871 = vsel %vm1656, %v1869, 0
      %1873 = vmatprep.subr.bf16.mxu0 0
      %1874 = vmatpush1.bf16.msra.mxu0 %v1665
      %1875 = vmatprep.subr.bf16.mxu0 0
      %1876 = vmatpush1.bf16.msra.mxu0 0
      %1877 = vmatprep.subr.bf16.mxu0 0
      %1878 = vmatpush1.bf16.msra.mxu0 0
      %1879 = vmatprep.subr.bf16.mxu0 0
      %1880 = vmatpush1.bf16.msra.mxu0 0
      %1881 = vmatprep.subr.bf16.mxu0 0
      %1882 = vmatpush1.bf16.msra.mxu0 0
      %1883 = vmatprep.subr.bf16.mxu0 0
      %1884 = vmatpush1.bf16.msra.mxu0 0
      %1885 = vmatprep.subr.bf16.mxu0 0
      %1886 = vmatpush1.bf16.msra.mxu0 0
      %1887 = vmatprep.subr.bf16.mxu0 0
      %1888 = vmatpush1.bf16.msra.mxu0 0
      %1889 = vmatprep.subr.bf16.mxu0 0
      %1890 = vmatpush1.bf16.msra.mxu0 0
      %1891 = vmatprep.subr.bf16.mxu0 0
      %1892 = vmatpush1.bf16.msra.mxu0 0
      %1893 = vmatprep.subr.bf16.mxu0 0
      %1894 = vmatpush1.bf16.msra.mxu0 0
      %1895 = vmatprep.subr.bf16.mxu0 0
      %1896 = vmatpush1.bf16.msra.mxu0 0
      %1897 = vmatprep.subr.bf16.mxu0 0
      %1898 = vmatpush1.bf16.msra.mxu0 0
      %1899 = vmatprep.subr.bf16.mxu0 0
      %1900 = vmatpush1.bf16.msra.mxu0 0
      %1901 = vmatprep.subr.bf16.mxu0 0
      %1902 = vmatpush1.bf16.msra.mxu0 0
      %1903 = vmatprep.subr.bf16.mxu0 0
      %1904 = vmatpush1.bf16.msra.mxu0 0
      %1905 = vmatprep.mubr.bf16.mxu0 0
      %1906 = vmatmul.mubr.bf16.gmra.mrb[0].mxu0 %v1871
      %v1907 = vpop.f32.mrb[0].mxu0
      %v1908 = vadd.f32 0.0, %v1907
      %v1909 = vpop.f32.mrb[0].mxu0
      %v1910 = vpop.f32.mrb[0].mxu0
      %v1911 = vpop.f32.mrb[0].mxu0
      %1912 = vdwg.mxu0
      %v1913 = vmul.f32 %v1815, %v1908
      %v1914 = vadd.f32 %v1811, %v1913
      %vm1915 = vcmp.ge.s32.totalorder %v1596, 24
      %vm1916 = vcmp.lt.s32.totalorder %v1596, 32
      %vm1917 = vmand %vm1915, %vm1916
      %v1918 = vsel %vm1917, 1.0, 0.0
      %v1919 = vmul.f32 %v1547, %v1918
      %v1920 = vpack.c.bf16 %v1919, %v1919
      %1921 = vmatprep.subr.bf16.mxu0 0
      %1922 = vmatpush1.bf16.xpose.msra.mxu0 %v1593
      %1923 = vmatprep.subr.bf16.mxu0 0
      %1924 = vmatpush1.bf16.xpose.msra.mxu0 0
      %1925 = vmatprep.subr.bf16.mxu0 0
      %1926 = vmatpush1.bf16.xpose.msra.mxu0 0
      %1927 = vmatprep.subr.bf16.mxu0 0
      %1928 = vmatpush1.bf16.xpose.msra.mxu0 0
      %1929 = vmatprep.subr.bf16.mxu0 0
      %1930 = vmatpush1.bf16.xpose.msra.mxu0 0
      %1931 = vmatprep.subr.bf16.mxu0 0
      %1932 = vmatpush1.bf16.xpose.msra.mxu0 0
      %1933 = vmatprep.subr.bf16.mxu0 0
      %1934 = vmatpush1.bf16.xpose.msra.mxu0 0
      %1935 = vmatprep.subr.bf16.mxu0 0
      %1936 = vmatpush1.bf16.xpose.msra.mxu0 0
      %1937 = vmatprep.subr.bf16.mxu0 0
      %1938 = vmatpush1.bf16.xpose.msra.mxu0 0
      %1939 = vmatprep.subr.bf16.mxu0 0
      %1940 = vmatpush1.bf16.xpose.msra.mxu0 0
      %1941 = vmatprep.subr.bf16.mxu0 0
      %1942 = vmatpush1.bf16.xpose.msra.mxu0 0
      %1943 = vmatprep.subr.bf16.mxu0 0
      %1944 = vmatpush1.bf16.xpose.msra.mxu0 0
      %1945 = vmatprep.subr.bf16.mxu0 0
      %1946 = vmatpush1.bf16.xpose.msra.mxu0 0
      %1947 = vmatprep.subr.bf16.mxu0 0
      %1948 = vmatpush1.bf16.xpose.msra.mxu0 0
      %1949 = vmatprep.subr.bf16.mxu0 0
      %1950 = vmatpush1.bf16.xpose.msra.mxu0 0
      %1951 = vmatprep.subr.bf16.mxu0 0
      %1952 = vmatpush1.bf16.xpose.msra.mxu0 0
      %1953 = vmatprep.mubr.bf16.mxu0 0
      %1954 = vmatmul.mubr.bf16.gmra.mrb[0].mxu0 %v1920
      %v1955 = vpop.f32.mrb[0].mxu0
      %v1956 = vadd.f32 0.0, %v1955
      %v1957 = vpop.f32.mrb[0].mxu0
      %v1958 = vpop.f32.mrb[0].mxu0
      %v1959 = vpop.f32.mrb[0].mxu0
      %1960 = vdwg.mxu0
      %v1961 = vsel %vm1643, %v1956, -inf
      %1962 = vmax.xlane.f32.xlu0 %v1961
      %v1963 = vpop.xlane.xlu0 %1962
      %v1964 = vsub.f32 %v1956, %v1963
      %v1965 = vmul.f32 %v1964, 1.442695
      %v1966 = vpow.pop %v1965
      %v1967 = vsel %vm1643, %v1966, 0.0
      %1968 = vadd.xlane.f32.xlu0 %v1967
      %v1969 = vpop.xlane.xlu0 %1968
      %v1970 = vrcp.pop %v1969
      %v1971 = vmul.f32 %v1966, %v1970
      %v1972 = vpack.c.bf16 %v1971, %v1971
      %v1974 = vsel %vm1656, %v1972, 0
      %1976 = vmatprep.subr.bf16.mxu0 0
      %1977 = vmatpush1.bf16.msra.mxu0 %v1665
      %1978 = vmatprep.subr.bf16.mxu0 0
      %1979 = vmatpush1.bf16.msra.mxu0 0
      %1980 = vmatprep.subr.bf16.mxu0 0
      %1981 = vmatpush1.bf16.msra.mxu0 0
      %1982 = vmatprep.subr.bf16.mxu0 0
      %1983 = vmatpush1.bf16.msra.mxu0 0
      %1984 = vmatprep.subr.bf16.mxu0 0
      %1985 = vmatpush1.bf16.msra.mxu0 0
      %1986 = vmatprep.subr.bf16.mxu0 0
      %1987 = vmatpush1.bf16.msra.mxu0 0
      %1988 = vmatprep.subr.bf16.mxu0 0
      %1989 = vmatpush1.bf16.msra.mxu0 0
      %1990 = vmatprep.subr.bf16.mxu0 0
      %1991 = vmatpush1.bf16.msra.mxu0 0
      %1992 = vmatprep.subr.bf16.mxu0 0
      %1993 = vmatpush1.bf16.msra.mxu0 0
      %1994 = vmatprep.subr.bf16.mxu0 0
      %1995 = vmatpush1.bf16.msra.mxu0 0
      %1996 = vmatprep.subr.bf16.mxu0 0
      %1997 = vmatpush1.bf16.msra.mxu0 0
      %1998 = vmatprep.subr.bf16.mxu0 0
      %1999 = vmatpush1.bf16.msra.mxu0 0
      %2000 = vmatprep.subr.bf16.mxu0 0
      %2001 = vmatpush1.bf16.msra.mxu0 0
      %2002 = vmatprep.subr.bf16.mxu0 0
      %2003 = vmatpush1.bf16.msra.mxu0 0
      %2004 = vmatprep.subr.bf16.mxu0 0
      %2005 = vmatpush1.bf16.msra.mxu0 0
      %2006 = vmatprep.subr.bf16.mxu0 0
      %2007 = vmatpush1.bf16.msra.mxu0 0
      %2008 = vmatprep.mubr.bf16.mxu0 0
      %2009 = vmatmul.mubr.bf16.gmra.mrb[0].mxu0 %v1974
      %v2010 = vpop.f32.mrb[0].mxu0
      %v2011 = vadd.f32 0.0, %v2010
      %v2012 = vpop.f32.mrb[0].mxu0
      %v2013 = vpop.f32.mrb[0].mxu0
      %v2014 = vpop.f32.mrb[0].mxu0
      %2015 = vdwg.mxu0
      %v2016 = vmul.f32 %v1918, %v2011
      %v2017 = vadd.f32 %v1914, %v2016
      %v2018 = vpack.c.bf16 %v2017, %v2017
      %v2035 = vunpack.c.l.b16 %v1284
      %v2036 = vunpack.c.l.b16 %v1285
      %v2037 = vunpack.c.l.b16 %v1286
      %v2038 = vunpack.c.l.b16 %v1287
      %v2039 = vunpack.c.l.b16 %v1288
      %v2040 = vunpack.c.l.b16 %v1289
      %v2041 = vunpack.c.l.b16 %v1290
      %v2042 = vunpack.c.l.b16 %v1291
      %v2043 = vunpack.c.l.b16 %v1292
      %v2044 = vunpack.c.l.b16 %v1293
      %v2045 = vunpack.c.l.b16 %v1294
      %v2046 = vunpack.c.l.b16 %v1295
      %v2047 = vunpack.c.l.b16 %v1296
      %v2048 = vunpack.c.l.b16 %v1297
      %v2049 = vunpack.c.l.b16 %v1298
      %v2050 = vunpack.c.l.b16 %v1299
      %v2051 = vpack.c.b16 %v2036, %v2035
      %v2052 = vpack.c.b16 %v2038, %v2037
      %v2053 = vpack.c.b16 %v2040, %v2039
      %v2054 = vpack.c.b16 %v2042, %v2041
      %v2055 = vpack.c.b16 %v2044, %v2043
      %v2056 = vpack.c.b16 %v2046, %v2045
      %v2057 = vpack.c.b16 %v2048, %v2047
      %v2058 = vpack.c.b16 %v2050, %v2049
      %2067 = vmatprep.subr.bf16.mxu0 0
      %2068 = vmatpush1.bf16.msra.mxu0 %v2051
      %2069 = vmatprep.subr.bf16.mxu0 0
      %2070 = vmatpush1.bf16.msra.mxu0 %v2052
      %2071 = vmatprep.subr.bf16.mxu0 0
      %2072 = vmatpush1.bf16.msra.mxu0 %v2053
      %2073 = vmatprep.subr.bf16.mxu0 0
      %2074 = vmatpush1.bf16.msra.mxu0 %v2054
      %2075 = vmatprep.subr.bf16.mxu0 0
      %2076 = vmatpush1.bf16.msra.mxu0 %v2055
      %2077 = vmatprep.subr.bf16.mxu0 0
      %2078 = vmatpush1.bf16.msra.mxu0 %v2056
      %2079 = vmatprep.subr.bf16.mxu0 0
      %2080 = vmatpush1.bf16.msra.mxu0 %v2057
      %2081 = vmatprep.subr.bf16.mxu0 0
      %2082 = vmatpush1.bf16.msra.mxu0 %v2058
      %2083 = vmatprep.subr.bf16.mxu0 0
      %2084 = vmatpush1.bf16.msra.mxu0 0
      %2085 = vmatprep.subr.bf16.mxu0 0
      %2086 = vmatpush1.bf16.msra.mxu0 0
      %2087 = vmatprep.subr.bf16.mxu0 0
      %2088 = vmatpush1.bf16.msra.mxu0 0
      %2089 = vmatprep.subr.bf16.mxu0 0
      %2090 = vmatpush1.bf16.msra.mxu0 0
      %2091 = vmatprep.subr.bf16.mxu0 0
      %2092 = vmatpush1.bf16.msra.mxu0 0
      %2093 = vmatprep.subr.bf16.mxu0 0
      %2094 = vmatpush1.bf16.msra.mxu0 0
      %2095 = vmatprep.subr.bf16.mxu0 0
      %2096 = vmatpush1.bf16.msra.mxu0 0
      %2097 = vmatprep.subr.bf16.mxu0 0
      %2098 = vmatpush1.bf16.msra.mxu0 0
      %2099 = vmatprep.mubr.bf16.mxu0 0
      %2100 = vmatmul.mubr.bf16.gmra.mrb[0].mxu0 %v2018
      %v2101 = vpop.f32.mrb[0].mxu0
      %v2102 = vadd.f32 0.0, %v2101
      %v2103 = vpop.f32.mrb[0].mxu0
      %v2104 = vpop.f32.mrb[0].mxu0
      %v2105 = vpop.f32.mrb[0].mxu0
      %2106 = vdwg.mxu0
      %v2107 = vadd.f32 %v1248, %v2102
      %v2109 = vlaneseq
      %v2110 = vshrl.u32 %v2109, 7
      %v2111 = vsub.s32 0, %v2110
      %v2112 = vrot.slane %v1300, %v2111
      %v2114 = vadd.f32 %v2107, %v2112
      %v2115 = vsel %vm1337, %v2114, 0.0
      %2116 = vadd.xlane.f32.xlu0 %v2115
      %v2117 = vpop.xlane.xlu0 %2116
      %v2118 = vmul.f32 %v2114, %v2114
      %v2119 = vsel %vm1337, %v2118, 0.0
      %2120 = vadd.xlane.f32.xlu0 %v2119
      %v2121 = vpop.xlane.xlu0 %2120
      %v2122 = vmul.f32 %v2117, 0.03125
      %v2123 = vmul.f32 %v2121, 0.03125
      %v2124 = vmul.f32 %v2122, %v2122
      %v2125 = vsub.f32 %v2123, %v2124
      %v2126 = vsub.f32 %v2114, %v2122
      %v2127 = vadd.f32 %v2125, 1e-06
      %v2128 = vrsqrt.pop %v2127
      %v2129 = vmul.f32 %v2126, %v2128
      %v2131 = vlaneseq
      %v2132 = vshrl.u32 %v2131, 7
      %v2133 = vsub.s32 0, %v2132
      %v2134 = vrot.slane %v1301, %v2133
      %v2136 = vmul.f32 %v2129, %v2134
      %v2138 = vlaneseq
      %v2139 = vshrl.u32 %v2138, 7
      %v2140 = vsub.s32 0, %v2139
      %v2141 = vrot.slane %v1302, %v2140
      %v2143 = vadd.f32 %v2136, %v2141
      %v2144 = vpack.c.bf16 %v2143, %v2143
      %v2146 = vlaneseq
      %v2147 = vshrl.u32 %v2146, 7
      %v2148 = vsub.s32 0, %v2147
      %v2149 = vrot.slane %v1319, %v2148
      %v2167 = vunpack.c.l.b16 %v1303
      %v2168 = vunpack.c.l.b16 %v1304
      %v2169 = vunpack.c.l.b16 %v1305
      %v2170 = vunpack.c.l.b16 %v1306
      %v2171 = vunpack.c.l.b16 %v1307
      %v2172 = vunpack.c.l.b16 %v1308
      %v2173 = vunpack.c.l.b16 %v1309
      %v2174 = vunpack.c.l.b16 %v1310
      %v2175 = vunpack.c.l.b16 %v1311
      %v2176 = vunpack.c.l.b16 %v1312
      %v2177 = vunpack.c.l.b16 %v1313
      %v2178 = vunpack.c.l.b16 %v1314
      %v2179 = vunpack.c.l.b16 %v1315
      %v2180 = vunpack.c.l.b16 %v1316
      %v2181 = vunpack.c.l.b16 %v1317
      %v2182 = vunpack.c.l.b16 %v1318
      %v2183 = vpack.c.b16 %v2168, %v2167
      %v2184 = vpack.c.b16 %v2170, %v2169
      %v2185 = vpack.c.b16 %v2172, %v2171
      %v2186 = vpack.c.b16 %v2174, %v2173
      %v2187 = vpack.c.b16 %v2176, %v2175
      %v2188 = vpack.c.b16 %v2178, %v2177
      %v2189 = vpack.c.b16 %v2180, %v2179
      %v2190 = vpack.c.b16 %v2182, %v2181
      %2199 = vmatprep.subr.bf16.mxu0 0
      %2200 = vmatpush1.bf16.msra.mxu0 %v2183
      %2201 = vmatprep.subr.bf16.mxu0 0
      %2202 = vmatpush1.bf16.msra.mxu0 %v2184
      %2203 = vmatprep.subr.bf16.mxu0 0
      %2204 = vmatpush1.bf16.msra.mxu0 %v2185
      %2205 = vmatprep.subr.bf16.mxu0 0
      %2206 = vmatpush1.bf16.msra.mxu0 %v2186
      %2207 = vmatprep.subr.bf16.mxu0 0
      %2208 = vmatpush1.bf16.msra.mxu0 %v2187
      %2209 = vmatprep.subr.bf16.mxu0 0
      %2210 = vmatpush1.bf16.msra.mxu0 %v2188
      %2211 = vmatprep.subr.bf16.mxu0 0
      %2212 = vmatpush1.bf16.msra.mxu0 %v2189
      %2213 = vmatprep.subr.bf16.mxu0 0
      %2214 = vmatpush1.bf16.msra.mxu0 %v2190
      %2215 = vmatprep.subr.bf16.mxu0 0
      %2216 = vmatpush1.bf16.msra.mxu0 0
      %2217 = vmatprep.subr.bf16.mxu0 0
      %2218 = vmatpush1.bf16.msra.mxu0 0
      %2219 = vmatprep.subr.bf16.mxu0 0
      %2220 = vmatpush1.bf16.msra.mxu0 0
      %2221 = vmatprep.subr.bf16.mxu0 0
      %2222 = vmatpush1.bf16.msra.mxu0 0
      %2223 = vmatprep.subr.bf16.mxu0 0
      %2224 = vmatpush1.bf16.msra.mxu0 0
      %2225 = vmatprep.subr.bf16.mxu0 0
      %2226 = vmatpush1.bf16.msra.mxu0 0
      %2227 = vmatprep.subr.bf16.mxu0 0
      %2228 = vmatpush1.bf16.msra.mxu0 0
      %2229 = vmatprep.subr.bf16.mxu0 0
      %2230 = vmatpush1.bf16.msra.mxu0 0
      %2231 = vmatprep.mubr.bf16.mxu0 0
      %2232 = vmatmul.mubr.bf16.gmra.mrb[0].mxu0 %v2144
      %v2233 = vpop.f32.mrb[0].mxu0
      %v2234 = vadd.f32 %v2149, %v2233
      %v2235 = vpop.f32.mrb[0].mxu0
      %v2236 = vpop.f32.mrb[0].mxu0
      %v2237 = vpop.f32.mrb[0].mxu0
      %2238 = vdwg.mxu0
      %v2239 = vmul.f32 %v2234, %v2234
      %v2240 = vmul.f32 %v2234, %v2239
      %v2241 = vmul.f32 %v2240, 0.044715
      %v2242 = vadd.f32 %v2234, %v2241
      %v2243 = vmul.f32 %v2242, 0.7978846
      %v2244 = vtanh.pop %v2243
      %v2245 = vadd.f32 %v2244, 1.0
      %v2246 = vmul.f32 %v2245, 0.5
      %v2247 = vmul.f32 %v2234, %v2246
      %v2248 = vpack.c.bf16 %v2247, %v2247
      %v2265 = vunpack.c.l.b16 %v1320
      %v2266 = vunpack.c.l.b16 %v1321
      %v2267 = vunpack.c.l.b16 %v1322
      %v2268 = vunpack.c.l.b16 %v1323
      %v2269 = vunpack.c.l.b16 %v1324
      %v2270 = vunpack.c.l.b16 %v1325
      %v2271 = vunpack.c.l.b16 %v1326
      %v2272 = vunpack.c.l.b16 %v1327
      %v2273 = vunpack.c.l.b16 %v1328
      %v2274 = vunpack.c.l.b16 %v1329
      %v2275 = vunpack.c.l.b16 %v1330
      %v2276 = vunpack.c.l.b16 %v1331
      %v2277 = vunpack.c.l.b16 %v1332
      %v2278 = vunpack.c.l.b16 %v1333
      %v2279 = vunpack.c.l.b16 %v1334
      %v2280 = vunpack.c.l.b16 %v1335
      %v2281 = vpack.c.b16 %v2266, %v2265
      %v2282 = vpack.c.b16 %v2268, %v2267
      %v2283 = vpack.c.b16 %v2270, %v2269
      %v2284 = vpack.c.b16 %v2272, %v2271
      %v2285 = vpack.c.b16 %v2274, %v2273
      %v2286 = vpack.c.b16 %v2276, %v2275
      %v2287 = vpack.c.b16 %v2278, %v2277
      %v2288 = vpack.c.b16 %v2280, %v2279
      %2297 = vmatprep.subr.bf16.mxu0 0
      %2298 = vmatpush1.bf16.msra.mxu0 %v2281
      %2299 = vmatprep.subr.bf16.mxu0 0
      %2300 = vmatpush1.bf16.msra.mxu0 %v2282
      %2301 = vmatprep.subr.bf16.mxu0 0
      %2302 = vmatpush1.bf16.msra.mxu0 %v2283
      %2303 = vmatprep.subr.bf16.mxu0 0
      %2304 = vmatpush1.bf16.msra.mxu0 %v2284
      %2305 = vmatprep.subr.bf16.mxu0 0
      %2306 = vmatpush1.bf16.msra.mxu0 %v2285
      %2307 = vmatprep.subr.bf16.mxu0 0
      %2308 = vmatpush1.bf16.msra.mxu0 %v2286
      %2309 = vmatprep.subr.bf16.mxu0 0
      %2310 = vmatpush1.bf16.msra.mxu0 %v2287
      %2311 = vmatprep.subr.bf16.mxu0 0
      %2312 = vmatpush1.bf16.msra.mxu0 %v2288
      %2313 = vmatprep.subr.bf16.mxu0 0
      %2314 = vmatpush1.bf16.msra.mxu0 0
      %2315 = vmatprep.subr.bf16.mxu0 0
      %2316 = vmatpush1.bf16.msra.mxu0 0
      %2317 = vmatprep.subr.bf16.mxu0 0
      %2318 = vmatpush1.bf16.msra.mxu0 0
      %2319 = vmatprep.subr.bf16.mxu0 0
      %2320 = vmatpush1.bf16.msra.mxu0 0
      %2321 = vmatprep.subr.bf16.mxu0 0
      %2322 = vmatpush1.bf16.msra.mxu0 0
      %2323 = vmatprep.subr.bf16.mxu0 0
      %2324 = vmatpush1.bf16.msra.mxu0 0
      %2325 = vmatprep.subr.bf16.mxu0 0
      %2326 = vmatpush1.bf16.msra.mxu0 0
      %2327 = vmatprep.subr.bf16.mxu0 0
      %2328 = vmatpush1.bf16.msra.mxu0 0
      %2329 = vmatprep.mubr.bf16.mxu0 0
      %2330 = vmatmul.mubr.bf16.gmra.mrb[0].mxu0 %v2248
      %v2331 = vpop.f32.mrb[0].mxu0
      %v2332 = vadd.f32 0.0, %v2331
      %v2333 = vpop.f32.mrb[0].mxu0
      %v2334 = vpop.f32.mrb[0].mxu0
      %v2335 = vpop.f32.mrb[0].mxu0
      %2336 = vdwg.mxu0
      %v2337 = vadd.f32 %v2114, %v2332
      %v2339 = vlaneseq
      %v2340 = vshrl.u32 %v2339, 7
      %v2341 = vsub.s32 0, %v2340
      %v2342 = vrot.slane %v1336, %v2341
      %v2344 = vadd.f32 %v2337, %v2342
      %2345 = vst [vmem:[%s699] sm:$0x1f] %v2344
      %p2346 = scmp.lt.s32.totalorder %s30, 1
      %s2347 = scalar_select %p2346, %s30, 1
      %s2348 = smul.addr %s2347, 8
      %s2349 = scalar_lea.vmem %s15, %s2348
      // Predicated region
      $region85: #{forward.2} parent=79 // pred_check
        %p2350 = pneg %p436
      $region86: #{forward.2} parent=79 // pred_check_branch
        %2352 = sbr.rel (%p2350) target = $region88
      $region87: #{forward.2} parent=79 // pred_region
        _
      $region88: #{forward.2} parent=79 // pred_fallthru
        _
    $region80: #{forward.2} parent=5 // pred_fallthru
      _
    %p2353 = scmp.le.s32.totalorder 2, %s21
    // Predicated region
    $region89: #{forward.2} parent=5 // pred_check
      %p2354 = pneg %p2353
    $region90: #{forward.2} parent=5 // pred_check_branch
      %2356 = sbr.rel (%p2354) target = $region92
    $region91: #{forward.2} parent=5 // pred_region
      %s2357 = ssub.s32 %s21, 2
      // Predicated region
      $region93: #{forward.2} parent=91 // pred_check
        %p2358 = pneg %p442
      $region94: #{forward.2} parent=91 // pred_check_branch
        %2360 = sbr.rel (%p2358) target = $region96
      $region95: #{forward.2} parent=91 // pred_region
        %p2361 = scmp.lt.s32.totalorder %s32, 1
        %s2362 = scalar_select %p2361, %s32, 1
        %s2363 = smul.addr %s2362, 8
        %s2364 = scalar_lea.vmem %s15, %s2363
      $region96: #{forward.2} parent=91 // pred_fallthru
        _
    $region92: #{forward.2} parent=5 // pred_fallthru
      _
  $region6: #{forward.2} parent=0 // loop_footer
    %s25 = sadd.s32 1, %s21
  $region7: #{forward.2} parent=0 // loop_footer_branch
    %20 = sbr.rel target = $region3
  $region8: #{forward.2} parent=0 // loop_exit
    _

// kernel: forward.3
$region0: #{forward.3}
  #allocation0 [shape = 'u32[]', space=smem, size = 0x4, offset = 0x4, fixed_abs, tag = 'smem constant byte address 0x4 - core index']
  #allocation1 [shape = 'u32[144,128]{1,0:T(1,128)}', space=vmem, size = 0x12000, scoped, tag = 'internal scratch']
  %s0 = inlined_call_operand.vmem [shape: f32[2,5,128], index: 0, kind: input, shape index: {}]
  %s1 = inlined_call_operand.vmem [shape: bf16[4,768], index: 1, kind: input, shape index: {}]
  %s2 = inlined_call_operand.vmem [shape: bf16[768,128], index: 2, kind: input, shape index: {}]
  %s3 = inlined_call_operand.vmem [shape: f32[1,128], index: 3, kind: input, shape index: {}]
  %s4 = inlined_call_operand.vmem [shape: f32[1,128], index: 4, kind: input, shape index: {}]
  %s5 = inlined_call_operand.vmem [shape: f32[1,128], index: 5, kind: input, shape index: {}]
  %s6 = inlined_call_operand.vmem [shape: f32[1,128], index: 6, kind: input, shape index: {}]
  %s7 = inlined_call_operand.vmem [shape: f32[1,128], index: 7, kind: input, shape index: {}]
  %s8 = inlined_call_operand.vmem [shape: bf16[128,384], index: 8, kind: input, shape index: {}]
  %s9 = inlined_call_operand.vmem [shape: f32[1,384], index: 9, kind: input, shape index: {}]
  %s10 = inlined_call_operand.vmem [shape: bf16[128,128], index: 10, kind: input, shape index: {}]
  %s11 = inlined_call_operand.vmem [shape: f32[1,128], index: 11, kind: input, shape index: {}]
  %s12 = inlined_call_operand.vmem [shape: f32[1,128], index: 12, kind: input, shape index: {}]
  %s13 = inlined_call_operand.vmem [shape: f32[1,128], index: 13, kind: input, shape index: {}]
  %s14 = inlined_call_operand.vmem [shape: bf16[128,128], index: 14, kind: input, shape index: {}]
  %s15 = inlined_call_operand.vmem [shape: f32[1,128], index: 15, kind: input, shape index: {}]
  %s16 = inlined_call_operand.vmem [shape: bf16[128,128], index: 16, kind: input, shape index: {}]
  %s17 = inlined_call_operand.vmem [shape: f32[1,128], index: 17, kind: input, shape index: {}]
  %s18 = inlined_call_operand.vmem [shape: f32[1,128], index: 18, kind: input, shape index: {}]
  %s19 = inlined_call_operand.vmem [shape: f32[1,128], index: 19, kind: input, shape index: {}]
  %s20 = inlined_call_operand.vmem [shape: f32[4,128], index: 20, kind: input, shape index: {}]
  %s21 = inlined_call_operand.vmem [shape: f32[4,1], index: 21, kind: input, shape index: {}]
  %s22 = inlined_call_operand.vmem [shape: f32[4,1], index: 22, kind: input, shape index: {}]
  %s23 = inlined_call_operand.vmem [shape: f32[2,9,128], index: 23, kind: output, shape index: {0}]
  %s24 = inlined_call_operand.vmem [shape: f32[2,4,128], index: 24, kind: output, shape index: {1}]
  %25 = xla_tuple %s23, %s24
  %s26 = sld [smem:[#allocation0]]
  $region133: #{forward.3} parent=0
    _
  %s28 = ssub.s32 1, %s26
  %s29 = scalar_select 0, %s28, %s26
  loop: start=0, step=1, limit=4
  $region2: #{forward.3} parent=0 // loop_pre_header
    _
  $region3: #{forward.3} parent=0 // loop_header
    %s31 = sphi 0, %s35
    %p32 = scmp.ge.s32.totalorder %s31, 4
    %s41 = sphi 0, %s43
    %s44 = sphi 0, %s41
    %s45 = sphi 0, %s44
    %s61 = sphi 0, %s45
    %s65 = sphi 0, %s65
    %s67 = sphi 0, %s65
    %s68 = sphi 0, %s67
    %s82 = sphi 0, %s68
    %s86 = sphi 0, %s86
    %s88 = sphi 0, %s86
    %s89 = sphi 0, %s88
    %s103 = sphi 0, %s89
    %s107 = sphi 0, %s107
    %s109 = sphi 0, %s107
    %s110 = sphi 0, %s109
    %s124 = sphi 0, %s110
    %s128 = sphi 0, %s128
    %s130 = sphi 0, %s128
    %s131 = sphi 0, %s130
    %s145 = sphi 0, %s131
    %s149 = sphi 0, %s149
    %s151 = sphi 0, %s149
    %s152 = sphi 0, %s151
    %s166 = sphi 0, %s152
    %s170 = sphi 0, %s170
    %s172 = sphi 0, %s170
    %s173 = sphi 0, %s172
    %s187 = sphi 0, %s173
    %s191 = sphi 0, %s191
    %s193 = sphi 0, %s191
    %s194 = sphi 0, %s193
    %s208 = sphi 0, %s194
    %s212 = sphi 0, %s212
    %s214 = sphi 0, %s212
    %s215 = sphi 0, %s214
    %s229 = sphi 0, %s215
    %s233 = sphi 0, %s233
    %s235 = sphi 0, %s233
    %s236 = sphi 0, %s235
    %s250 = sphi 0, %s236
    %s254 = sphi 0, %s254
    %s256 = sphi 0, %s254
    %s257 = sphi 0, %s256
    %s271 = sphi 0, %s257
    %s275 = sphi 0, %s275
    %s277 = sphi 0, %s275
    %s278 = sphi 0, %s277
    %s292 = sphi 0, %s278
    %s296 = sphi 0, %s296
    %s298 = sphi 0, %s296
    %s299 = sphi 0, %s298
    %s313 = sphi 0, %s299
    %s317 = sphi 0, %s317
    %s319 = sphi 0, %s317
    %s320 = sphi 0, %s319
    %s334 = sphi 0, %s320
    %s338 = sphi 0, %s338
    %s340 = sphi 0, %s338
    %s341 = sphi 0, %s340
    %s355 = sphi 0, %s341
    %s359 = sphi 0, %s359
    %s361 = sphi 0, %s359
    %s362 = sphi 0, %s361
    %s376 = sphi 0, %s362
    %s380 = sphi 0, %s380
    %s382 = sphi 0, %s380
    %s383 = sphi 0, %s382
    %s397 = sphi 0, %s383
    %s401 = sphi 0, %s401
    %s403 = sphi 0, %s401
    %s404 = sphi 0, %s403
    %s418 = sphi 0, %s404
    %s422 = sphi 0, %s422
    %s424 = sphi 0, %s422
    %s425 = sphi 0, %s424
    %s439 = sphi 0, %s425
    %s443 = sphi 0, %s443
    %s445 = sphi 0, %s443
    %s446 = sphi 0, %s445
    %s460 = sphi 0, %s446
    %s464 = sphi 0, %s464
    %s466 = sphi 0, %s464
    %s467 = sphi 0, %s466
    %s481 = sphi 0, %s467
    %s485 = sphi 0, %s485
    %s487 = sphi 0, %s485
    %s488 = sphi 0, %s487
    %s502 = sphi 0, %s488
    %s506 = sphi 0, %s506
    %s508 = sphi 0, %s506
    %s509 = sphi 0, %s508
    %s523 = sphi 0, %s509
    %s529 = sphi 0, %s531
    %s532 = sphi 0, %s529
    %s533 = sphi 0, %s532
    %s549 = sphi 0, %s533
    %s555 = sphi 0, %s557
    %s558 = sphi 0, %s555
    %s559 = sphi 0, %s558
    %s575 = sphi 0, %s559
  $region4: #{forward.3} parent=0 // loop_header_branch
    %34 = sbr.rel (%p32) target = $region8
  $region5: #{forward.3} parent=0 // loop_body
    %s36 = ssub.s32 %s31, 1
    %s37 = ssub.s32 %s31, 2
    %s38 = sadd.s32 %s31, 1
    %s39 = ssub.s32 %s31, %s38
    %p40 = scmp.eq.s32.totalorder %s39, 0
    %s42 = sadd.s32 %s41, 1
    %s43 = scalar_select %p40, %s41, %s42
    %p46 = pneg %p40
    %p47 = scmp.eq.s32.totalorder %s31, 1
    %p48 = por %p46, %p47
    %p49 = scmp.ne.s32.totalorder %s41, %s44
    %p50 = scmp.eq.s32.totalorder %s31, 0
    %p51 = por %p49, %p50
    %p52 = scmp.ne.s32.totalorder %s41, %s44
    %p53 = scmp.eq.s32.totalorder %s36, 1
    %p54 = por %p52, %p53
    %p55 = scmp.ne.s32.totalorder %s44, %s45
    %p56 = scmp.eq.s32.totalorder %s36, 0
    %p57 = por %p55, %p56
    %p58 = scmp.ne.s32.totalorder %s44, %s45
    %p59 = scmp.eq.s32.totalorder %s37, 1
    %p60 = por %p58, %p59
    %p62 = scmp.ne.s32.totalorder %s45, %s61
    %p63 = scmp.eq.s32.totalorder %s37, 0
    %p64 = por %p62, %p63
    %s66 = sadd.s32 %s65, 1
    %p69 = scmp.eq.s32.totalorder %s31, 1
    %p70 = scmp.ne.s32.totalorder %s65, %s67
    %p71 = scmp.eq.s32.totalorder %s31, 0
    %p72 = por %p70, %p71
    %p73 = scmp.ne.s32.totalorder %s65, %s67
    %p74 = scmp.eq.s32.totalorder %s36, 1
    %p75 = por %p73, %p74
    %p76 = scmp.ne.s32.totalorder %s67, %s68
    %p77 = scmp.eq.s32.totalorder %s36, 0
    %p78 = por %p76, %p77
    %p79 = scmp.ne.s32.totalorder %s67, %s68
    %p80 = scmp.eq.s32.totalorder %s37, 1
    %p81 = por %p79, %p80
    %p83 = scmp.ne.s32.totalorder %s68, %s82
    %p84 = scmp.eq.s32.totalorder %s37, 0
    %p85 = por %p83, %p84
    %s87 = sadd.s32 %s86, 1
    %p90 = scmp.eq.s32.totalorder %s31, 1
    %p91 = scmp.ne.s32.totalorder %s86, %s88
    %p92 = scmp.eq.s32.totalorder %s31, 0
    %p93 = por %p91, %p92
    %p94 = scmp.ne.s32.totalorder %s86, %s88
    %p95 = scmp.eq.s32.totalorder %s36, 1
    %p96 = por %p94, %p95
    %p97 = scmp.ne.s32.totalorder %s88, %s89
    %p98 = scmp.eq.s32.totalorder %s36, 0
    %p99 = por %p97, %p98
    %p100 = scmp.ne.s32.totalorder %s88, %s89
    %p101 = scmp.eq.s32.totalorder %s37, 1
    %p102 = por %p100, %p101
    %p104 = scmp.ne.s32.totalorder %s89, %s103
    %p105 = scmp.eq.s32.totalorder %s37, 0
    %p106 = por %p104, %p105
    %s108 = sadd.s32 %s107, 1
    %p111 = scmp.eq.s32.totalorder %s31, 1
    %p112 = scmp.ne.s32.totalorder %s107, %s109
    %p113 = scmp.eq.s32.totalorder %s31, 0
    %p114 = por %p112, %p113
    %p115 = scmp.ne.s32.totalorder %s107, %s109
    %p116 = scmp.eq.s32.totalorder %s36, 1
    %p117 = por %p115, %p116
    %p118 = scmp.ne.s32.totalorder %s109, %s110
    %p119 = scmp.eq.s32.totalorder %s36, 0
    %p120 = por %p118, %p119
    %p121 = scmp.ne.s32.totalorder %s109, %s110
    %p122 = scmp.eq.s32.totalorder %s37, 1
    %p123 = por %p121, %p122
    %p125 = scmp.ne.s32.totalorder %s110, %s124
    %p126 = scmp.eq.s32.totalorder %s37, 0
    %p127 = por %p125, %p126
    %s129 = sadd.s32 %s128, 1
    %p132 = scmp.eq.s32.totalorder %s31, 1
    %p133 = scmp.ne.s32.totalorder %s128, %s130
    %p134 = scmp.eq.s32.totalorder %s31, 0
    %p135 = por %p133, %p134
    %p136 = scmp.ne.s32.totalorder %s128, %s130
    %p137 = scmp.eq.s32.totalorder %s36, 1
    %p138 = por %p136, %p137
    %p139 = scmp.ne.s32.totalorder %s130, %s131
    %p140 = scmp.eq.s32.totalorder %s36, 0
    %p141 = por %p139, %p140
    %p142 = scmp.ne.s32.totalorder %s130, %s131
    %p143 = scmp.eq.s32.totalorder %s37, 1
    %p144 = por %p142, %p143
    %p146 = scmp.ne.s32.totalorder %s131, %s145
    %p147 = scmp.eq.s32.totalorder %s37, 0
    %p148 = por %p146, %p147
    %s150 = sadd.s32 %s149, 1
    %p153 = scmp.eq.s32.totalorder %s31, 1
    %p154 = scmp.ne.s32.totalorder %s149, %s151
    %p155 = scmp.eq.s32.totalorder %s31, 0
    %p156 = por %p154, %p155
    %p157 = scmp.ne.s32.totalorder %s149, %s151
    %p158 = scmp.eq.s32.totalorder %s36, 1
    %p159 = por %p157, %p158
    %p160 = scmp.ne.s32.totalorder %s151, %s152
    %p161 = scmp.eq.s32.totalorder %s36, 0
    %p162 = por %p160, %p161
    %p163 = scmp.ne.s32.totalorder %s151, %s152
    %p164 = scmp.eq.s32.totalorder %s37, 1
    %p165 = por %p163, %p164
    %p167 = scmp.ne.s32.totalorder %s152, %s166
    %p168 = scmp.eq.s32.totalorder %s37, 0
    %p169 = por %p167, %p168
    %s171 = sadd.s32 %s170, 1
    %p174 = scmp.eq.s32.totalorder %s31, 1
    %p175 = scmp.ne.s32.totalorder %s170, %s172
    %p176 = scmp.eq.s32.totalorder %s31, 0
    %p177 = por %p175, %p176
    %p178 = scmp.ne.s32.totalorder %s170, %s172
    %p179 = scmp.eq.s32.totalorder %s36, 1
    %p180 = por %p178, %p179
    %p181 = scmp.ne.s32.totalorder %s172, %s173
    %p182 = scmp.eq.s32.totalorder %s36, 0
    %p183 = por %p181, %p182
    %p184 = scmp.ne.s32.totalorder %s172, %s173
    %p185 = scmp.eq.s32.totalorder %s37, 1
    %p186 = por %p184, %p185
    %p188 = scmp.ne.s32.totalorder %s173, %s187
    %p189 = scmp.eq.s32.totalorder %s37, 0
    %p190 = por %p188, %p189
    %s192 = sadd.s32 %s191, 1
    %p195 = scmp.eq.s32.totalorder %s31, 1
    %p196 = scmp.ne.s32.totalorder %s191, %s193
    %p197 = scmp.eq.s32.totalorder %s31, 0
    %p198 = por %p196, %p197
    %p199 = scmp.ne.s32.totalorder %s191, %s193
    %p200 = scmp.eq.s32.totalorder %s36, 1
    %p201 = por %p199, %p200
    %p202 = scmp.ne.s32.totalorder %s193, %s194
    %p203 = scmp.eq.s32.totalorder %s36, 0
    %p204 = por %p202, %p203
    %p205 = scmp.ne.s32.totalorder %s193, %s194
    %p206 = scmp.eq.s32.totalorder %s37, 1
    %p207 = por %p205, %p206
    %p209 = scmp.ne.s32.totalorder %s194, %s208
    %p210 = scmp.eq.s32.totalorder %s37, 0
    %p211 = por %p209, %p210
    %s213 = sadd.s32 %s212, 1
    %p216 = scmp.eq.s32.totalorder %s31, 1
    %p217 = scmp.ne.s32.totalorder %s212, %s214
    %p218 = scmp.eq.s32.totalorder %s31, 0
    %p219 = por %p217, %p218
    %p220 = scmp.ne.s32.totalorder %s212, %s214
    %p221 = scmp.eq.s32.totalorder %s36, 1
    %p222 = por %p220, %p221
    %p223 = scmp.ne.s32.totalorder %s214, %s215
    %p224 = scmp.eq.s32.totalorder %s36, 0
    %p225 = por %p223, %p224
    %p226 = scmp.ne.s32.totalorder %s214, %s215
    %p227 = scmp.eq.s32.totalorder %s37, 1
    %p228 = por %p226, %p227
    %p230 = scmp.ne.s32.totalorder %s215, %s229
    %p231 = scmp.eq.s32.totalorder %s37, 0
    %p232 = por %p230, %p231
    %s234 = sadd.s32 %s233, 1
    %p237 = scmp.eq.s32.totalorder %s31, 1
    %p238 = scmp.ne.s32.totalorder %s233, %s235
    %p239 = scmp.eq.s32.totalorder %s31, 0
    %p240 = por %p238, %p239
    %p241 = scmp.ne.s32.totalorder %s233, %s235
    %p242 = scmp.eq.s32.totalorder %s36, 1
    %p243 = por %p241, %p242
    %p244 = scmp.ne.s32.totalorder %s235, %s236
    %p245 = scmp.eq.s32.totalorder %s36, 0
    %p246 = por %p244, %p245
    %p247 = scmp.ne.s32.totalorder %s235, %s236
    %p248 = scmp.eq.s32.totalorder %s37, 1
    %p249 = por %p247, %p248
    %p251 = scmp.ne.s32.totalorder %s236, %s250
    %p252 = scmp.eq.s32.totalorder %s37, 0
    %p253 = por %p251, %p252
    %s255 = sadd.s32 %s254, 1
    %p258 = scmp.eq.s32.totalorder %s31, 1
    %p259 = scmp.ne.s32.totalorder %s254, %s256
    %p260 = scmp.eq.s32.totalorder %s31, 0
    %p261 = por %p259, %p260
    %p262 = scmp.ne.s32.totalorder %s254, %s256
    %p263 = scmp.eq.s32.totalorder %s36, 1
    %p264 = por %p262, %p263
    %p265 = scmp.ne.s32.totalorder %s256, %s257
    %p266 = scmp.eq.s32.totalorder %s36, 0
    %p267 = por %p265, %p266
    %p268 = scmp.ne.s32.totalorder %s256, %s257
    %p269 = scmp.eq.s32.totalorder %s37, 1
    %p270 = por %p268, %p269
    %p272 = scmp.ne.s32.totalorder %s257, %s271
    %p273 = scmp.eq.s32.totalorder %s37, 0
    %p274 = por %p272, %p273
    %s276 = sadd.s32 %s275, 1
    %p279 = scmp.eq.s32.totalorder %s31, 1
    %p280 = scmp.ne.s32.totalorder %s275, %s277
    %p281 = scmp.eq.s32.totalorder %s31, 0
    %p282 = por %p280, %p281
    %p283 = scmp.ne.s32.totalorder %s275, %s277
    %p284 = scmp.eq.s32.totalorder %s36, 1
    %p285 = por %p283, %p284
    %p286 = scmp.ne.s32.totalorder %s277, %s278
    %p287 = scmp.eq.s32.totalorder %s36, 0
    %p288 = por %p286, %p287
    %p289 = scmp.ne.s32.totalorder %s277, %s278
    %p290 = scmp.eq.s32.totalorder %s37, 1
    %p291 = por %p289, %p290
    %p293 = scmp.ne.s32.totalorder %s278, %s292
    %p294 = scmp.eq.s32.totalorder %s37, 0
    %p295 = por %p293, %p294
    %s297 = sadd.s32 %s296, 1
    %p300 = scmp.eq.s32.totalorder %s31, 1
    %p301 = scmp.ne.s32.totalorder %s296, %s298
    %p302 = scmp.eq.s32.totalorder %s31, 0
    %p303 = por %p301, %p302
    %p304 = scmp.ne.s32.totalorder %s296, %s298
    %p305 = scmp.eq.s32.totalorder %s36, 1
    %p306 = por %p304, %p305
    %p307 = scmp.ne.s32.totalorder %s298, %s299
    %p308 = scmp.eq.s32.totalorder %s36, 0
    %p309 = por %p307, %p308
    %p310 = scmp.ne.s32.totalorder %s298, %s299
    %p311 = scmp.eq.s32.totalorder %s37, 1
    %p312 = por %p310, %p311
    %p314 = scmp.ne.s32.totalorder %s299, %s313
    %p315 = scmp.eq.s32.totalorder %s37, 0
    %p316 = por %p314, %p315
    %s318 = sadd.s32 %s317, 1
    %p321 = scmp.eq.s32.totalorder %s31, 1
    %p322 = scmp.ne.s32.totalorder %s317, %s319
    %p323 = scmp.eq.s32.totalorder %s31, 0
    %p324 = por %p322, %p323
    %p325 = scmp.ne.s32.totalorder %s317, %s319
    %p326 = scmp.eq.s32.totalorder %s36, 1
    %p327 = por %p325, %p326
    %p328 = scmp.ne.s32.totalorder %s319, %s320
    %p329 = scmp.eq.s32.totalorder %s36, 0
    %p330 = por %p328, %p329
    %p331 = scmp.ne.s32.totalorder %s319, %s320
    %p332 = scmp.eq.s32.totalorder %s37, 1
    %p333 = por %p331, %p332
    %p335 = scmp.ne.s32.totalorder %s320, %s334
    %p336 = scmp.eq.s32.totalorder %s37, 0
    %p337 = por %p335, %p336
    %s339 = sadd.s32 %s338, 1
    %p342 = scmp.eq.s32.totalorder %s31, 1
    %p343 = scmp.ne.s32.totalorder %s338, %s340
    %p344 = scmp.eq.s32.totalorder %s31, 0
    %p345 = por %p343, %p344
    %p346 = scmp.ne.s32.totalorder %s338, %s340
    %p347 = scmp.eq.s32.totalorder %s36, 1
    %p348 = por %p346, %p347
    %p349 = scmp.ne.s32.totalorder %s340, %s341
    %p350 = scmp.eq.s32.totalorder %s36, 0
    %p351 = por %p349, %p350
    %p352 = scmp.ne.s32.totalorder %s340, %s341
    %p353 = scmp.eq.s32.totalorder %s37, 1
    %p354 = por %p352, %p353
    %p356 = scmp.ne.s32.totalorder %s341, %s355
    %p357 = scmp.eq.s32.totalorder %s37, 0
    %p358 = por %p356, %p357
    %s360 = sadd.s32 %s359, 1
    %p363 = scmp.eq.s32.totalorder %s31, 1
    %p364 = scmp.ne.s32.totalorder %s359, %s361
    %p365 = scmp.eq.s32.totalorder %s31, 0
    %p366 = por %p364, %p365
    %p367 = scmp.ne.s32.totalorder %s359, %s361
    %p368 = scmp.eq.s32.totalorder %s36, 1
    %p369 = por %p367, %p368
    %p370 = scmp.ne.s32.totalorder %s361, %s362
    %p371 = scmp.eq.s32.totalorder %s36, 0
    %p372 = por %p370, %p371
    %p373 = scmp.ne.s32.totalorder %s361, %s362
    %p374 = scmp.eq.s32.totalorder %s37, 1
    %p375 = por %p373, %p374
    %p377 = scmp.ne.s32.totalorder %s362, %s376
    %p378 = scmp.eq.s32.totalorder %s37, 0
    %p379 = por %p377, %p378
    %s381 = sadd.s32 %s380, 1
    %p384 = scmp.eq.s32.totalorder %s31, 1
    %p385 = scmp.ne.s32.totalorder %s380, %s382
    %p386 = scmp.eq.s32.totalorder %s31, 0
    %p387 = por %p385, %p386
    %p388 = scmp.ne.s32.totalorder %s380, %s382
    %p389 = scmp.eq.s32.totalorder %s36, 1
    %p390 = por %p388, %p389
    %p391 = scmp.ne.s32.totalorder %s382, %s383
    %p392 = scmp.eq.s32.totalorder %s36, 0
    %p393 = por %p391, %p392
    %p394 = scmp.ne.s32.totalorder %s382, %s383
    %p395 = scmp.eq.s32.totalorder %s37, 1
    %p396 = por %p394, %p395
    %p398 = scmp.ne.s32.totalorder %s383, %s397
    %p399 = scmp.eq.s32.totalorder %s37, 0
    %p400 = por %p398, %p399
    %s402 = sadd.s32 %s401, 1
    %p405 = scmp.eq.s32.totalorder %s31, 1
    %p406 = scmp.ne.s32.totalorder %s401, %s403
    %p407 = scmp.eq.s32.totalorder %s31, 0
    %p408 = por %p406, %p407
    %p409 = scmp.ne.s32.totalorder %s401, %s403
    %p410 = scmp.eq.s32.totalorder %s36, 1
    %p411 = por %p409, %p410
    %p412 = scmp.ne.s32.totalorder %s403, %s404
    %p413 = scmp.eq.s32.totalorder %s36, 0
    %p414 = por %p412, %p413
    %p415 = scmp.ne.s32.totalorder %s403, %s404
    %p416 = scmp.eq.s32.totalorder %s37, 1
    %p417 = por %p415, %p416
    %p419 = scmp.ne.s32.totalorder %s404, %s418
    %p420 = scmp.eq.s32.totalorder %s37, 0
    %p421 = por %p419, %p420
    %s423 = sadd.s32 %s422, 1
    %p426 = scmp.eq.s32.totalorder %s31, 1
    %p427 = scmp.ne.s32.totalorder %s422, %s424
    %p428 = scmp.eq.s32.totalorder %s31, 0
    %p429 = por %p427, %p428
    %p430 = scmp.ne.s32.totalorder %s422, %s424
    %p431 = scmp.eq.s32.totalorder %s36, 1
    %p432 = por %p430, %p431
    %p433 = scmp.ne.s32.totalorder %s424, %s425
    %p434 = scmp.eq.s32.totalorder %s36, 0
    %p435 = por %p433, %p434
    %p436 = scmp.ne.s32.totalorder %s424, %s425
    %p437 = scmp.eq.s32.totalorder %s37, 1
    %p438 = por %p436, %p437
    %p440 = scmp.ne.s32.totalorder %s425, %s439
    %p441 = scmp.eq.s32.totalorder %s37, 0
    %p442 = por %p440, %p441
    %s444 = sadd.s32 %s443, 1
    %p447 = scmp.eq.s32.totalorder %s31, 1
    %p448 = scmp.ne.s32.totalorder %s443, %s445
    %p449 = scmp.eq.s32.totalorder %s31, 0
    %p450 = por %p448, %p449
    %p451 = scmp.ne.s32.totalorder %s443, %s445
    %p452 = scmp.eq.s32.totalorder %s36, 1
    %p453 = por %p451, %p452
    %p454 = scmp.ne.s32.totalorder %s445, %s446
    %p455 = scmp.eq.s32.totalorder %s36, 0
    %p456 = por %p454, %p455
    %p457 = scmp.ne.s32.totalorder %s445, %s446
    %p458 = scmp.eq.s32.totalorder %s37, 1
    %p459 = por %p457, %p458
    %p461 = scmp.ne.s32.totalorder %s446, %s460
    %p462 = scmp.eq.s32.totalorder %s37, 0
    %p463 = por %p461, %p462
    %s465 = sadd.s32 %s464, 1
    %p468 = scmp.eq.s32.totalorder %s31, 1
    %p469 = scmp.ne.s32.totalorder %s464, %s466
    %p470 = scmp.eq.s32.totalorder %s31, 0
    %p471 = por %p469, %p470
    %p472 = scmp.ne.s32.totalorder %s464, %s466
    %p473 = scmp.eq.s32.totalorder %s36, 1
    %p474 = por %p472, %p473
    %p475 = scmp.ne.s32.totalorder %s466, %s467
    %p476 = scmp.eq.s32.totalorder %s36, 0
    %p477 = por %p475, %p476
    %p478 = scmp.ne.s32.totalorder %s466, %s467
    %p479 = scmp.eq.s32.totalorder %s37, 1
    %p480 = por %p478, %p479
    %p482 = scmp.ne.s32.totalorder %s467, %s481
    %p483 = scmp.eq.s32.totalorder %s37, 0
    %p484 = por %p482, %p483
    %s486 = sadd.s32 %s485, 1
    %p489 = scmp.eq.s32.totalorder %s31, 1
    %p490 = scmp.ne.s32.totalorder %s485, %s487
    %p491 = scmp.eq.s32.totalorder %s31, 0
    %p492 = por %p490, %p491
    %p493 = scmp.ne.s32.totalorder %s485, %s487
    %p494 = scmp.eq.s32.totalorder %s36, 1
    %p495 = por %p493, %p494
    %p496 = scmp.ne.s32.totalorder %s487, %s488
    %p497 = scmp.eq.s32.totalorder %s36, 0
    %p498 = por %p496, %p497
    %p499 = scmp.ne.s32.totalorder %s487, %s488
    %p500 = scmp.eq.s32.totalorder %s37, 1
    %p501 = por %p499, %p500
    %p503 = scmp.ne.s32.totalorder %s488, %s502
    %p504 = scmp.eq.s32.totalorder %s37, 0
    %p505 = por %p503, %p504
    %s507 = sadd.s32 %s506, 1
    %p510 = scmp.eq.s32.totalorder %s31, 1
    %p511 = scmp.ne.s32.totalorder %s506, %s508
    %p512 = scmp.eq.s32.totalorder %s31, 0
    %p513 = por %p511, %p512
    %p514 = scmp.ne.s32.totalorder %s506, %s508
    %p515 = scmp.eq.s32.totalorder %s36, 1
    %p516 = por %p514, %p515
    %p517 = scmp.ne.s32.totalorder %s508, %s509
    %p518 = scmp.eq.s32.totalorder %s36, 0
    %p519 = por %p517, %p518
    %p520 = scmp.ne.s32.totalorder %s508, %s509
    %p521 = scmp.eq.s32.totalorder %s37, 1
    %p522 = por %p520, %p521
    %p524 = scmp.ne.s32.totalorder %s509, %s523
    %p525 = scmp.eq.s32.totalorder %s37, 0
    %p526 = por %p524, %p525
    %s527 = ssub.s32 %s31, %s38
    %p528 = scmp.eq.s32.totalorder %s527, 0
    %s530 = sadd.s32 %s529, 1
    %s531 = scalar_select %p528, %s529, %s530
    %p534 = pneg %p528
    %p535 = scmp.eq.s32.totalorder %s31, 1
    %p536 = por %p534, %p535
    %p537 = scmp.ne.s32.totalorder %s529, %s532
    %p538 = scmp.eq.s32.totalorder %s31, 0
    %p539 = por %p537, %p538
    %p540 = scmp.ne.s32.totalorder %s529, %s532
    %p541 = scmp.eq.s32.totalorder %s36, 1
    %p542 = por %p540, %p541
    %p543 = scmp.ne.s32.totalorder %s532, %s533
    %p544 = scmp.eq.s32.totalorder %s36, 0
    %p545 = por %p543, %p544
    %p546 = scmp.ne.s32.totalorder %s532, %s533
    %p547 = scmp.eq.s32.totalorder %s37, 1
    %p548 = por %p546, %p547
    %p550 = scmp.ne.s32.totalorder %s533, %s549
    %p551 = scmp.eq.s32.totalorder %s37, 0
    %p552 = por %p550, %p551
    %s553 = ssub.s32 %s31, %s38
    %p554 = scmp.eq.s32.totalorder %s553, 0
    %s556 = sadd.s32 %s555, 1
    %s557 = scalar_select %p554, %s555, %s556
    %p560 = pneg %p554
    %p561 = scmp.eq.s32.totalorder %s31, 1
    %p562 = por %p560, %p561
    %p563 = scmp.ne.s32.totalorder %s555, %s558
    %p564 = scmp.eq.s32.totalorder %s31, 0
    %p565 = por %p563, %p564
    %p566 = scmp.ne.s32.totalorder %s555, %s558
    %p567 = scmp.eq.s32.totalorder %s36, 1
    %p568 = por %p566, %p567
    %p569 = scmp.ne.s32.totalorder %s558, %s559
    %p570 = scmp.eq.s32.totalorder %s36, 0
    %p571 = por %p569, %p570
    %p572 = scmp.ne.s32.totalorder %s558, %s559
    %p573 = scmp.eq.s32.totalorder %s37, 1
    %p574 = por %p572, %p573
    %p576 = scmp.ne.s32.totalorder %s559, %s575
    %p577 = scmp.eq.s32.totalorder %s37, 0
    %p578 = por %p576, %p577
    %p579 = scmp.le.s32.totalorder 1, %s31
    %p580 = scmp.lt.s32.totalorder %s31, 3
    %p581 = pnand %p579, %p580
    %p582 = pneg %p581
    // Predicated region
    $region9: #{forward.3} parent=5 // pred_check
      _
    $region10: #{forward.3} parent=5 // pred_check_branch
      %584 = sbr.rel (%p581) target = $region12
    $region11: #{forward.3} parent=5 // pred_region
      %s585 = ssub.s32 %s31, 1
      // Predicated region
      $region13: #{forward.3} parent=11 // pred_check
        %p586 = pneg %p78
      $region14: #{forward.3} parent=11 // pred_check_branch
        %588 = sbr.rel (%p586) target = $region16
      $region15: #{forward.3} parent=11 // pred_region
        _
      $region16: #{forward.3} parent=11 // pred_fallthru
        _
      // Predicated region
      $region17: #{forward.3} parent=11 // pred_check
        %p589 = pneg %p99
      $region18: #{forward.3} parent=11 // pred_check_branch
        %591 = sbr.rel (%p589) target = $region20
      $region19: #{forward.3} parent=11 // pred_region
        _
      $region20: #{forward.3} parent=11 // pred_fallthru
        _
      // Predicated region
      $region21: #{forward.3} parent=11 // pred_check
        %p592 = pneg %p120
      $region22: #{forward.3} parent=11 // pred_check_branch
        %594 = sbr.rel (%p592) target = $region24
      $region23: #{forward.3} parent=11 // pred_region
        _
      $region24: #{forward.3} parent=11 // pred_fallthru
        _
      // Predicated region
      $region25: #{forward.3} parent=11 // pred_check
        %p595 = pneg %p141
      $region26: #{forward.3} parent=11 // pred_check_branch
        %597 = sbr.rel (%p595) target = $region28
      $region27: #{forward.3} parent=11 // pred_region
        _
      $region28: #{forward.3} parent=11 // pred_fallthru
        _
      // Predicated region
      $region29: #{forward.3} parent=11 // pred_check
        %p598 = pneg %p162
      $region30: #{forward.3} parent=11 // pred_check_branch
        %600 = sbr.rel (%p598) target = $region32
      $region31: #{forward.3} parent=11 // pred_region
        _
      $region32: #{forward.3} parent=11 // pred_fallthru
        _
      // Predicated region
      $region33: #{forward.3} parent=11 // pred_check
        %p601 = pneg %p183
      $region34: #{forward.3} parent=11 // pred_check_branch
        %603 = sbr.rel (%p601) target = $region36
      $region35: #{forward.3} parent=11 // pred_region
        _
      $region36: #{forward.3} parent=11 // pred_fallthru
        _
      // Predicated region
      $region37: #{forward.3} parent=11 // pred_check
        %p604 = pneg %p204
      $region38: #{forward.3} parent=11 // pred_check_branch
        %606 = sbr.rel (%p604) target = $region40
      $region39: #{forward.3} parent=11 // pred_region
        _
      $region40: #{forward.3} parent=11 // pred_fallthru
        _
      // Predicated region
      $region41: #{forward.3} parent=11 // pred_check
        %p607 = pneg %p225
      $region42: #{forward.3} parent=11 // pred_check_branch
        %609 = sbr.rel (%p607) target = $region44
      $region43: #{forward.3} parent=11 // pred_region
        _
      $region44: #{forward.3} parent=11 // pred_fallthru
        _
      // Predicated region
      $region45: #{forward.3} parent=11 // pred_check
        %p610 = pneg %p246
      $region46: #{forward.3} parent=11 // pred_check_branch
        %612 = sbr.rel (%p610) target = $region48
      $region47: #{forward.3} parent=11 // pred_region
        _
      $region48: #{forward.3} parent=11 // pred_fallthru
        _
      // Predicated region
      $region49: #{forward.3} parent=11 // pred_check
        %p613 = pneg %p267
      $region50: #{forward.3} parent=11 // pred_check_branch
        %615 = sbr.rel (%p613) target = $region52
      $region51: #{forward.3} parent=11 // pred_region
        _
      $region52: #{forward.3} parent=11 // pred_fallthru
        _
      // Predicated region
      $region53: #{forward.3} parent=11 // pred_check
        %p616 = pneg %p288
      $region54: #{forward.3} parent=11 // pred_check_branch
        %618 = sbr.rel (%p616) target = $region56
      $region55: #{forward.3} parent=11 // pred_region
        _
      $region56: #{forward.3} parent=11 // pred_fallthru
        _
      // Predicated region
      $region57: #{forward.3} parent=11 // pred_check
        %p619 = pneg %p309
      $region58: #{forward.3} parent=11 // pred_check_branch
        %621 = sbr.rel (%p619) target = $region60
      $region59: #{forward.3} parent=11 // pred_region
        _
      $region60: #{forward.3} parent=11 // pred_fallthru
        _
      // Predicated region
      $region61: #{forward.3} parent=11 // pred_check
        %p622 = pneg %p330
      $region62: #{forward.3} parent=11 // pred_check_branch
        %624 = sbr.rel (%p622) target = $region64
      $region63: #{forward.3} parent=11 // pred_region
        _
      $region64: #{forward.3} parent=11 // pred_fallthru
        _
      // Predicated region
      $region65: #{forward.3} parent=11 // pred_check
        %p625 = pneg %p351
      $region66: #{forward.3} parent=11 // pred_check_branch
        %627 = sbr.rel (%p625) target = $region68
      $region67: #{forward.3} parent=11 // pred_region
        _
      $region68: #{forward.3} parent=11 // pred_fallthru
        _
      // Predicated region
      $region69: #{forward.3} parent=11 // pred_check
        %p628 = pneg %p372
      $region70: #{forward.3} parent=11 // pred_check_branch
        %630 = sbr.rel (%p628) target = $region72
      $region71: #{forward.3} parent=11 // pred_region
        _
      $region72: #{forward.3} parent=11 // pred_fallthru
        _
      // Predicated region
      $region73: #{forward.3} parent=11 // pred_check
        %p631 = pneg %p393
      $region74: #{forward.3} parent=11 // pred_check_branch
        %633 = sbr.rel (%p631) target = $region76
      $region75: #{forward.3} parent=11 // pred_region
        _
      $region76: #{forward.3} parent=11 // pred_fallthru
        _
      // Predicated region
      $region77: #{forward.3} parent=11 // pred_check
        %p634 = pneg %p414
      $region78: #{forward.3} parent=11 // pred_check_branch
        %636 = sbr.rel (%p634) target = $region80
      $region79: #{forward.3} parent=11 // pred_region
        _
      $region80: #{forward.3} parent=11 // pred_fallthru
        _
      // Predicated region
      $region81: #{forward.3} parent=11 // pred_check
        %p637 = pneg %p435
      $region82: #{forward.3} parent=11 // pred_check_branch
        %639 = sbr.rel (%p637) target = $region84
      $region83: #{forward.3} parent=11 // pred_region
        _
      $region84: #{forward.3} parent=11 // pred_fallthru
        _
      // Predicated region
      $region85: #{forward.3} parent=11 // pred_check
        %p640 = pneg %p456
      $region86: #{forward.3} parent=11 // pred_check_branch
        %642 = sbr.rel (%p640) target = $region88
      $region87: #{forward.3} parent=11 // pred_region
        _
      $region88: #{forward.3} parent=11 // pred_fallthru
        _
      // Predicated region
      $region89: #{forward.3} parent=11 // pred_check
        %p643 = pneg %p477
      $region90: #{forward.3} parent=11 // pred_check_branch
        %645 = sbr.rel (%p643) target = $region92
      $region91: #{forward.3} parent=11 // pred_region
        _
      $region92: #{forward.3} parent=11 // pred_fallthru
        _
      // Predicated region
      $region93: #{forward.3} parent=11 // pred_check
        %p646 = pneg %p498
      $region94: #{forward.3} parent=11 // pred_check_branch
        %648 = sbr.rel (%p646) target = $region96
      $region95: #{forward.3} parent=11 // pred_region
        _
      $region96: #{forward.3} parent=11 // pred_fallthru
        _
      // Predicated region
      $region97: #{forward.3} parent=11 // pred_check
        %p649 = pneg %p519
      $region98: #{forward.3} parent=11 // pred_check_branch
        %651 = sbr.rel (%p649) target = $region100
      $region99: #{forward.3} parent=11 // pred_region
        _
      $region100: #{forward.3} parent=11 // pred_fallthru
        _
    $region12: #{forward.3} parent=5 // pred_fallthru
      _
    %p652 = scmp.lt.s32.totalorder %s31, 2
    // Predicated region
    $region101: #{forward.3} parent=5 // pred_check
      %p653 = pneg %p652
    $region102: #{forward.3} parent=5 // pred_check_branch
      %655 = sbr.rel (%p653) target = $region104
    $region103: #{forward.3} parent=5 // pred_region
      // Predicated region
      $region105: #{forward.3} parent=103 // pred_check
        %p656 = pneg %p51
      $region106: #{forward.3} parent=103 // pred_check_branch
        %658 = sbr.rel (%p656) target = $region108
      $region107: #{forward.3} parent=103 // pred_region
        %p659 = scmp.lt.s32.totalorder %s31, 1
        %s660 = scalar_select %p659, %s31, 1
        %s661 = smul.addr %s660, 8
        %s662 = scalar_lea.vmem %s0, %s661
      $region108: #{forward.3} parent=103 // pred_fallthru
        _
    $region104: #{forward.3} parent=5 // pred_fallthru
      _
    %p663 = scmp.le.s32.totalorder 1, %s31
    %p664 = scmp.lt.s32.totalorder %s31, 3
    %p665 = pnand %p663, %p664
    %p666 = pneg %p665
    // Predicated region
    $region109: #{forward.3} parent=5 // pred_check
      _
    $region110: #{forward.3} parent=5 // pred_check_branch
      %668 = sbr.rel (%p665) target = $region112
    $region111: #{forward.3} parent=5 // pred_region
      %s669 = ssub.s32 %s31, 1
      %p670 = scmp.lt.s32.totalorder %s36, 1
      %s671 = scalar_select %p670, %s36, 1
      %s672 = smul.addr %s671, 8
      %s673 = scalar_lea.vmem %s0, %s672
      %p674 = pneg %p57
      %p675 = pneg %p54
      %p676 = pneg %p78
      %p677 = pneg %p75
      %p678 = pneg %p99
      %p679 = pneg %p96
      %p680 = pneg %p120
      %p681 = pneg %p117
      %p682 = pneg %p141
      %p683 = pneg %p138
      %p684 = pneg %p162
      %p685 = pneg %p159
      %p686 = pneg %p183
      %p687 = pneg %p180
      %p688 = pneg %p204
      %p689 = pneg %p201
      %p690 = pneg %p225
      %p691 = pneg %p222
      %p692 = pneg %p246
      %p693 = pneg %p243
      %p694 = pneg %p267
      %p695 = pneg %p264
      %p696 = pneg %p288
      %p697 = pneg %p285
      %p698 = pneg %p309
      %p699 = pneg %p306
      %p700 = pneg %p330
      %p701 = pneg %p327
      %p702 = pneg %p351
      %p703 = pneg %p348
      %p704 = pneg %p372
      %p705 = pneg %p369
      %p706 = pneg %p393
      %p707 = pneg %p390
      %p708 = pneg %p414
      %p709 = pneg %p411
      %p710 = pneg %p435
      %p711 = pneg %p432
      %p712 = pneg %p456
      %p713 = pneg %p453
      %p714 = pneg %p477
      %p715 = pneg %p474
      %p716 = pneg %p498
      %p717 = pneg %p495
      %p718 = pneg %p519
      %p719 = pneg %p516
      %p720 = pneg %p545
      %p721 = pneg %p542
      %p722 = scmp.lt.s32.totalorder %s36, 1
      %s723 = scalar_select %p722, %s36, 1
      %s724 = smul.addr %s723, 2
      %s725 = smul.addr %s724, 8
      %s726 = scalar_lea.vmem %s23, %s725
      %p727 = pneg %p571
      %p728 = pneg %p568
      %p729 = scmp.lt.s32.totalorder %s36, 1
      %s730 = scalar_select %p729, %s36, 1
      %s731 = smul.addr %s730, 4
      %s732 = scalar_lea.vmem %s24, %s731
      %p733 = scmp.lt.s32.totalorder %s36, 1
      %s734 = scalar_select %p733, %s36, 1
      %s735 = smul.addr %s734, 8
      %s736 = scalar_lea.vmem %s0, %s735
      %p737 = scmp.lt.s32.totalorder %s36, 1
      %s738 = scalar_select %p737, %s36, 1
      %s739 = smul.addr %s738, 2
      %s740 = smul.addr %s739, 8
      %s741 = scalar_lea.vmem %s23, %s740
      %p742 = scmp.lt.s32.totalorder %s36, 1
      %s743 = scalar_select %p742, %s36, 1
      %s744 = smul.addr %s743, 4
      %s745 = scalar_lea.vmem %s24, %s744
      %v747 = vld [vmem:[%s1] sm:$0xff]
      %v748 = vld [vmem:[%s1 + $0x8] sm:$0xf]
      %v749 = vld [vmem:[%s2] sm:$0xf]
      %v750 = vld [vmem:[%s2 + $0x4] sm:$0xf]
      %v751 = vld [vmem:[%s2 + $0x8] sm:$0xf]
      %v752 = vld [vmem:[%s2 + $0xc] sm:$0xf]
      %v753 = vld [vmem:[%s2 + $0x10] sm:$0xf]
      %v754 = vld [vmem:[%s2 + $0x14] sm:$0xf]
      %v755 = vld [vmem:[%s2 + $0x18] sm:$0xf]
      %v756 = vld [vmem:[%s2 + $0x1c] sm:$0xf]
      %v757 = vld [vmem:[%s2 + $0x20] sm:$0xf]
      %v758 = vld [vmem:[%s2 + $0x24] sm:$0xf]
      %v759 = vld [vmem:[%s2 + $0x28] sm:$0xf]
      %v760 = vld [vmem:[%s2 + $0x2c] sm:$0xf]
      %v761 = vld [vmem:[%s2 + $0x30] sm:$0xf]
      %v762 = vld [vmem:[%s2 + $0x34] sm:$0xf]
      %v763 = vld [vmem:[%s2 + $0x38] sm:$0xf]
      %v764 = vld [vmem:[%s2 + $0x3c] sm:$0xf]
      %v765 = vld [vmem:[%s2 + $0x40] sm:$0xf]
      %v766 = vld [vmem:[%s2 + $0x44] sm:$0xf]
      %v767 = vld [vmem:[%s2 + $0x48] sm:$0xf]
      %v768 = vld [vmem:[%s2 + $0x4c] sm:$0xf]
      %v769 = vld [vmem:[%s2 + $0x50] sm:$0xf]
      %v770 = vld [vmem:[%s2 + $0x54] sm:$0xf]
      %v771 = vld [vmem:[%s2 + $0x58] sm:$0xf]
      %v772 = vld [vmem:[%s2 + $0x5c] sm:$0xf]
      %v773 = vld [vmem:[%s2 + $0x60] sm:$0xf]
      %v774 = vld [vmem:[%s2 + $0x64] sm:$0xf]
      %v775 = vld [vmem:[%s2 + $0x68] sm:$0xf]
      %v776 = vld [vmem:[%s2 + $0x6c] sm:$0xf]
      %v777 = vld [vmem:[%s2 + $0x70] sm:$0xf]
      %v778 = vld [vmem:[%s2 + $0x74] sm:$0xf]
      %v779 = vld [vmem:[%s2 + $0x78] sm:$0xf]
      %v780 = vld [vmem:[%s2 + $0x7c] sm:$0xf]
      %v781 = vld [vmem:[%s2 + $0x80] sm:$0xf]
      %v782 = vld [vmem:[%s2 + $0x84] sm:$0xf]
      %v783 = vld [vmem:[%s2 + $0x88] sm:$0xf]
      %v784 = vld [vmem:[%s2 + $0x8c] sm:$0xf]
      %v785 = vld [vmem:[%s2 + $0x90] sm:$0xf]
      %v786 = vld [vmem:[%s2 + $0x94] sm:$0xf]
      %v787 = vld [vmem:[%s2 + $0x98] sm:$0xf]
      %v788 = vld [vmem:[%s2 + $0x9c] sm:$0xf]
      %v789 = vld [vmem:[%s2 + $0xa0] sm:$0xf]
      %v790 = vld [vmem:[%s2 + $0xa4] sm:$0xf]
      %v791 = vld [vmem:[%s2 + $0xa8] sm:$0xf]
      %v792 = vld [vmem:[%s2 + $0xac] sm:$0xf]
      %v793 = vld [vmem:[%s2 + $0xb0] sm:$0xf]
      %v794 = vld [vmem:[%s2 + $0xb4] sm:$0xf]
      %v795 = vld [vmem:[%s2 + $0xb8] sm:$0xf]
      %v796 = vld [vmem:[%s2 + $0xbc] sm:$0xf]
      %v797 = vld [vmem:[%s2 + $0xc0] sm:$0xf]
      %v798 = vld [vmem:[%s2 + $0xc4] sm:$0xf]
      %v799 = vld [vmem:[%s2 + $0xc8] sm:$0xf]
      %v800 = vld [vmem:[%s2 + $0xcc] sm:$0xf]
      %v801 = vld [vmem:[%s2 + $0xd0] sm:$0xf]
      %v802 = vld [vmem:[%s2 + $0xd4] sm:$0xf]
      %v803 = vld [vmem:[%s2 + $0xd8] sm:$0xf]
      %v804 = vld [vmem:[%s2 + $0xdc] sm:$0xf]
      %v805 = vld [vmem:[%s2 + $0xe0] sm:$0xf]
      %v806 = vld [vmem:[%s2 + $0xe4] sm:$0xf]
      %v807 = vld [vmem:[%s2 + $0xe8] sm:$0xf]
      %v808 = vld [vmem:[%s2 + $0xec] sm:$0xf]
      %v809 = vld [vmem:[%s2 + $0xf0] sm:$0xf]
      %v810 = vld [vmem:[%s2 + $0xf4] sm:$0xf]
      %v811 = vld [vmem:[%s2 + $0xf8] sm:$0xf]
      %v812 = vld [vmem:[%s2 + $0xfc] sm:$0xf]
      %v813 = vld [vmem:[%s2 + $0x100] sm:$0xf]
      %v814 = vld [vmem:[%s2 + $0x104] sm:$0xf]
      %v815 = vld [vmem:[%s2 + $0x108] sm:$0xf]
      %v816 = vld [vmem:[%s2 + $0x10c] sm:$0xf]
      %v817 = vld [vmem:[%s2 + $0x110] sm:$0xf]
      %v818 = vld [vmem:[%s2 + $0x114] sm:$0xf]
      %v819 = vld [vmem:[%s2 + $0x118] sm:$0xf]
      %v820 = vld [vmem:[%s2 + $0x11c] sm:$0xf]
      %v821 = vld [vmem:[%s2 + $0x120] sm:$0xf]
      %v822 = vld [vmem:[%s2 + $0x124] sm:$0xf]
      %v823 = vld [vmem:[%s2 + $0x128] sm:$0xf]
      %v824 = vld [vmem:[%s2 + $0x12c] sm:$0xf]
      %v825 = vld [vmem:[%s2 + $0x130] sm:$0xf]
      %v826 = vld [vmem:[%s2 + $0x134] sm:$0xf]
      %v827 = vld [vmem:[%s2 + $0x138] sm:$0xf]
      %v828 = vld [vmem:[%s2 + $0x13c] sm:$0xf]
      %v829 = vld [vmem:[%s2 + $0x140] sm:$0xf]
      %v830 = vld [vmem:[%s2 + $0x144] sm:$0xf]
      %v831 = vld [vmem:[%s2 + $0x148] sm:$0xf]
      %v832 = vld [vmem:[%s2 + $0x14c] sm:$0xf]
      %v833 = vld [vmem:[%s2 + $0x150] sm:$0xf]
      %v834 = vld [vmem:[%s2 + $0x154] sm:$0xf]
      %v835 = vld [vmem:[%s2 + $0x158] sm:$0xf]
      %v836 = vld [vmem:[%s2 + $0x15c] sm:$0xf]
      %v837 = vld [vmem:[%s2 + $0x160] sm:$0xf]
      %v838 = vld [vmem:[%s2 + $0x164] sm:$0xf]
      %v839 = vld [vmem:[%s2 + $0x168] sm:$0xf]
      %v840 = vld [vmem:[%s2 + $0x16c] sm:$0xf]
      %v841 = vld [vmem:[%s2 + $0x170] sm:$0xf]
      %v842 = vld [vmem:[%s2 + $0x174] sm:$0xf]
      %v843 = vld [vmem:[%s2 + $0x178] sm:$0xf]
      %v844 = vld [vmem:[%s2 + $0x17c] sm:$0xf]
      %v845 = vld [vmem:[%s3] sm:$0x1]
      %v847 = vlaneseq
      %v848 = vshrl.u32 %v847, 7
      %v849 = vsub.s32 0, %v848
      %v850 = vrot.slane %v845, %v849
      %v854 = vcombine.high %v747, %v747
      %v856 = vunpack.c.l.s4 1983009808
      %v857 = vunpack.c.0.s8 %v856
      %v858 = vlaneseq
      %v859 = vshrl.u32 %v858, 7
      %v860 = vsub.s32 %v857, %v859
      %v861 = vrot.slane %v747, %v860
      %v863 = vunpack.c.l.s4 1983009808
      %v864 = vunpack.c.0.s8 %v863
      %v865 = vlaneseq
      %v866 = vshrl.u32 %v865, 7
      %v867 = vsub.s32 %v864, %v866
      %v868 = vrot.slane %v854, %v867
      %v869 = vcombine.high %v861, %v861
      %v870 = vcombine.high %v868, %v868
      %v872 = vunpack.c.l.s4 1983009808
      %v873 = vunpack.c.0.s8 %v872
      %v874 = vlaneseq
      %v875 = vshrl.u32 %v874, 7
      %v876 = vsub.s32 %v873, %v875
      %v877 = vrot.slane %v748, %v876
      %v878 = vcombine.high %v877, %v877
      %v981 = vunpack.c.l.b16 %v749
      %v982 = vunpack.c.l.b16 %v750
      %v983 = vunpack.c.l.b16 %v751
      %v984 = vunpack.c.l.b16 %v752
      %v985 = vunpack.c.l.b16 %v753
      %v986 = vunpack.c.l.b16 %v754
      %v987 = vunpack.c.l.b16 %v755
      %v988 = vunpack.c.l.b16 %v756
      %v989 = vunpack.c.l.b16 %v757
      %v990 = vunpack.c.l.b16 %v758
      %v991 = vunpack.c.l.b16 %v759
      %v992 = vunpack.c.l.b16 %v760
      %v993 = vunpack.c.l.b16 %v761
      %v994 = vunpack.c.l.b16 %v762
      %v995 = vunpack.c.l.b16 %v763
      %v996 = vunpack.c.l.b16 %v764
      %v997 = vunpack.c.l.b16 %v765
      %v998 = vunpack.c.l.b16 %v766
      %v999 = vunpack.c.l.b16 %v767
      %v1000 = vunpack.c.l.b16 %v768
      %v1001 = vunpack.c.l.b16 %v769
      %v1002 = vunpack.c.l.b16 %v770
      %v1003 = vunpack.c.l.b16 %v771
      %v1004 = vunpack.c.l.b16 %v772
      %v1005 = vunpack.c.l.b16 %v773
      %v1006 = vunpack.c.l.b16 %v774
      %v1007 = vunpack.c.l.b16 %v775
      %v1008 = vunpack.c.l.b16 %v776
      %v1009 = vunpack.c.l.b16 %v777
      %v1010 = vunpack.c.l.b16 %v778
      %v1011 = vunpack.c.l.b16 %v779
      %v1012 = vunpack.c.l.b16 %v780
      %v1013 = vunpack.c.l.b16 %v781
      %v1014 = vunpack.c.l.b16 %v782
      %v1015 = vunpack.c.l.b16 %v783
      %v1016 = vunpack.c.l.b16 %v784
      %v1017 = vunpack.c.l.b16 %v785
      %v1018 = vunpack.c.l.b16 %v786
      %v1019 = vunpack.c.l.b16 %v787
      %v1020 = vunpack.c.l.b16 %v788
      %v1021 = vunpack.c.l.b16 %v789
      %v1022 = vunpack.c.l.b16 %v790
      %v1023 = vunpack.c.l.b16 %v791
      %v1024 = vunpack.c.l.b16 %v792
      %v1025 = vunpack.c.l.b16 %v793
      %v1026 = vunpack.c.l.b16 %v794
      %v1027 = vunpack.c.l.b16 %v795
      %v1028 = vunpack.c.l.b16 %v796
      %v1029 = vunpack.c.l.b16 %v797
      %v1030 = vunpack.c.l.b16 %v798
      %v1031 = vunpack.c.l.b16 %v799
      %v1032 = vunpack.c.l.b16 %v800
      %v1033 = vunpack.c.l.b16 %v801
      %v1034 = vunpack.c.l.b16 %v802
      %v1035 = vunpack.c.l.b16 %v803
      %v1036 = vunpack.c.l.b16 %v804
      %v1037 = vunpack.c.l.b16 %v805
      %v1038 = vunpack.c.l.b16 %v806
      %v1039 = vunpack.c.l.b16 %v807
      %v1040 = vunpack.c.l.b16 %v808
      %v1041 = vunpack.c.l.b16 %v809
      %v1042 = vunpack.c.l.b16 %v810
      %v1043 = vunpack.c.l.b16 %v811
      %v1044 = vunpack.c.l.b16 %v812
      %v1045 = vunpack.c.l.b16 %v813
      %v1046 = vunpack.c.l.b16 %v814
      %v1047 = vunpack.c.l.b16 %v815
      %v1048 = vunpack.c.l.b16 %v816
      %v1049 = vunpack.c.l.b16 %v817
      %v1050 = vunpack.c.l.b16 %v818
      %v1051 = vunpack.c.l.b16 %v819
      %v1052 = vunpack.c.l.b16 %v820
      %v1053 = vunpack.c.l.b16 %v821
      %v1054 = vunpack.c.l.b16 %v822
      %v1055 = vunpack.c.l.b16 %v823
      %v1056 = vunpack.c.l.b16 %v824
      %v1057 = vunpack.c.l.b16 %v825
      %v1058 = vunpack.c.l.b16 %v826
      %v1059 = vunpack.c.l.b16 %v827
      %v1060 = vunpack.c.l.b16 %v828
      %v1061 = vunpack.c.l.b16 %v829
      %v1062 = vunpack.c.l.b16 %v830
      %v1063 = vunpack.c.l.b16 %v831
      %v1064 = vunpack.c.l.b16 %v832
      %v1065 = vunpack.c.l.b16 %v833
      %v1066 = vunpack.c.l.b16 %v834
      %v1067 = vunpack.c.l.b16 %v835
      %v1068 = vunpack.c.l.b16 %v836
      %v1069 = vunpack.c.l.b16 %v837
      %v1070 = vunpack.c.l.b16 %v838
      %v1071 = vunpack.c.l.b16 %v839
      %v1072 = vunpack.c.l.b16 %v840
      %v1073 = vunpack.c.l.b16 %v841
      %v1074 = vunpack.c.l.b16 %v842
      %v1075 = vunpack.c.l.b16 %v843
      %v1076 = vunpack.c.l.b16 %v844
      %v1077 = vpack.c.b16 %v982, %v981
      %v1078 = vpack.c.b16 %v984, %v983
      %v1079 = vpack.c.b16 %v986, %v985
      %v1080 = vpack.c.b16 %v988, %v987
      %v1081 = vpack.c.b16 %v990, %v989
      %v1082 = vpack.c.b16 %v992, %v991
      %v1083 = vpack.c.b16 %v994, %v993
      %v1084 = vpack.c.b16 %v996, %v995
      %v1085 = vpack.c.b16 %v998, %v997
      %v1086 = vpack.c.b16 %v1000, %v999
      %v1087 = vpack.c.b16 %v1002, %v1001
      %v1088 = vpack.c.b16 %v1004, %v1003
      %v1089 = vpack.c.b16 %v1006, %v1005
      %v1090 = vpack.c.b16 %v1008, %v1007
      %v1091 = vpack.c.b16 %v1010, %v1009
      %v1092 = vpack.c.b16 %v1012, %v1011
      %v1093 = vpack.c.b16 %v1014, %v1013
      %v1094 = vpack.c.b16 %v1016, %v1015
      %v1095 = vpack.c.b16 %v1018, %v1017
      %v1096 = vpack.c.b16 %v1020, %v1019
      %v1097 = vpack.c.b16 %v1022, %v1021
      %v1098 = vpack.c.b16 %v1024, %v1023
      %v1099 = vpack.c.b16 %v1026, %v1025
      %v1100 = vpack.c.b16 %v1028, %v1027
      %v1101 = vpack.c.b16 %v1030, %v1029
      %v1102 = vpack.c.b16 %v1032, %v1031
      %v1103 = vpack.c.b16 %v1034, %v1033
      %v1104 = vpack.c.b16 %v1036, %v1035
      %v1105 = vpack.c.b16 %v1038, %v1037
      %v1106 = vpack.c.b16 %v1040, %v1039
      %v1107 = vpack.c.b16 %v1042, %v1041
      %v1108 = vpack.c.b16 %v1044, %v1043
      %v1109 = vpack.c.b16 %v1046, %v1045
      %v1110 = vpack.c.b16 %v1048, %v1047
      %v1111 = vpack.c.b16 %v1050, %v1049
      %v1112 = vpack.c.b16 %v1052, %v1051
      %v1113 = vpack.c.b16 %v1054, %v1053
      %v1114 = vpack.c.b16 %v1056, %v1055
      %v1115 = vpack.c.b16 %v1058, %v1057
      %v1116 = vpack.c.b16 %v1060, %v1059
      %v1117 = vpack.c.b16 %v1062, %v1061
      %v1118 = vpack.c.b16 %v1064, %v1063
      %v1119 = vpack.c.b16 %v1066, %v1065
      %v1120 = vpack.c.b16 %v1068, %v1067
      %v1121 = vpack.c.b16 %v1070, %v1069
      %v1122 = vpack.c.b16 %v1072, %v1071
      %v1123 = vpack.c.b16 %v1074, %v1073
      %v1124 = vpack.c.b16 %v1076, %v1075
      %1173 = vmatprep.subr.bf16.mxu0 0
      %1174 = vmatpush1.bf16.msra.mxu0 %v1077
      %1175 = vmatprep.subr.bf16.mxu0 0
      %1176 = vmatpush1.bf16.msra.mxu0 %v1078
      %1177 = vmatprep.subr.bf16.mxu0 0
      %1178 = vmatpush1.bf16.msra.mxu0 %v1079
      %1179 = vmatprep.subr.bf16.mxu0 0
      %1180 = vmatpush1.bf16.msra.mxu0 %v1080
      %1181 = vmatprep.subr.bf16.mxu0 0
      %1182 = vmatpush1.bf16.msra.mxu0 %v1081
      %1183 = vmatprep.subr.bf16.mxu0 0
      %1184 = vmatpush1.bf16.msra.mxu0 %v1082
      %1185 = vmatprep.subr.bf16.mxu0 0
      %1186 = vmatpush1.bf16.msra.mxu0 %v1083
      %1187 = vmatprep.subr.bf16.mxu0 0
      %1188 = vmatpush1.bf16.msra.mxu0 %v1084
      %1189 = vmatprep.subr.bf16.mxu0 0
      %1190 = vmatpush1.bf16.msra.mxu0 %v1085
      %1191 = vmatprep.subr.bf16.mxu0 0
      %1192 = vmatpush1.bf16.msra.mxu0 %v1086
      %1193 = vmatprep.subr.bf16.mxu0 0
      %1194 = vmatpush1.bf16.msra.mxu0 %v1087
      %1195 = vmatprep.subr.bf16.mxu0 0
      %1196 = vmatpush1.bf16.msra.mxu0 %v1088
      %1197 = vmatprep.subr.bf16.mxu0 0
      %1198 = vmatpush1.bf16.msra.mxu0 %v1089
      %1199 = vmatprep.subr.bf16.mxu0 0
      %1200 = vmatpush1.bf16.msra.mxu0 %v1090
      %1201 = vmatprep.subr.bf16.mxu0 0
      %1202 = vmatpush1.bf16.msra.mxu0 %v1091
      %1203 = vmatprep.subr.bf16.mxu0 0
      %1204 = vmatpush1.bf16.msra.mxu0 %v1092
      %1205 = vmatprep.mubr.bf16.mxu0 %v869
      %1206 = vmatmul.mubr.bf16.gmra.mrb[0].mxu0 %v861
      %v1207 = vpop.f32.mrb[0].mxu0
      %v1208 = vadd.f32 %v850, %v1207
      %v1209 = vpop.f32.mrb[0].mxu0
      %v1210 = vpop.f32.mrb[0].mxu0
      %v1211 = vpop.f32.mrb[0].mxu0
      %1212 = vdwg.mxu0
      %1213 = vmatprep.subr.bf16.mxu0 0
      %1214 = vmatpush1.bf16.msra.mxu0 %v1093
      %1215 = vmatprep.subr.bf16.mxu0 0
      %1216 = vmatpush1.bf16.msra.mxu0 %v1094
      %1217 = vmatprep.subr.bf16.mxu0 0
      %1218 = vmatpush1.bf16.msra.mxu0 %v1095
      %1219 = vmatprep.subr.bf16.mxu0 0
      %1220 = vmatpush1.bf16.msra.mxu0 %v1096
      %1221 = vmatprep.subr.bf16.mxu0 0
      %1222 = vmatpush1.bf16.msra.mxu0 %v1097
      %1223 = vmatprep.subr.bf16.mxu0 0
      %1224 = vmatpush1.bf16.msra.mxu0 %v1098
      %1225 = vmatprep.subr.bf16.mxu0 0
      %1226 = vmatpush1.bf16.msra.mxu0 %v1099
      %1227 = vmatprep.subr.bf16.mxu0 0
      %1228 = vmatpush1.bf16.msra.mxu0 %v1100
      %1229 = vmatprep.subr.bf16.mxu0 0
      %1230 = vmatpush1.bf16.msra.mxu0 %v1101
      %1231 = vmatprep.subr.bf16.mxu0 0
      %1232 = vmatpush1.bf16.msra.mxu0 %v1102
      %1233 = vmatprep.subr.bf16.mxu0 0
      %1234 = vmatpush1.bf16.msra.mxu0 %v1103
      %1235 = vmatprep.subr.bf16.mxu0 0
      %1236 = vmatpush1.bf16.msra.mxu0 %v1104
      %1237 = vmatprep.subr.bf16.mxu0 0
      %1238 = vmatpush1.bf16.msra.mxu0 %v1105
      %1239 = vmatprep.subr.bf16.mxu0 0
      %1240 = vmatpush1.bf16.msra.mxu0 %v1106
      %1241 = vmatprep.subr.bf16.mxu0 0
      %1242 = vmatpush1.bf16.msra.mxu0 %v1107
      %1243 = vmatprep.subr.bf16.mxu0 0
      %1244 = vmatpush1.bf16.msra.mxu0 %v1108
      %1245 = vmatprep.mubr.bf16.mxu0 %v870
      %1246 = vmatmul.mubr.bf16.gmra.mrb[0].mxu0 %v868
      %v1247 = vpop.f32.mrb[0].mxu0
      %v1248 = vadd.f32 %v1208, %v1247
      %v1249 = vpop.f32.mrb[0].mxu0
      %v1250 = vpop.f32.mrb[0].mxu0
      %v1251 = vpop.f32.mrb[0].mxu0
      %1252 = vdwg.mxu0
      %1253 = vmatprep.subr.bf16.mxu0 0
      %1254 = vmatpush1.bf16.msra.mxu0 %v1109
      %1255 = vmatprep.subr.bf16.mxu0 0
      %1256 = vmatpush1.bf16.msra.mxu0 %v1110
      %1257 = vmatprep.subr.bf16.mxu0 0
      %1258 = vmatpush1.bf16.msra.mxu0 %v1111
      %1259 = vmatprep.subr.bf16.mxu0 0
      %1260 = vmatpush1.bf16.msra.mxu0 %v1112
      %1261 = vmatprep.subr.bf16.mxu0 0
      %1262 = vmatpush1.bf16.msra.mxu0 %v1113
      %1263 = vmatprep.subr.bf16.mxu0 0
      %1264 = vmatpush1.bf16.msra.mxu0 %v1114
      %1265 = vmatprep.subr.bf16.mxu0 0
      %1266 = vmatpush1.bf16.msra.mxu0 %v1115
      %1267 = vmatprep.subr.bf16.mxu0 0
      %1268 = vmatpush1.bf16.msra.mxu0 %v1116
      %1269 = vmatprep.subr.bf16.mxu0 0
      %1270 = vmatpush1.bf16.msra.mxu0 %v1117
      %1271 = vmatprep.subr.bf16.mxu0 0
      %1272 = vmatpush1.bf16.msra.mxu0 %v1118
      %1273 = vmatprep.subr.bf16.mxu0 0
      %1274 = vmatpush1.bf16.msra.mxu0 %v1119
      %1275 = vmatprep.subr.bf16.mxu0 0
      %1276 = vmatpush1.bf16.msra.mxu0 %v1120
      %1277 = vmatprep.subr.bf16.mxu0 0
      %1278 = vmatpush1.bf16.msra.mxu0 %v1121
      %1279 = vmatprep.subr.bf16.mxu0 0
      %1280 = vmatpush1.bf16.msra.mxu0 %v1122
      %1281 = vmatprep.subr.bf16.mxu0 0
      %1282 = vmatpush1.bf16.msra.mxu0 %v1123
      %1283 = vmatprep.subr.bf16.mxu0 0
      %1284 = vmatpush1.bf16.msra.mxu0 %v1124
      %1285 = vmatprep.mubr.bf16.mxu0 %v878
      %1286 = vmatmul.mubr.bf16.gmra.mrb[0].mxu0 %v877
      %v1287 = vpop.f32.mrb[0].mxu0
      %v1288 = vadd.f32 %v1248, %v1287
      %v1289 = vpop.f32.mrb[0].mxu0
      %v1290 = vpop.f32.mrb[0].mxu0
      %v1291 = vpop.f32.mrb[0].mxu0
      %1292 = vdwg.mxu0
      %v1293 = vld [vmem:[%s4] sm:$0x1]
      %v1295 = vlaneseq
      %v1296 = vshrl.u32 %v1295, 7
      %v1297 = vsub.s32 0, %v1296
      %v1298 = vrot.slane %v1293, %v1297
      %v1300 = vadd.f32 %v1288, %v1298
      %v1301 = vld [vmem:[%s736] sm:$0x1f]
      %v1302 = vld [vmem:[%s5] sm:$0x1]
      %v1304 = vlaneseq
      %v1305 = vshrl.u32 %v1304, 7
      %v1306 = vsub.s32 0, %v1305
      %v1307 = vrot.slane %v1302, %v1306
      %v1309 = vadd.f32 %v1301, %v1307
      %1310 = vst [vmem:[%s741] sm:$0xf] %v1300
      %1311 = vst [vmem:[%s741 + $0x4] sm:$0x1f] %v1309
      %v1312 = vld [vmem:[%s741] sm:$0xff]
      %v1313 = vld [vmem:[%s741 + $0x8] sm:$0x1]
      %v1314 = vld [vmem:[%s6] sm:$0x1]
      %v1315 = vld [vmem:[%s7] sm:$0x1]
      %v1316 = vld [vmem:[%s8] sm:$0xff]
      %v1317 = vld [vmem:[%s8 + $0x8] sm:$0xf]
      %v1318 = vld [vmem:[%s8 + $0xc] sm:$0xff]
      %v1319 = vld [vmem:[%s8 + $0x14] sm:$0xf]
      %v1320 = vld [vmem:[%s8 + $0x18] sm:$0xff]
      %v1321 = vld [vmem:[%s8 + $0x20] sm:$0xf]
      %v1322 = vld [vmem:[%s8 + $0x24] sm:$0xff]
      %v1323 = vld [vmem:[%s8 + $0x2c] sm:$0xf]
      %v1324 = vld [vmem:[%s8 + $0x30] sm:$0xff]
      %v1325 = vld [vmem:[%s8 + $0x38] sm:$0xf]
      %v1326 = vld [vmem:[%s8 + $0x3c] sm:$0xff]
      %v1327 = vld [vmem:[%s8 + $0x44] sm:$0xf]
      %v1328 = vld [vmem:[%s8 + $0x48] sm:$0xff]
      %v1329 = vld [vmem:[%s8 + $0x50] sm:$0xf]
      %v1330 = vld [vmem:[%s8 + $0x54] sm:$0xff]
      %v1331 = vld [vmem:[%s8 + $0x5c] sm:$0xf]
      %v1332 = vld [vmem:[%s8 + $0x60] sm:$0xff]
      %v1333 = vld [vmem:[%s8 + $0x68] sm:$0xf]
      %v1334 = vld [vmem:[%s8 + $0x6c] sm:$0xff]
      %v1335 = vld [vmem:[%s8 + $0x74] sm:$0xf]
      %v1336 = vld [vmem:[%s8 + $0x78] sm:$0xff]
      %v1337 = vld [vmem:[%s8 + $0x80] sm:$0xf]
      %v1338 = vld [vmem:[%s8 + $0x84] sm:$0xff]
      %v1339 = vld [vmem:[%s8 + $0x8c] sm:$0xf]
      %v1340 = vld [vmem:[%s8 + $0x90] sm:$0xff]
      %v1341 = vld [vmem:[%s8 + $0x98] sm:$0xf]
      %v1342 = vld [vmem:[%s8 + $0x9c] sm:$0xff]
      %v1343 = vld [vmem:[%s8 + $0xa4] sm:$0xf]
      %v1344 = vld [vmem:[%s8 + $0xa8] sm:$0xff]
      %v1345 = vld [vmem:[%s8 + $0xb0] sm:$0xf]
      %v1346 = vld [vmem:[%s8 + $0xb4] sm:$0xff]
      %v1347 = vld [vmem:[%s8 + $0xbc] sm:$0xf]
      %v1348 = vld [vmem:[%s9] sm:$0x7]
      %v1349 = vld [vmem:[%s10] sm:$0xf]
      %v1350 = vld [vmem:[%s10 + $0x4] sm:$0xf]
      %v1351 = vld [vmem:[%s10 + $0x8] sm:$0xf]
      %v1352 = vld [vmem:[%s10 + $0xc] sm:$0xf]
      %v1353 = vld [vmem:[%s10 + $0x10] sm:$0xf]
      %v1354 = vld [vmem:[%s10 + $0x14] sm:$0xf]
      %v1355 = vld [vmem:[%s10 + $0x18] sm:$0xf]
      %v1356 = vld [vmem:[%s10 + $0x1c] sm:$0xf]
      %v1357 = vld [vmem:[%s10 + $0x20] sm:$0xf]
      %v1358 = vld [vmem:[%s10 + $0x24] sm:$0xf]
      %v1359 = vld [vmem:[%s10 + $0x28] sm:$0xf]
      %v1360 = vld [vmem:[%s10 + $0x2c] sm:$0xf]
      %v1361 = vld [vmem:[%s10 + $0x30] sm:$0xf]
      %v1362 = vld [vmem:[%s10 + $0x34] sm:$0xf]
      %v1363 = vld [vmem:[%s10 + $0x38] sm:$0xf]
      %v1364 = vld [vmem:[%s10 + $0x3c] sm:$0xf]
      %v1365 = vld [vmem:[%s11] sm:$0x1]
      %v1366 = vld [vmem:[%s12] sm:$0x1]
      %v1367 = vld [vmem:[%s13] sm:$0x1]
      %v1368 = vld [vmem:[%s14] sm:$0xf]
      %v1369 = vld [vmem:[%s14 + $0x4] sm:$0xf]
      %v1370 = vld [vmem:[%s14 + $0x8] sm:$0xf]
      %v1371 = vld [vmem:[%s14 + $0xc] sm:$0xf]
      %v1372 = vld [vmem:[%s14 + $0x10] sm:$0xf]
      %v1373 = vld [vmem:[%s14 + $0x14] sm:$0xf]
      %v1374 = vld [vmem:[%s14 + $0x18] sm:$0xf]
      %v1375 = vld [vmem:[%s14 + $0x1c] sm:$0xf]
      %v1376 = vld [vmem:[%s14 + $0x20] sm:$0xf]
      %v1377 = vld [vmem:[%s14 + $0x24] sm:$0xf]
      %v1378 = vld [vmem:[%s14 + $0x28] sm:$0xf]
      %v1379 = vld [vmem:[%s14 + $0x2c] sm:$0xf]
      %v1380 = vld [vmem:[%s14 + $0x30] sm:$0xf]
      %v1381 = vld [vmem:[%s14 + $0x34] sm:$0xf]
      %v1382 = vld [vmem:[%s14 + $0x38] sm:$0xf]
      %v1383 = vld [vmem:[%s14 + $0x3c] sm:$0xf]
      %v1384 = vld [vmem:[%s15] sm:$0x1]
      %v1385 = vld [vmem:[%s16] sm:$0xf]
      %v1386 = vld [vmem:[%s16 + $0x4] sm:$0xf]
      %v1387 = vld [vmem:[%s16 + $0x8] sm:$0xf]
      %v1388 = vld [vmem:[%s16 + $0xc] sm:$0xf]
      %v1389 = vld [vmem:[%s16 + $0x10] sm:$0xf]
      %v1390 = vld [vmem:[%s16 + $0x14] sm:$0xf]
      %v1391 = vld [vmem:[%s16 + $0x18] sm:$0xf]
      %v1392 = vld [vmem:[%s16 + $0x1c] sm:$0xf]
      %v1393 = vld [vmem:[%s16 + $0x20] sm:$0xf]
      %v1394 = vld [vmem:[%s16 + $0x24] sm:$0xf]
      %v1395 = vld [vmem:[%s16 + $0x28] sm:$0xf]
      %v1396 = vld [vmem:[%s16 + $0x2c] sm:$0xf]
      %v1397 = vld [vmem:[%s16 + $0x30] sm:$0xf]
      %v1398 = vld [vmem:[%s16 + $0x34] sm:$0xf]
      %v1399 = vld [vmem:[%s16 + $0x38] sm:$0xf]
      %v1400 = vld [vmem:[%s16 + $0x3c] sm:$0xf]
      %v1401 = vld [vmem:[%s17] sm:$0x1]
      %1402 = vadd.xlane.f32.xlu0 %v1312
      %v1403 = vpop.xlane.xlu0 %1402
      %vm1404 = vcmask 1040384
      %v1405 = vsel %vm1404, %v1313, 0.0
      %1406 = vadd.xlane.f32.xlu0 %v1405
      %v1407 = vpop.xlane.xlu0 %1406
      %v1408 = vmul.f32 %v1312, %v1312
      %v1409 = vmul.f32 %v1313, %v1313
      %1410 = vadd.xlane.f32.xlu0 %v1408
      %v1411 = vpop.xlane.xlu0 %1410
      %v1412 = vsel %vm1404, %v1409, 0.0
      %1413 = vadd.xlane.f32.xlu0 %v1412
      %v1414 = vpop.xlane.xlu0 %1413
      %v1415 = vmul.f32 %v1403, 0.03125
      %v1416 = vmul.f32 %v1407, 0.03125
      %v1417 = vmul.f32 %v1411, 0.03125
      %v1418 = vmul.f32 %v1414, 0.03125
      %v1419 = vmul.f32 %v1415, %v1415
      %v1420 = vmul.f32 %v1416, %v1416
      %v1421 = vsub.f32 %v1417, %v1419
      %v1422 = vsub.f32 %v1418, %v1420
      %v1423 = vsub.f32 %v1312, %v1415
      %v1424 = vsub.f32 %v1313, %v1416
      %v1425 = vadd.f32 %v1421, 1e-06
      %v1426 = vadd.f32 %v1422, 1e-06
      %v1427 = vrsqrt.pop %v1425
      %v1428 = vrsqrt.pop %v1426
      %v1429 = vmul.f32 %v1423, %v1427
      %v1430 = vmul.f32 %v1424, %v1428
      %v1432 = vlaneseq
      %v1433 = vshrl.u32 %v1432, 7
      %v1434 = vsub.s32 0, %v1433
      %v1435 = vrot.slane %v1314, %v1434
      %v1437 = vmul.f32 %v1429, %v1435
      %v1438 = vmul.f32 %v1430, %v1435
      %v1440 = vlaneseq
      %v1441 = vshrl.u32 %v1440, 7
      %v1442 = vsub.s32 0, %v1441
      %v1443 = vrot.slane %v1315, %v1442
      %v1445 = vadd.f32 %v1437, %v1443
      %v1446 = vadd.f32 %v1438, %v1443
      %v1447 = vpack.c.bf16 %v1446, %v1445
      %v1449 = vlaneseq
      %v1450 = vshrl.u32 %v1449, 7
      %v1451 = vsub.s32 0, %v1450
      %v1452 = vrot.slane %v1348, %v1451
      %v1453 = vlaneseq
      %v1454 = vshrl.u32 %v1453, 7
      %v1455 = vsub.s32 1, %v1454
      %v1456 = vrot.slane %v1348, %v1455
      %v1457 = vlaneseq
      %v1458 = vshrl.u32 %v1457, 7
      %v1459 = vsub.s32 2, %v1458
      %v1460 = vrot.slane %v1348, %v1459
      %v1496 = vunpack.c.l.b16 %v1316
      %v1497 = vunpack.c.h.b16 %v1316
      %v1498 = vunpack.c.l.b16 %v1317
      %v1499 = vunpack.c.l.b16 %v1318
      %v1500 = vunpack.c.h.b16 %v1318
      %v1501 = vunpack.c.l.b16 %v1319
      %v1502 = vunpack.c.l.b16 %v1320
      %v1503 = vunpack.c.h.b16 %v1320
      %v1504 = vunpack.c.l.b16 %v1321
      %v1505 = vunpack.c.l.b16 %v1322
      %v1506 = vunpack.c.h.b16 %v1322
      %v1507 = vunpack.c.l.b16 %v1323
      %v1508 = vunpack.c.l.b16 %v1324
      %v1509 = vunpack.c.h.b16 %v1324
      %v1510 = vunpack.c.l.b16 %v1325
      %v1511 = vunpack.c.l.b16 %v1326
      %v1512 = vunpack.c.h.b16 %v1326
      %v1513 = vunpack.c.l.b16 %v1327
      %v1514 = vunpack.c.l.b16 %v1328
      %v1515 = vunpack.c.h.b16 %v1328
      %v1516 = vunpack.c.l.b16 %v1329
      %v1517 = vunpack.c.l.b16 %v1330
      %v1518 = vunpack.c.h.b16 %v1330
      %v1519 = vunpack.c.l.b16 %v1331
      %v1520 = vunpack.c.l.b16 %v1332
      %v1521 = vunpack.c.h.b16 %v1332
      %v1522 = vunpack.c.l.b16 %v1333
      %v1523 = vunpack.c.l.b16 %v1334
      %v1524 = vunpack.c.h.b16 %v1334
      %v1525 = vunpack.c.l.b16 %v1335
      %v1526 = vunpack.c.l.b16 %v1336
      %v1527 = vunpack.c.h.b16 %v1336
      %v1528 = vunpack.c.l.b16 %v1337
      %v1529 = vunpack.c.l.b16 %v1338
      %v1530 = vunpack.c.h.b16 %v1338
      %v1531 = vunpack.c.l.b16 %v1339
      %v1532 = vunpack.c.l.b16 %v1340
      %v1533 = vunpack.c.h.b16 %v1340
      %v1534 = vunpack.c.l.b16 %v1341
      %v1535 = vunpack.c.l.b16 %v1342
      %v1536 = vunpack.c.h.b16 %v1342
      %v1537 = vunpack.c.l.b16 %v1343
      %v1538 = vunpack.c.l.b16 %v1344
      %v1539 = vunpack.c.h.b16 %v1344
      %v1540 = vunpack.c.l.b16 %v1345
      %v1541 = vunpack.c.l.b16 %v1346
      %v1542 = vunpack.c.h.b16 %v1346
      %v1543 = vunpack.c.l.b16 %v1347
      %v1544 = vpack.c.b16 %v1499, %v1496
      %v1545 = vpack.c.b16 %v1500, %v1497
      %v1546 = vpack.c.b16 %v1501, %v1498
      %v1547 = vpack.c.b16 %v1505, %v1502
      %v1548 = vpack.c.b16 %v1506, %v1503
      %v1549 = vpack.c.b16 %v1507, %v1504
      %v1550 = vpack.c.b16 %v1511, %v1508
      %v1551 = vpack.c.b16 %v1512, %v1509
      %v1552 = vpack.c.b16 %v1513, %v1510
      %v1553 = vpack.c.b16 %v1517, %v1514
      %v1554 = vpack.c.b16 %v1518, %v1515
      %v1555 = vpack.c.b16 %v1519, %v1516
      %v1556 = vpack.c.b16 %v1523, %v1520
      %v1557 = vpack.c.b16 %v1524, %v1521
      %v1558 = vpack.c.b16 %v1525, %v1522
      %v1559 = vpack.c.b16 %v1529, %v1526
      %v1560 = vpack.c.b16 %v1530, %v1527
      %v1561 = vpack.c.b16 %v1531, %v1528
      %v1562 = vpack.c.b16 %v1535, %v1532
      %v1563 = vpack.c.b16 %v1536, %v1533
      %v1564 = vpack.c.b16 %v1537, %v1534
      %v1565 = vpack.c.b16 %v1541, %v1538
      %v1566 = vpack.c.b16 %v1542, %v1539
      %v1567 = vpack.c.b16 %v1543, %v1540
      %1592 = vmatprep.subr.bf16.mxu0 %v1545
      %1593 = vmatpush1.bf16.msra.mxu0 %v1544
      %1594 = vmatprep.subr.bf16.mxu0 %v1548
      %1595 = vmatpush1.bf16.msra.mxu0 %v1547
      %1596 = vmatprep.subr.bf16.mxu0 %v1551
      %1597 = vmatpush1.bf16.msra.mxu0 %v1550
      %1598 = vmatprep.subr.bf16.mxu0 %v1554
      %1599 = vmatpush1.bf16.msra.mxu0 %v1553
      %1600 = vmatprep.subr.bf16.mxu0 %v1557
      %1601 = vmatpush1.bf16.msra.mxu0 %v1556
      %1602 = vmatprep.subr.bf16.mxu0 %v1560
      %1603 = vmatpush1.bf16.msra.mxu0 %v1559
      %1604 = vmatprep.subr.bf16.mxu0 %v1563
      %1605 = vmatpush1.bf16.msra.mxu0 %v1562
      %1606 = vmatprep.subr.bf16.mxu0 %v1566
      %1607 = vmatpush1.bf16.msra.mxu0 %v1565
      %1608 = vmatprep.subr.bf16.mxu0 0
      %1609 = vmatpush1.bf16.msra.mxu0 0
      %1610 = vmatprep.subr.bf16.mxu0 0
      %1611 = vmatpush1.bf16.msra.mxu0 0
      %1612 = vmatprep.subr.bf16.mxu0 0
      %1613 = vmatpush1.bf16.msra.mxu0 0
      %1614 = vmatprep.subr.bf16.mxu0 0
      %1615 = vmatpush1.bf16.msra.mxu0 0
      %1616 = vmatprep.subr.bf16.mxu0 0
      %1617 = vmatpush1.bf16.msra.mxu0 0
      %1618 = vmatprep.subr.bf16.mxu0 0
      %1619 = vmatpush1.bf16.msra.mxu0 0
      %1620 = vmatprep.subr.bf16.mxu0 0
      %1621 = vmatpush1.bf16.msra.mxu0 0
      %1622 = vmatprep.subr.bf16.mxu0 0
      %1623 = vmatpush1.bf16.msra.mxu0 0
      %1624 = vmatprep.mubr.bf16.mxu0 0
      %1625 = vmatmul.mubr.bf16.gmra.mrb[0].mxu0 %v1447
      %v1626 = vpop.f32.mrb[0].mxu0
      %v1627 = vadd.f32 %v1452, %v1626
      %v1628 = vpop.f32.mrb[0].mxu0
      %v1629 = vadd.f32 %v1456, %v1628
      %v1630 = vpop.f32.mrb[0].mxu0
      %v1631 = vadd.f32 %v1452, %v1630
      %v1632 = vpop.f32.mrb[0].mxu0
      %v1633 = vadd.f32 %v1456, %v1632
      %1634 = vdwg.mxu0
      %1635 = vmatprep.subr.bf16.mxu0 0
      %1636 = vmatpush1.bf16.msra.mxu0 %v1546
      %1637 = vmatprep.subr.bf16.mxu0 0
      %1638 = vmatpush1.bf16.msra.mxu0 %v1549
      %1639 = vmatprep.subr.bf16.mxu0 0
      %1640 = vmatpush1.bf16.msra.mxu0 %v1552
      %1641 = vmatprep.subr.bf16.mxu0 0
      %1642 = vmatpush1.bf16.msra.mxu0 %v1555
      %1643 = vmatprep.subr.bf16.mxu0 0
      %1644 = vmatpush1.bf16.msra.mxu0 %v1558
      %1645 = vmatprep.subr.bf16.mxu0 0
      %1646 = vmatpush1.bf16.msra.mxu0 %v1561
      %1647 = vmatprep.subr.bf16.mxu0 0
      %1648 = vmatpush1.bf16.msra.mxu0 %v1564
      %1649 = vmatprep.subr.bf16.mxu0 0
      %1650 = vmatpush1.bf16.msra.mxu0 %v1567
      %1651 = vmatprep.subr.bf16.mxu0 0
      %1652 = vmatpush1.bf16.msra.mxu0 0
      %1653 = vmatprep.subr.bf16.mxu0 0
      %1654 = vmatpush1.bf16.msra.mxu0 0
      %1655 = vmatprep.subr.bf16.mxu0 0
      %1656 = vmatpush1.bf16.msra.mxu0 0
      %1657 = vmatprep.subr.bf16.mxu0 0
      %1658 = vmatpush1.bf16.msra.mxu0 0
      %1659 = vmatprep.subr.bf16.mxu0 0
      %1660 = vmatpush1.bf16.msra.mxu0 0
      %1661 = vmatprep.subr.bf16.mxu0 0
      %1662 = vmatpush1.bf16.msra.mxu0 0
      %1663 = vmatprep.subr.bf16.mxu0 0
      %1664 = vmatpush1.bf16.msra.mxu0 0
      %1665 = vmatprep.subr.bf16.mxu0 0
      %1666 = vmatpush1.bf16.msra.mxu0 0
      %1667 = vmatprep.mubr.bf16.mxu0 0
      %1668 = vmatmul.mubr.bf16.gmra.mrb[0].mxu0 %v1447
      %v1669 = vpop.f32.mrb[0].mxu0
      %v1670 = vadd.f32 %v1460, %v1669
      %v1671 = vpop.f32.mrb[0].mxu0
      %v1672 = vpop.f32.mrb[0].mxu0
      %v1673 = vadd.f32 %v1460, %v1672
      %v1674 = vpop.f32.mrb[0].mxu0
      %1675 = vdwg.mxu0
      %v1676 = vpack.c.bf16 %v1633, %v1629
      %v1677 = vpack.c.bf16 %v1673, %v1670
      %v1678 = vlaneseq
      %v1679 = vand.u32 %v1678, 127
      %vm1680 = vcmp.ge.s32.totalorder %v1679, 0
      %vm1681 = vcmp.lt.s32.totalorder %v1679, 8
      %vm1682 = vmand %vm1680, %vm1681
      %v1683 = vsel %vm1682, 1.0, 0.0
      %v1684 = vmul.f32 %v1627, %v1683
      %v1685 = vmul.f32 %v1631, %v1683
      %v1686 = vpack.c.bf16 %v1685, %v1684
      %1687 = vmatprep.subr.bf16.mxu0 0
      %1688 = vmatpush1.bf16.xpose.msra.mxu0 %v1676
      %1689 = vmatprep.subr.bf16.mxu0 0
      %1690 = vmatpush1.bf16.xpose.msra.mxu0 0
      %1691 = vmatprep.subr.bf16.mxu0 0
      %1692 = vmatpush1.bf16.xpose.msra.mxu0 0
      %1693 = vmatprep.subr.bf16.mxu0 0
      %1694 = vmatpush1.bf16.xpose.msra.mxu0 0
      %1695 = vmatprep.subr.bf16.mxu0 0
      %1696 = vmatpush1.bf16.xpose.msra.mxu0 0
      %1697 = vmatprep.subr.bf16.mxu0 0
      %1698 = vmatpush1.bf16.xpose.msra.mxu0 0
      %1699 = vmatprep.subr.bf16.mxu0 0
      %1700 = vmatpush1.bf16.xpose.msra.mxu0 0
      %1701 = vmatprep.subr.bf16.mxu0 0
      %1702 = vmatpush1.bf16.xpose.msra.mxu0 0
      %1703 = vmatprep.subr.bf16.mxu0 0
      %1704 = vmatpush1.bf16.xpose.msra.mxu0 0
      %1705 = vmatprep.subr.bf16.mxu0 0
      %1706 = vmatpush1.bf16.xpose.msra.mxu0 0
      %1707 = vmatprep.subr.bf16.mxu0 0
      %1708 = vmatpush1.bf16.xpose.msra.mxu0 0
      %1709 = vmatprep.subr.bf16.mxu0 0
      %1710 = vmatpush1.bf16.xpose.msra.mxu0 0
      %1711 = vmatprep.subr.bf16.mxu0 0
      %1712 = vmatpush1.bf16.xpose.msra.mxu0 0
      %1713 = vmatprep.subr.bf16.mxu0 0
      %1714 = vmatpush1.bf16.xpose.msra.mxu0 0
      %1715 = vmatprep.subr.bf16.mxu0 0
      %1716 = vmatpush1.bf16.xpose.msra.mxu0 0
      %1717 = vmatprep.subr.bf16.mxu0 0
      %1718 = vmatpush1.bf16.xpose.msra.mxu0 0
      %1719 = vmatprep.mubr.bf16.mxu0 0
      %1720 = vmatmul.mubr.bf16.gmra.mrb[0].mxu0 %v1686
      %v1721 = vpop.f32.mrb[0].mxu0
      %v1722 = vadd.f32 0.0, %v1721
      %v1723 = vpop.f32.mrb[0].mxu0
      %v1724 = vpop.f32.mrb[0].mxu0
      %v1725 = vadd.f32 0.0, %v1724
      %v1726 = vpop.f32.mrb[0].mxu0
      %1727 = vdwg.mxu0
      %vm1728 = vcmask 72704
      %v1729 = vsel %vm1728, %v1722, -inf
      %1730 = vmax.xlane.f32.xlu0 %v1729
      %v1731 = vpop.xlane.xlu0 %1730
      %vm1732 = vcmask 65536
      %v1733 = vsel %vm1732, %v1725, -inf
      %1734 = vmax.xlane.f32.xlu0 %v1733
      %v1735 = vpop.xlane.xlu0 %1734
      %v1736 = vsub.f32 %v1722, %v1731
      %v1737 = vsub.f32 %v1725, %v1735
      %v1738 = vmul.f32 %v1736, 1.442695
      %v1739 = vpow.pop %v1738
      %v1740 = vmul.f32 %v1737, 1.442695
      %v1741 = vpow.pop %v1740
      %v1742 = vsel %vm1728, %v1739, 0.0
      %1743 = vadd.xlane.f32.xlu0 %v1742
      %v1744 = vpop.xlane.xlu0 %1743
      %v1745 = vsel %vm1732, %v1741, 0.0
      %1746 = vadd.xlane.f32.xlu0 %v1745
      %v1747 = vpop.xlane.xlu0 %1746
      %v1748 = vrcp.pop %v1744
      %v1749 = vrcp.pop %v1747
      %v1750 = vmul.f32 %v1739, %v1748
      %v1751 = vmul.f32 %v1741, %v1749
      %v1752 = vpack.c.bf16 %v1751, %v1750
      %v1754 = vsel %vm1728, %v1752, 0
      %vm1756 = vcmask 1043456
      %vm1757 = vcmask 1044480
      %v1758 = vsel %vm1756, 4294967295, 65535
      %v1759 = vsel %vm1757, %v1758, 0
      %v1761 = vand.u32 %v1677, %v1759
      %1763 = vmatprep.subr.bf16.mxu0 0
      %1764 = vmatpush1.bf16.msra.mxu0 %v1761
      %1765 = vmatprep.subr.bf16.mxu0 0
      %1766 = vmatpush1.bf16.msra.mxu0 0
      %1767 = vmatprep.subr.bf16.mxu0 0
      %1768 = vmatpush1.bf16.msra.mxu0 0
      %1769 = vmatprep.subr.bf16.mxu0 0
      %1770 = vmatpush1.bf16.msra.mxu0 0
      %1771 = vmatprep.subr.bf16.mxu0 0
      %1772 = vmatpush1.bf16.msra.mxu0 0
      %1773 = vmatprep.subr.bf16.mxu0 0
      %1774 = vmatpush1.bf16.msra.mxu0 0
      %1775 = vmatprep.subr.bf16.mxu0 0
      %1776 = vmatpush1.bf16.msra.mxu0 0
      %1777 = vmatprep.subr.bf16.mxu0 0
      %1778 = vmatpush1.bf16.msra.mxu0 0
      %1779 = vmatprep.subr.bf16.mxu0 0
      %1780 = vmatpush1.bf16.msra.mxu0 0
      %1781 = vmatprep.subr.bf16.mxu0 0
      %1782 = vmatpush1.bf16.msra.mxu0 0
      %1783 = vmatprep.subr.bf16.mxu0 0
      %1784 = vmatpush1.bf16.msra.mxu0 0
      %1785 = vmatprep.subr.bf16.mxu0 0
      %1786 = vmatpush1.bf16.msra.mxu0 0
      %1787 = vmatprep.subr.bf16.mxu0 0
      %1788 = vmatpush1.bf16.msra.mxu0 0
      %1789 = vmatprep.subr.bf16.mxu0 0
      %1790 = vmatpush1.bf16.msra.mxu0 0
      %1791 = vmatprep.subr.bf16.mxu0 0
      %1792 = vmatpush1.bf16.msra.mxu0 0
      %1793 = vmatprep.subr.bf16.mxu0 0
      %1794 = vmatpush1.bf16.msra.mxu0 0
      %1795 = vmatprep.mubr.bf16.mxu0 0
      %1796 = vmatmul.mubr.bf16.gmra.mrb[0].mxu0 %v1754
      %v1797 = vpop.f32.mrb[0].mxu0
      %v1798 = vadd.f32 0.0, %v1797
      %v1799 = vpop.f32.mrb[0].mxu0
      %v1800 = vpop.f32.mrb[0].mxu0
      %v1801 = vadd.f32 0.0, %v1800
      %v1802 = vpop.f32.mrb[0].mxu0
      %1803 = vdwg.mxu0
      %v1804 = vmul.f32 %v1683, %v1798
      %v1805 = vmul.f32 %v1683, %v1801
      %v1806 = vadd.f32 %v1804, 0.0
      %v1807 = vadd.f32 %v1805, 0.0
      %vm1808 = vcmp.ge.s32.totalorder %v1679, 8
      %vm1809 = vcmp.lt.s32.totalorder %v1679, 16
      %vm1810 = vmand %vm1808, %vm1809
      %v1811 = vsel %vm1810, 1.0, 0.0
      %v1812 = vmul.f32 %v1627, %v1811
      %v1813 = vmul.f32 %v1631, %v1811
      %v1814 = vpack.c.bf16 %v1813, %v1812
      %1815 = vmatprep.subr.bf16.mxu0 0
      %1816 = vmatpush1.bf16.xpose.msra.mxu0 %v1676
      %1817 = vmatprep.subr.bf16.mxu0 0
      %1818 = vmatpush1.bf16.xpose.msra.mxu0 0
      %1819 = vmatprep.subr.bf16.mxu0 0
      %1820 = vmatpush1.bf16.xpose.msra.mxu0 0
      %1821 = vmatprep.subr.bf16.mxu0 0
      %1822 = vmatpush1.bf16.xpose.msra.mxu0 0
      %1823 = vmatprep.subr.bf16.mxu0 0
      %1824 = vmatpush1.bf16.xpose.msra.mxu0 0
      %1825 = vmatprep.subr.bf16.mxu0 0
      %1826 = vmatpush1.bf16.xpose.msra.mxu0 0
      %1827 = vmatprep.subr.bf16.mxu0 0
      %1828 = vmatpush1.bf16.xpose.msra.mxu0 0
      %1829 = vmatprep.subr.bf16.mxu0 0
      %1830 = vmatpush1.bf16.xpose.msra.mxu0 0
      %1831 = vmatprep.subr.bf16.mxu0 0
      %1832 = vmatpush1.bf16.xpose.msra.mxu0 0
      %1833 = vmatprep.subr.bf16.mxu0 0
      %1834 = vmatpush1.bf16.xpose.msra.mxu0 0
      %1835 = vmatprep.subr.bf16.mxu0 0
      %1836 = vmatpush1.bf16.xpose.msra.mxu0 0
      %1837 = vmatprep.subr.bf16.mxu0 0
      %1838 = vmatpush1.bf16.xpose.msra.mxu0 0
      %1839 = vmatprep.subr.bf16.mxu0 0
      %1840 = vmatpush1.bf16.xpose.msra.mxu0 0
      %1841 = vmatprep.subr.bf16.mxu0 0
      %1842 = vmatpush1.bf16.xpose.msra.mxu0 0
      %1843 = vmatprep.subr.bf16.mxu0 0
      %1844 = vmatpush1.bf16.xpose.msra.mxu0 0
      %1845 = vmatprep.subr.bf16.mxu0 0
      %1846 = vmatpush1.bf16.xpose.msra.mxu0 0
      %1847 = vmatprep.mubr.bf16.mxu0 0
      %1848 = vmatmul.mubr.bf16.gmra.mrb[0].mxu0 %v1814
      %v1849 = vpop.f32.mrb[0].mxu0
      %v1850 = vadd.f32 0.0, %v1849
      %v1851 = vpop.f32.mrb[0].mxu0
      %v1852 = vpop.f32.mrb[0].mxu0
      %v1853 = vadd.f32 0.0, %v1852
      %v1854 = vpop.f32.mrb[0].mxu0
      %1855 = vdwg.mxu0
      %v1856 = vsel %vm1728, %v1850, -inf
      %1857 = vmax.xlane.f32.xlu0 %v1856
      %v1858 = vpop.xlane.xlu0 %1857
      %v1859 = vsel %vm1732, %v1853, -inf
      %1860 = vmax.xlane.f32.xlu0 %v1859
      %v1861 = vpop.xlane.xlu0 %1860
      %v1862 = vsub.f32 %v1850, %v1858
      %v1863 = vsub.f32 %v1853, %v1861
      %v1864 = vmul.f32 %v1862, 1.442695
      %v1865 = vpow.pop %v1864
      %v1866 = vmul.f32 %v1863, 1.442695
      %v1867 = vpow.pop %v1866
      %v1868 = vsel %vm1728, %v1865, 0.0
      %1869 = vadd.xlane.f32.xlu0 %v1868
      %v1870 = vpop.xlane.xlu0 %1869
      %v1871 = vsel %vm1732, %v1867, 0.0
      %1872 = vadd.xlane.f32.xlu0 %v1871
      %v1873 = vpop.xlane.xlu0 %1872
      %v1874 = vrcp.pop %v1870
      %v1875 = vrcp.pop %v1873
      %v1876 = vmul.f32 %v1865, %v1874
      %v1877 = vmul.f32 %v1867, %v1875
      %v1878 = vpack.c.bf16 %v1877, %v1876
      %v1880 = vsel %vm1728, %v1878, 0
      %1882 = vmatprep.subr.bf16.mxu0 0
      %1883 = vmatpush1.bf16.msra.mxu0 %v1761
      %1884 = vmatprep.subr.bf16.mxu0 0
      %1885 = vmatpush1.bf16.msra.mxu0 0
      %1886 = vmatprep.subr.bf16.mxu0 0
      %1887 = vmatpush1.bf16.msra.mxu0 0
      %1888 = vmatprep.subr.bf16.mxu0 0
      %1889 = vmatpush1.bf16.msra.mxu0 0
      %1890 = vmatprep.subr.bf16.mxu0 0
      %1891 = vmatpush1.bf16.msra.mxu0 0
      %1892 = vmatprep.subr.bf16.mxu0 0
      %1893 = vmatpush1.bf16.msra.mxu0 0
      %1894 = vmatprep.subr.bf16.mxu0 0
      %1895 = vmatpush1.bf16.msra.mxu0 0
      %1896 = vmatprep.subr.bf16.mxu0 0
      %1897 = vmatpush1.bf16.msra.mxu0 0
      %1898 = vmatprep.subr.bf16.mxu0 0
      %1899 = vmatpush1.bf16.msra.mxu0 0
      %1900 = vmatprep.subr.bf16.mxu0 0
      %1901 = vmatpush1.bf16.msra.mxu0 0
      %1902 = vmatprep.subr.bf16.mxu0 0
      %1903 = vmatpush1.bf16.msra.mxu0 0
      %1904 = vmatprep.subr.bf16.mxu0 0
      %1905 = vmatpush1.bf16.msra.mxu0 0
      %1906 = vmatprep.subr.bf16.mxu0 0
      %1907 = vmatpush1.bf16.msra.mxu0 0
      %1908 = vmatprep.subr.bf16.mxu0 0
      %1909 = vmatpush1.bf16.msra.mxu0 0
      %1910 = vmatprep.subr.bf16.mxu0 0
      %1911 = vmatpush1.bf16.msra.mxu0 0
      %1912 = vmatprep.subr.bf16.mxu0 0
      %1913 = vmatpush1.bf16.msra.mxu0 0
      %1914 = vmatprep.mubr.bf16.mxu0 0
      %1915 = vmatmul.mubr.bf16.gmra.mrb[0].mxu0 %v1880
      %v1916 = vpop.f32.mrb[0].mxu0
      %v1917 = vadd.f32 0.0, %v1916
      %v1918 = vpop.f32.mrb[0].mxu0
      %v1919 = vpop.f32.mrb[0].mxu0
      %v1920 = vadd.f32 0.0, %v1919
      %v1921 = vpop.f32.mrb[0].mxu0
      %1922 = vdwg.mxu0
      %v1923 = vmul.f32 %v1811, %v1917
      %v1924 = vmul.f32 %v1811, %v1920
      %v1925 = vadd.f32 %v1806, %v1923
      %v1926 = vadd.f32 %v1807, %v1924
      %vm1927 = vcmp.ge.s32.totalorder %v1679, 16
      %vm1928 = vcmp.lt.s32.totalorder %v1679, 24
      %vm1929 = vmand %vm1927, %vm1928
      %v1930 = vsel %vm1929, 1.0, 0.0
      %v1931 = vmul.f32 %v1627, %v1930
      %v1932 = vmul.f32 %v1631, %v1930
      %v1933 = vpack.c.bf16 %v1932, %v1931
      %1934 = vmatprep.subr.bf16.mxu0 0
      %1935 = vmatpush1.bf16.xpose.msra.mxu0 %v1676
      %1936 = vmatprep.subr.bf16.mxu0 0
      %1937 = vmatpush1.bf16.xpose.msra.mxu0 0
      %1938 = vmatprep.subr.bf16.mxu0 0
      %1939 = vmatpush1.bf16.xpose.msra.mxu0 0
      %1940 = vmatprep.subr.bf16.mxu0 0
      %1941 = vmatpush1.bf16.xpose.msra.mxu0 0
      %1942 = vmatprep.subr.bf16.mxu0 0
      %1943 = vmatpush1.bf16.xpose.msra.mxu0 0
      %1944 = vmatprep.subr.bf16.mxu0 0
      %1945 = vmatpush1.bf16.xpose.msra.mxu0 0
      %1946 = vmatprep.subr.bf16.mxu0 0
      %1947 = vmatpush1.bf16.xpose.msra.mxu0 0
      %1948 = vmatprep.subr.bf16.mxu0 0
      %1949 = vmatpush1.bf16.xpose.msra.mxu0 0
      %1950 = vmatprep.subr.bf16.mxu0 0
      %1951 = vmatpush1.bf16.xpose.msra.mxu0 0
      %1952 = vmatprep.subr.bf16.mxu0 0
      %1953 = vmatpush1.bf16.xpose.msra.mxu0 0
      %1954 = vmatprep.subr.bf16.mxu0 0
      %1955 = vmatpush1.bf16.xpose.msra.mxu0 0
      %1956 = vmatprep.subr.bf16.mxu0 0
      %1957 = vmatpush1.bf16.xpose.msra.mxu0 0
      %1958 = vmatprep.subr.bf16.mxu0 0
      %1959 = vmatpush1.bf16.xpose.msra.mxu0 0
      %1960 = vmatprep.subr.bf16.mxu0 0
      %1961 = vmatpush1.bf16.xpose.msra.mxu0 0
      %1962 = vmatprep.subr.bf16.mxu0 0
      %1963 = vmatpush1.bf16.xpose.msra.mxu0 0
      %1964 = vmatprep.subr.bf16.mxu0 0
      %1965 = vmatpush1.bf16.xpose.msra.mxu0 0
      %1966 = vmatprep.mubr.bf16.mxu0 0
      %1967 = vmatmul.mubr.bf16.gmra.mrb[0].mxu0 %v1933
      %v1968 = vpop.f32.mrb[0].mxu0
      %v1969 = vadd.f32 0.0, %v1968
      %v1970 = vpop.f32.mrb[0].mxu0
      %v1971 = vpop.f32.mrb[0].mxu0
      %v1972 = vadd.f32 0.0, %v1971
      %v1973 = vpop.f32.mrb[0].mxu0
      %1974 = vdwg.mxu0
      %v1975 = vsel %vm1728, %v1969, -inf
      %1976 = vmax.xlane.f32.xlu0 %v1975
      %v1977 = vpop.xlane.xlu0 %1976
      %v1978 = vsel %vm1732, %v1972, -inf
      %1979 = vmax.xlane.f32.xlu0 %v1978
      %v1980 = vpop.xlane.xlu0 %1979
      %v1981 = vsub.f32 %v1969, %v1977
      %v1982 = vsub.f32 %v1972, %v1980
      %v1983 = vmul.f32 %v1981, 1.442695
      %v1984 = vpow.pop %v1983
      %v1985 = vmul.f32 %v1982, 1.442695
      %v1986 = vpow.pop %v1985
      %v1987 = vsel %vm1728, %v1984, 0.0
      %1988 = vadd.xlane.f32.xlu0 %v1987
      %v1989 = vpop.xlane.xlu0 %1988
      %v1990 = vsel %vm1732, %v1986, 0.0
      %1991 = vadd.xlane.f32.xlu0 %v1990
      %v1992 = vpop.xlane.xlu0 %1991
      %v1993 = vrcp.pop %v1989
      %v1994 = vrcp.pop %v1992
      %v1995 = vmul.f32 %v1984, %v1993
      %v1996 = vmul.f32 %v1986, %v1994
      %v1997 = vpack.c.bf16 %v1996, %v1995
      %v1999 = vsel %vm1728, %v1997, 0
      %2001 = vmatprep.subr.bf16.mxu0 0
      %2002 = vmatpush1.bf16.msra.mxu0 %v1761
      %2003 = vmatprep.subr.bf16.mxu0 0
      %2004 = vmatpush1.bf16.msra.mxu0 0
      %2005 = vmatprep.subr.bf16.mxu0 0
      %2006 = vmatpush1.bf16.msra.mxu0 0
      %2007 = vmatprep.subr.bf16.mxu0 0
      %2008 = vmatpush1.bf16.msra.mxu0 0
      %2009 = vmatprep.subr.bf16.mxu0 0
      %2010 = vmatpush1.bf16.msra.mxu0 0
      %2011 = vmatprep.subr.bf16.mxu0 0
      %2012 = vmatpush1.bf16.msra.mxu0 0
      %2013 = vmatprep.subr.bf16.mxu0 0
      %2014 = vmatpush1.bf16.msra.mxu0 0
      %2015 = vmatprep.subr.bf16.mxu0 0
      %2016 = vmatpush1.bf16.msra.mxu0 0
      %2017 = vmatprep.subr.bf16.mxu0 0
      %2018 = vmatpush1.bf16.msra.mxu0 0
      %2019 = vmatprep.subr.bf16.mxu0 0
      %2020 = vmatpush1.bf16.msra.mxu0 0
      %2021 = vmatprep.subr.bf16.mxu0 0
      %2022 = vmatpush1.bf16.msra.mxu0 0
      %2023 = vmatprep.subr.bf16.mxu0 0
      %2024 = vmatpush1.bf16.msra.mxu0 0
      %2025 = vmatprep.subr.bf16.mxu0 0
      %2026 = vmatpush1.bf16.msra.mxu0 0
      %2027 = vmatprep.subr.bf16.mxu0 0
      %2028 = vmatpush1.bf16.msra.mxu0 0
      %2029 = vmatprep.subr.bf16.mxu0 0
      %2030 = vmatpush1.bf16.msra.mxu0 0
      %2031 = vmatprep.subr.bf16.mxu0 0
      %2032 = vmatpush1.bf16.msra.mxu0 0
      %2033 = vmatprep.mubr.bf16.mxu0 0
      %2034 = vmatmul.mubr.bf16.gmra.mrb[0].mxu0 %v1999
      %v2035 = vpop.f32.mrb[0].mxu0
      %v2036 = vadd.f32 0.0, %v2035
      %v2037 = vpop.f32.mrb[0].mxu0
      %v2038 = vpop.f32.mrb[0].mxu0
      %v2039 = vadd.f32 0.0, %v2038
      %v2040 = vpop.f32.mrb[0].mxu0
      %2041 = vdwg.mxu0
      %v2042 = vmul.f32 %v1930, %v2036
      %v2043 = vmul.f32 %v1930, %v2039
      %v2044 = vadd.f32 %v1925, %v2042
      %v2045 = vadd.f32 %v1926, %v2043
      %vm2046 = vcmp.ge.s32.totalorder %v1679, 24
      %vm2047 = vcmp.lt.s32.totalorder %v1679, 32
      %vm2048 = vmand %vm2046, %vm2047
      %v2049 = vsel %vm2048, 1.0, 0.0
      %v2050 = vmul.f32 %v1627, %v2049
      %v2051 = vmul.f32 %v1631, %v2049
      %v2052 = vpack.c.bf16 %v2051, %v2050
      %2053 = vmatprep.subr.bf16.mxu0 0
      %2054 = vmatpush1.bf16.xpose.msra.mxu0 %v1676
      %2055 = vmatprep.subr.bf16.mxu0 0
      %2056 = vmatpush1.bf16.xpose.msra.mxu0 0
      %2057 = vmatprep.subr.bf16.mxu0 0
      %2058 = vmatpush1.bf16.xpose.msra.mxu0 0
      %2059 = vmatprep.subr.bf16.mxu0 0
      %2060 = vmatpush1.bf16.xpose.msra.mxu0 0
      %2061 = vmatprep.subr.bf16.mxu0 0
      %2062 = vmatpush1.bf16.xpose.msra.mxu0 0
      %2063 = vmatprep.subr.bf16.mxu0 0
      %2064 = vmatpush1.bf16.xpose.msra.mxu0 0
      %2065 = vmatprep.subr.bf16.mxu0 0
      %2066 = vmatpush1.bf16.xpose.msra.mxu0 0
      %2067 = vmatprep.subr.bf16.mxu0 0
      %2068 = vmatpush1.bf16.xpose.msra.mxu0 0
      %2069 = vmatprep.subr.bf16.mxu0 0
      %2070 = vmatpush1.bf16.xpose.msra.mxu0 0
      %2071 = vmatprep.subr.bf16.mxu0 0
      %2072 = vmatpush1.bf16.xpose.msra.mxu0 0
      %2073 = vmatprep.subr.bf16.mxu0 0
      %2074 = vmatpush1.bf16.xpose.msra.mxu0 0
      %2075 = vmatprep.subr.bf16.mxu0 0
      %2076 = vmatpush1.bf16.xpose.msra.mxu0 0
      %2077 = vmatprep.subr.bf16.mxu0 0
      %2078 = vmatpush1.bf16.xpose.msra.mxu0 0
      %2079 = vmatprep.subr.bf16.mxu0 0
      %2080 = vmatpush1.bf16.xpose.msra.mxu0 0
      %2081 = vmatprep.subr.bf16.mxu0 0
      %2082 = vmatpush1.bf16.xpose.msra.mxu0 0
      %2083 = vmatprep.subr.bf16.mxu0 0
      %2084 = vmatpush1.bf16.xpose.msra.mxu0 0
      %2085 = vmatprep.mubr.bf16.mxu0 0
      %2086 = vmatmul.mubr.bf16.gmra.mrb[0].mxu0 %v2052
      %v2087 = vpop.f32.mrb[0].mxu0
      %v2088 = vadd.f32 0.0, %v2087
      %v2089 = vpop.f32.mrb[0].mxu0
      %v2090 = vpop.f32.mrb[0].mxu0
      %v2091 = vadd.f32 0.0, %v2090
      %v2092 = vpop.f32.mrb[0].mxu0
      %2093 = vdwg.mxu0
      %v2094 = vsel %vm1728, %v2088, -inf
      %2095 = vmax.xlane.f32.xlu0 %v2094
      %v2096 = vpop.xlane.xlu0 %2095
      %v2097 = vsel %vm1732, %v2091, -inf
      %2098 = vmax.xlane.f32.xlu0 %v2097
      %v2099 = vpop.xlane.xlu0 %2098
      %v2100 = vsub.f32 %v2088, %v2096
      %v2101 = vsub.f32 %v2091, %v2099
      %v2102 = vmul.f32 %v2100, 1.442695
      %v2103 = vpow.pop %v2102
      %v2104 = vmul.f32 %v2101, 1.442695
      %v2105 = vpow.pop %v2104
      %v2106 = vsel %vm1728, %v2103, 0.0
      %2107 = vadd.xlane.f32.xlu0 %v2106
      %v2108 = vpop.xlane.xlu0 %2107
      %v2109 = vsel %vm1732, %v2105, 0.0
      %2110 = vadd.xlane.f32.xlu0 %v2109
      %v2111 = vpop.xlane.xlu0 %2110
      %v2112 = vrcp.pop %v2108
      %v2113 = vrcp.pop %v2111
      %v2114 = vmul.f32 %v2103, %v2112
      %v2115 = vmul.f32 %v2105, %v2113
      %v2116 = vpack.c.bf16 %v2115, %v2114
      %v2118 = vsel %vm1728, %v2116, 0
      %2120 = vmatprep.subr.bf16.mxu0 0
      %2121 = vmatpush1.bf16.msra.mxu0 %v1761
      %2122 = vmatprep.subr.bf16.mxu0 0
      %2123 = vmatpush1.bf16.msra.mxu0 0
      %2124 = vmatprep.subr.bf16.mxu0 0
      %2125 = vmatpush1.bf16.msra.mxu0 0
      %2126 = vmatprep.subr.bf16.mxu0 0
      %2127 = vmatpush1.bf16.msra.mxu0 0
      %2128 = vmatprep.subr.bf16.mxu0 0
      %2129 = vmatpush1.bf16.msra.mxu0 0
      %2130 = vmatprep.subr.bf16.mxu0 0
      %2131 = vmatpush1.bf16.msra.mxu0 0
      %2132 = vmatprep.subr.bf16.mxu0 0
      %2133 = vmatpush1.bf16.msra.mxu0 0
      %2134 = vmatprep.subr.bf16.mxu0 0
      %2135 = vmatpush1.bf16.msra.mxu0 0
      %2136 = vmatprep.subr.bf16.mxu0 0
      %2137 = vmatpush1.bf16.msra.mxu0 0
      %2138 = vmatprep.subr.bf16.mxu0 0
      %2139 = vmatpush1.bf16.msra.mxu0 0
      %2140 = vmatprep.subr.bf16.mxu0 0
      %2141 = vmatpush1.bf16.msra.mxu0 0
      %2142 = vmatprep.subr.bf16.mxu0 0
      %2143 = vmatpush1.bf16.msra.mxu0 0
      %2144 = vmatprep.subr.bf16.mxu0 0
      %2145 = vmatpush1.bf16.msra.mxu0 0
      %2146 = vmatprep.subr.bf16.mxu0 0
      %2147 = vmatpush1.bf16.msra.mxu0 0
      %2148 = vmatprep.subr.bf16.mxu0 0
      %2149 = vmatpush1.bf16.msra.mxu0 0
      %2150 = vmatprep.subr.bf16.mxu0 0
      %2151 = vmatpush1.bf16.msra.mxu0 0
      %2152 = vmatprep.mubr.bf16.mxu0 0
      %2153 = vmatmul.mubr.bf16.gmra.mrb[0].mxu0 %v2118
      %v2154 = vpop.f32.mrb[0].mxu0
      %v2155 = vadd.f32 0.0, %v2154
      %v2156 = vpop.f32.mrb[0].mxu0
      %v2157 = vpop.f32.mrb[0].mxu0
      %v2158 = vadd.f32 0.0, %v2157
      %v2159 = vpop.f32.mrb[0].mxu0
      %2160 = vdwg.mxu0
      %v2161 = vmul.f32 %v2049, %v2155
      %v2162 = vmul.f32 %v2049, %v2158
      %v2163 = vadd.f32 %v2044, %v2161
      %v2164 = vadd.f32 %v2045, %v2162
      %v2165 = vpack.c.bf16 %v2164, %v2163
      %v2182 = vunpack.c.l.b16 %v1349
      %v2183 = vunpack.c.l.b16 %v1350
      %v2184 = vunpack.c.l.b16 %v1351
      %v2185 = vunpack.c.l.b16 %v1352
      %v2186 = vunpack.c.l.b16 %v1353
      %v2187 = vunpack.c.l.b16 %v1354
      %v2188 = vunpack.c.l.b16 %v1355
      %v2189 = vunpack.c.l.b16 %v1356
      %v2190 = vunpack.c.l.b16 %v1357
      %v2191 = vunpack.c.l.b16 %v1358
      %v2192 = vunpack.c.l.b16 %v1359
      %v2193 = vunpack.c.l.b16 %v1360
      %v2194 = vunpack.c.l.b16 %v1361
      %v2195 = vunpack.c.l.b16 %v1362
      %v2196 = vunpack.c.l.b16 %v1363
      %v2197 = vunpack.c.l.b16 %v1364
      %v2198 = vpack.c.b16 %v2183, %v2182
      %v2199 = vpack.c.b16 %v2185, %v2184
      %v2200 = vpack.c.b16 %v2187, %v2186
      %v2201 = vpack.c.b16 %v2189, %v2188
      %v2202 = vpack.c.b16 %v2191, %v2190
      %v2203 = vpack.c.b16 %v2193, %v2192
      %v2204 = vpack.c.b16 %v2195, %v2194
      %v2205 = vpack.c.b16 %v2197, %v2196
      %2214 = vmatprep.subr.bf16.mxu0 0
      %2215 = vmatpush1.bf16.msra.mxu0 %v2198
      %2216 = vmatprep.subr.bf16.mxu0 0
      %2217 = vmatpush1.bf16.msra.mxu0 %v2199
      %2218 = vmatprep.subr.bf16.mxu0 0
      %2219 = vmatpush1.bf16.msra.mxu0 %v2200
      %2220 = vmatprep.subr.bf16.mxu0 0
      %2221 = vmatpush1.bf16.msra.mxu0 %v2201
      %2222 = vmatprep.subr.bf16.mxu0 0
      %2223 = vmatpush1.bf16.msra.mxu0 %v2202
      %2224 = vmatprep.subr.bf16.mxu0 0
      %2225 = vmatpush1.bf16.msra.mxu0 %v2203
      %2226 = vmatprep.subr.bf16.mxu0 0
      %2227 = vmatpush1.bf16.msra.mxu0 %v2204
      %2228 = vmatprep.subr.bf16.mxu0 0
      %2229 = vmatpush1.bf16.msra.mxu0 %v2205
      %2230 = vmatprep.subr.bf16.mxu0 0
      %2231 = vmatpush1.bf16.msra.mxu0 0
      %2232 = vmatprep.subr.bf16.mxu0 0
      %2233 = vmatpush1.bf16.msra.mxu0 0
      %2234 = vmatprep.subr.bf16.mxu0 0
      %2235 = vmatpush1.bf16.msra.mxu0 0
      %2236 = vmatprep.subr.bf16.mxu0 0
      %2237 = vmatpush1.bf16.msra.mxu0 0
      %2238 = vmatprep.subr.bf16.mxu0 0
      %2239 = vmatpush1.bf16.msra.mxu0 0
      %2240 = vmatprep.subr.bf16.mxu0 0
      %2241 = vmatpush1.bf16.msra.mxu0 0
      %2242 = vmatprep.subr.bf16.mxu0 0
      %2243 = vmatpush1.bf16.msra.mxu0 0
      %2244 = vmatprep.subr.bf16.mxu0 0
      %2245 = vmatpush1.bf16.msra.mxu0 0
      %2246 = vmatprep.mubr.bf16.mxu0 0
      %2247 = vmatmul.mubr.bf16.gmra.mrb[0].mxu0 %v2165
      %v2248 = vpop.f32.mrb[0].mxu0
      %v2249 = vadd.f32 0.0, %v2248
      %v2250 = vpop.f32.mrb[0].mxu0
      %v2251 = vpop.f32.mrb[0].mxu0
      %v2252 = vadd.f32 0.0, %v2251
      %v2253 = vpop.f32.mrb[0].mxu0
      %2254 = vdwg.mxu0
      %v2255 = vadd.f32 %v1312, %v2249
      %v2256 = vadd.f32 %v1313, %v2252
      %v2258 = vlaneseq
      %v2259 = vshrl.u32 %v2258, 7
      %v2260 = vsub.s32 0, %v2259
      %v2261 = vrot.slane %v1365, %v2260
      %v2263 = vadd.f32 %v2255, %v2261
      %v2264 = vadd.f32 %v2256, %v2261
      %2265 = vadd.xlane.f32.xlu0 %v2263
      %v2266 = vpop.xlane.xlu0 %2265
      %v2267 = vsel %vm1404, %v2264, 0.0
      %2268 = vadd.xlane.f32.xlu0 %v2267
      %v2269 = vpop.xlane.xlu0 %2268
      %v2270 = vmul.f32 %v2263, %v2263
      %v2271 = vmul.f32 %v2264, %v2264
      %2272 = vadd.xlane.f32.xlu0 %v2270
      %v2273 = vpop.xlane.xlu0 %2272
      %v2274 = vsel %vm1404, %v2271, 0.0
      %2275 = vadd.xlane.f32.xlu0 %v2274
      %v2276 = vpop.xlane.xlu0 %2275
      %v2277 = vmul.f32 %v2266, 0.03125
      %v2278 = vmul.f32 %v2269, 0.03125
      %v2279 = vmul.f32 %v2273, 0.03125
      %v2280 = vmul.f32 %v2276, 0.03125
      %v2281 = vmul.f32 %v2277, %v2277
      %v2282 = vmul.f32 %v2278, %v2278
      %v2283 = vsub.f32 %v2279, %v2281
      %v2284 = vsub.f32 %v2280, %v2282
      %v2285 = vsub.f32 %v2263, %v2277
      %v2286 = vsub.f32 %v2264, %v2278
      %v2287 = vadd.f32 %v2283, 1e-06
      %v2288 = vadd.f32 %v2284, 1e-06
      %v2289 = vrsqrt.pop %v2287
      %v2290 = vrsqrt.pop %v2288
      %v2291 = vmul.f32 %v2285, %v2289
      %v2292 = vmul.f32 %v2286, %v2290
      %v2294 = vlaneseq
      %v2295 = vshrl.u32 %v2294, 7
      %v2296 = vsub.s32 0, %v2295
      %v2297 = vrot.slane %v1366, %v2296
      %v2299 = vmul.f32 %v2291, %v2297
      %v2300 = vmul.f32 %v2292, %v2297
      %v2302 = vlaneseq
      %v2303 = vshrl.u32 %v2302, 7
      %v2304 = vsub.s32 0, %v2303
      %v2305 = vrot.slane %v1367, %v2304
      %v2307 = vadd.f32 %v2299, %v2305
      %v2308 = vadd.f32 %v2300, %v2305
      %v2309 = vpack.c.bf16 %v2308, %v2307
      %v2311 = vlaneseq
      %v2312 = vshrl.u32 %v2311, 7
      %v2313 = vsub.s32 0, %v2312
      %v2314 = vrot.slane %v1384, %v2313
      %v2332 = vunpack.c.l.b16 %v1368
      %v2333 = vunpack.c.l.b16 %v1369
      %v2334 = vunpack.c.l.b16 %v1370
      %v2335 = vunpack.c.l.b16 %v1371
      %v2336 = vunpack.c.l.b16 %v1372
      %v2337 = vunpack.c.l.b16 %v1373
      %v2338 = vunpack.c.l.b16 %v1374
      %v2339 = vunpack.c.l.b16 %v1375
      %v2340 = vunpack.c.l.b16 %v1376
      %v2341 = vunpack.c.l.b16 %v1377
      %v2342 = vunpack.c.l.b16 %v1378
      %v2343 = vunpack.c.l.b16 %v1379
      %v2344 = vunpack.c.l.b16 %v1380
      %v2345 = vunpack.c.l.b16 %v1381
      %v2346 = vunpack.c.l.b16 %v1382
      %v2347 = vunpack.c.l.b16 %v1383
      %v2348 = vpack.c.b16 %v2333, %v2332
      %v2349 = vpack.c.b16 %v2335, %v2334
      %v2350 = vpack.c.b16 %v2337, %v2336
      %v2351 = vpack.c.b16 %v2339, %v2338
      %v2352 = vpack.c.b16 %v2341, %v2340
      %v2353 = vpack.c.b16 %v2343, %v2342
      %v2354 = vpack.c.b16 %v2345, %v2344
      %v2355 = vpack.c.b16 %v2347, %v2346
      %2364 = vmatprep.subr.bf16.mxu0 0
      %2365 = vmatpush1.bf16.msra.mxu0 %v2348
      %2366 = vmatprep.subr.bf16.mxu0 0
      %2367 = vmatpush1.bf16.msra.mxu0 %v2349
      %2368 = vmatprep.subr.bf16.mxu0 0
      %2369 = vmatpush1.bf16.msra.mxu0 %v2350
      %2370 = vmatprep.subr.bf16.mxu0 0
      %2371 = vmatpush1.bf16.msra.mxu0 %v2351
      %2372 = vmatprep.subr.bf16.mxu0 0
      %2373 = vmatpush1.bf16.msra.mxu0 %v2352
      %2374 = vmatprep.subr.bf16.mxu0 0
      %2375 = vmatpush1.bf16.msra.mxu0 %v2353
      %2376 = vmatprep.subr.bf16.mxu0 0
      %2377 = vmatpush1.bf16.msra.mxu0 %v2354
      %2378 = vmatprep.subr.bf16.mxu0 0
      %2379 = vmatpush1.bf16.msra.mxu0 %v2355
      %2380 = vmatprep.subr.bf16.mxu0 0
      %2381 = vmatpush1.bf16.msra.mxu0 0
      %2382 = vmatprep.subr.bf16.mxu0 0
      %2383 = vmatpush1.bf16.msra.mxu0 0
      %2384 = vmatprep.subr.bf16.mxu0 0
      %2385 = vmatpush1.bf16.msra.mxu0 0
      %2386 = vmatprep.subr.bf16.mxu0 0
      %2387 = vmatpush1.bf16.msra.mxu0 0
      %2388 = vmatprep.subr.bf16.mxu0 0
      %2389 = vmatpush1.bf16.msra.mxu0 0
      %2390 = vmatprep.subr.bf16.mxu0 0
      %2391 = vmatpush1.bf16.msra.mxu0 0
      %2392 = vmatprep.subr.bf16.mxu0 0
      %2393 = vmatpush1.bf16.msra.mxu0 0
      %2394 = vmatprep.subr.bf16.mxu0 0
      %2395 = vmatpush1.bf16.msra.mxu0 0
      %2396 = vmatprep.mubr.bf16.mxu0 0
      %2397 = vmatmul.mubr.bf16.gmra.mrb[0].mxu0 %v2309
      %v2398 = vpop.f32.mrb[0].mxu0
      %v2399 = vadd.f32 %v2314, %v2398
      %v2400 = vpop.f32.mrb[0].mxu0
      %v2401 = vpop.f32.mrb[0].mxu0
      %v2402 = vadd.f32 %v2314, %v2401
      %v2403 = vpop.f32.mrb[0].mxu0
      %2404 = vdwg.mxu0
      %v2405 = vmul.f32 %v2399, %v2399
      %v2406 = vmul.f32 %v2402, %v2402
      %v2407 = vmul.f32 %v2399, %v2405
      %v2408 = vmul.f32 %v2402, %v2406
      %v2409 = vmul.f32 %v2407, 0.044715
      %v2410 = vmul.f32 %v2408, 0.044715
      %v2411 = vadd.f32 %v2399, %v2409
      %v2412 = vadd.f32 %v2402, %v2410
      %v2413 = vmul.f32 %v2411, 0.7978846
      %v2414 = vmul.f32 %v2412, 0.7978846
      %v2415 = vtanh.pop %v2413
      %v2416 = vtanh.pop %v2414
      %v2417 = vadd.f32 %v2415, 1.0
      %v2418 = vadd.f32 %v2416, 1.0
      %v2419 = vmul.f32 %v2417, 0.5
      %v2420 = vmul.f32 %v2418, 0.5
      %v2421 = vmul.f32 %v2399, %v2419
      %v2422 = vmul.f32 %v2402, %v2420
      %v2423 = vpack.c.bf16 %v2422, %v2421
      %v2440 = vunpack.c.l.b16 %v1385
      %v2441 = vunpack.c.l.b16 %v1386
      %v2442 = vunpack.c.l.b16 %v1387
      %v2443 = vunpack.c.l.b16 %v1388
      %v2444 = vunpack.c.l.b16 %v1389
      %v2445 = vunpack.c.l.b16 %v1390
      %v2446 = vunpack.c.l.b16 %v1391
      %v2447 = vunpack.c.l.b16 %v1392
      %v2448 = vunpack.c.l.b16 %v1393
      %v2449 = vunpack.c.l.b16 %v1394
      %v2450 = vunpack.c.l.b16 %v1395
      %v2451 = vunpack.c.l.b16 %v1396
      %v2452 = vunpack.c.l.b16 %v1397
      %v2453 = vunpack.c.l.b16 %v1398
      %v2454 = vunpack.c.l.b16 %v1399
      %v2455 = vunpack.c.l.b16 %v1400
      %v2456 = vpack.c.b16 %v2441, %v2440
      %v2457 = vpack.c.b16 %v2443, %v2442
      %v2458 = vpack.c.b16 %v2445, %v2444
      %v2459 = vpack.c.b16 %v2447, %v2446
      %v2460 = vpack.c.b16 %v2449, %v2448
      %v2461 = vpack.c.b16 %v2451, %v2450
      %v2462 = vpack.c.b16 %v2453, %v2452
      %v2463 = vpack.c.b16 %v2455, %v2454
      %2472 = vmatprep.subr.bf16.mxu0 0
      %2473 = vmatpush1.bf16.msra.mxu0 %v2456
      %2474 = vmatprep.subr.bf16.mxu0 0
      %2475 = vmatpush1.bf16.msra.mxu0 %v2457
      %2476 = vmatprep.subr.bf16.mxu0 0
      %2477 = vmatpush1.bf16.msra.mxu0 %v2458
      %2478 = vmatprep.subr.bf16.mxu0 0
      %2479 = vmatpush1.bf16.msra.mxu0 %v2459
      %2480 = vmatprep.subr.bf16.mxu0 0
      %2481 = vmatpush1.bf16.msra.mxu0 %v2460
      %2482 = vmatprep.subr.bf16.mxu0 0
      %2483 = vmatpush1.bf16.msra.mxu0 %v2461
      %2484 = vmatprep.subr.bf16.mxu0 0
      %2485 = vmatpush1.bf16.msra.mxu0 %v2462
      %2486 = vmatprep.subr.bf16.mxu0 0
      %2487 = vmatpush1.bf16.msra.mxu0 %v2463
      %2488 = vmatprep.subr.bf16.mxu0 0
      %2489 = vmatpush1.bf16.msra.mxu0 0
      %2490 = vmatprep.subr.bf16.mxu0 0
      %2491 = vmatpush1.bf16.msra.mxu0 0
      %2492 = vmatprep.subr.bf16.mxu0 0
      %2493 = vmatpush1.bf16.msra.mxu0 0
      %2494 = vmatprep.subr.bf16.mxu0 0
      %2495 = vmatpush1.bf16.msra.mxu0 0
      %2496 = vmatprep.subr.bf16.mxu0 0
      %2497 = vmatpush1.bf16.msra.mxu0 0
      %2498 = vmatprep.subr.bf16.mxu0 0
      %2499 = vmatpush1.bf16.msra.mxu0 0
      %2500 = vmatprep.subr.bf16.mxu0 0
      %2501 = vmatpush1.bf16.msra.mxu0 0
      %2502 = vmatprep.subr.bf16.mxu0 0
      %2503 = vmatpush1.bf16.msra.mxu0 0
      %2504 = vmatprep.mubr.bf16.mxu0 0
      %2505 = vmatmul.mubr.bf16.gmra.mrb[0].mxu0 %v2423
      %v2506 = vpop.f32.mrb[0].mxu0
      %v2507 = vadd.f32 0.0, %v2506
      %v2508 = vpop.f32.mrb[0].mxu0
      %v2509 = vpop.f32.mrb[0].mxu0
      %v2510 = vadd.f32 0.0, %v2509
      %v2511 = vpop.f32.mrb[0].mxu0
      %2512 = vdwg.mxu0
      %v2513 = vadd.f32 %v2263, %v2507
      %v2514 = vadd.f32 %v2264, %v2510
      %v2516 = vlaneseq
      %v2517 = vshrl.u32 %v2516, 7
      %v2518 = vsub.s32 0, %v2517
      %v2519 = vrot.slane %v1401, %v2518
      %v2521 = vadd.f32 %v2513, %v2519
      %v2522 = vadd.f32 %v2514, %v2519
      %v2523 = vld [vmem:[%s18] sm:$0x1]
      %v2524 = vld [vmem:[%s19] sm:$0x1]
      %2525 = vadd.xlane.f32.xlu0 %v2521
      %v2526 = vpop.xlane.xlu0 %2525
      %v2527 = vsel %vm1404, %v2522, 0.0
      %2528 = vadd.xlane.f32.xlu0 %v2527
      %v2529 = vpop.xlane.xlu0 %2528
      %v2530 = vmul.f32 %v2521, %v2521
      %v2531 = vmul.f32 %v2522, %v2522
      %2532 = vadd.xlane.f32.xlu0 %v2530
      %v2533 = vpop.xlane.xlu0 %2532
      %v2534 = vsel %vm1404, %v2531, 0.0
      %2535 = vadd.xlane.f32.xlu0 %v2534
      %v2536 = vpop.xlane.xlu0 %2535
      %v2537 = vmul.f32 %v2526, 0.03125
      %v2538 = vmul.f32 %v2529, 0.03125
      %v2539 = vmul.f32 %v2533, 0.03125
      %v2540 = vmul.f32 %v2536, 0.03125
      %v2541 = vmul.f32 %v2537, %v2537
      %v2542 = vmul.f32 %v2538, %v2538
      %v2543 = vsub.f32 %v2539, %v2541
      %v2544 = vsub.f32 %v2540, %v2542
      %v2545 = vsub.f32 %v2521, %v2537
      %v2546 = vsub.f32 %v2522, %v2538
      %v2547 = vadd.f32 %v2543, 1e-06
      %v2548 = vadd.f32 %v2544, 1e-06
      %v2549 = vrsqrt.pop %v2547
      %v2550 = vrsqrt.pop %v2548
      %v2551 = vmul.f32 %v2545, %v2549
      %v2552 = vmul.f32 %v2546, %v2550
      %v2554 = vlaneseq
      %v2555 = vshrl.u32 %v2554, 7
      %v2556 = vsub.s32 0, %v2555
      %v2557 = vrot.slane %v2523, %v2556
      %v2559 = vmul.f32 %v2551, %v2557
      %v2560 = vmul.f32 %v2552, %v2557
      %v2562 = vlaneseq
      %v2563 = vshrl.u32 %v2562, 7
      %v2564 = vsub.s32 0, %v2563
      %v2565 = vrot.slane %v2524, %v2564
      %v2567 = vadd.f32 %v2559, %v2565
      %v2568 = vadd.f32 %v2560, %v2565
      %2569 = vst [vmem:[%s741] sm:$0xff] %v2567
      %2570 = vst [vmem:[%s741 + $0x8] sm:$0x1] %v2568
      %v2571 = vld [vmem:[%s20] sm:$0xf]
      %v2572 = vmul.f32 %v2567, %v2571
      %v2573 = vsel %vm1756, %v2572, 0.0
      %2574 = vadd.xlane.f32.xlu0 %v2573
      %v2575 = vpop.xlane.xlu0 %2574
      %v2576 = vld [vmem:[%s21] sm:$0xf]
      %v2577 = vmul.f32 %v2575, %v2576
      %v2578 = vld [vmem:[%s22] sm:$0xf]
      %v2579 = vadd.f32 %v2577, %v2578
      %2581 = vset.pattern.permute.xlu0 0
      %2582 = vperm.xlu0 %2581, %v2579
      %v2583 = vpop.permute.xlu0 %2582
      %2585 = vst [vmem:[%s745] sm:$0xf] %v2583
      %p2586 = scmp.lt.s32.totalorder %s36, 1
      %s2587 = scalar_select %p2586, %s36, 1
      %s2588 = smul.addr %s2587, 2
      %s2589 = smul.addr %s2588, 8
      %s2590 = scalar_lea.vmem %s23, %s2589
      %p2591 = scmp.lt.s32.totalorder %s36, 1
      %s2592 = scalar_select %p2591, %s36, 1
      %s2593 = smul.addr %s2592, 4
      %s2594 = scalar_lea.vmem %s24, %s2593
      // Predicated region
      $region113: #{forward.3} parent=111 // pred_check
        %p2595 = pneg %p542
      $region114: #{forward.3} parent=111 // pred_check_branch
        %2597 = sbr.rel (%p2595) target = $region116
      $region115: #{forward.3} parent=111 // pred_region
        _
      $region116: #{forward.3} parent=111 // pred_fallthru
        _
      // Predicated region
      $region117: #{forward.3} parent=111 // pred_check
        %p2598 = pneg %p568
      $region118: #{forward.3} parent=111 // pred_check_branch
        %2600 = sbr.rel (%p2598) target = $region120
      $region119: #{forward.3} parent=111 // pred_region
        _
      $region120: #{forward.3} parent=111 // pred_fallthru
        _
    $region112: #{forward.3} parent=5 // pred_fallthru
      _
    %p2601 = scmp.le.s32.totalorder 2, %s31
    // Predicated region
    $region121: #{forward.3} parent=5 // pred_check
      %p2602 = pneg %p2601
    $region122: #{forward.3} parent=5 // pred_check_branch
      %2604 = sbr.rel (%p2602) target = $region124
    $region123: #{forward.3} parent=5 // pred_region
      %s2605 = ssub.s32 %s31, 2
      // Predicated region
      $region125: #{forward.3} parent=123 // pred_check
        %p2606 = pneg %p548
      $region126: #{forward.3} parent=123 // pred_check_branch
        %2608 = sbr.rel (%p2606) target = $region128
      $region127: #{forward.3} parent=123 // pred_region
        %p2609 = scmp.lt.s32.totalorder %s37, 1
        %s2610 = scalar_select %p2609, %s37, 1
        %s2611 = smul.addr %s2610, 2
        %s2612 = smul.addr %s2611, 8
        %s2613 = scalar_lea.vmem %s23, %s2612
      $region128: #{forward.3} parent=123 // pred_fallthru
        _
      // Predicated region
      $region129: #{forward.3} parent=123 // pred_check
        %p2614 = pneg %p574
      $region130: #{forward.3} parent=123 // pred_check_branch
        %2616 = sbr.rel (%p2614) target = $region132
      $region131: #{forward.3} parent=123 // pred_region
        %p2617 = scmp.lt.s32.totalorder %s37, 1
        %s2618 = scalar_select %p2617, %s37, 1
        %s2619 = smul.addr %s2618, 4
        %s2620 = scalar_lea.vmem %s24, %s2619
      $region132: #{forward.3} parent=123 // pred_fallthru
        _
    $region124: #{forward.3} parent=5 // pred_fallthru
      _
  $region6: #{forward.3} parent=0 // loop_footer
    %s35 = sadd.s32 1, %s31
  $region7: #{forward.3} parent=0 // loop_footer_branch
    %30 = sbr.rel target = $region3
  $region8: #{forward.3} parent=0 // loop_exit
    _

</llo_original>
